<compile_context>
chip_gen: v6e
topology: v6e:2x2x1
jax: 0.10.0
libtpu: 0.0.40
codegen_flags: <defaults>
</compile_context>

<pallas_src>
import jax
import jax.numpy as jnp
from jax import lax
from jax.experimental import pallas as pl
from jax.experimental.pallas import tpu as pltpu


def _round_up(n, m):
    return ((n + m - 1) // m) * m


def gru_last_kernel(x_ref, w_i_ref, w_h_ref, b_i_ref, b_hn_ref, out_ref):
    """Full GRU recurrence over time for one batch block; writes h_T.

    Shapes (padded):
      x_ref   : (TB, T)      batch-block of the scalar input (lane-dense in T)
      w_i_ref : (1, 3*Hp)    input weights, gate order (r, z, n), f32
      w_h_ref : (Hp, 3*Hp)   recurrent weights fused across gates, bf16
      b_i_ref : (1, 3*Hp)    b_ir+b_hr | b_iz+b_hz | b_in   (n's hidden bias
                             stays separate because r gates it), f32
      b_hn_ref: (1, Hp)      f32
      out_ref : (TB, Hp)     f32

    PyTorch GRU gate equations:
      r = sigmoid(W_ir x + b_ir + W_hr h + b_hr)
      z = sigmoid(W_iz x + b_iz + W_hz h + b_hz)
      n = tanh   (W_in x + b_in + r * (W_hn h + b_hn))
      h = (1 - z) * n + z * h
    """
    TB, T = x_ref.shape
    Hp = out_ref.shape[1]

    x = x_ref[...]                                   # (TB, T), one dense load
    w_h = w_h_ref[...]                               # (Hp, 3Hp) bf16, resident

    # Hoist loop-invariant broadcasts out of the recurrence (JAX does not CSE
    # broadcast_in_dim; inside the unrolled loop each would be emitted T times).
    w_i_b = jnp.broadcast_to(w_i_ref[...], (TB, 3 * Hp))     # (TB, 3Hp) f32
    b_i_b = jnp.broadcast_to(b_i_ref[...], (TB, 3 * Hp))     # (TB, 3Hp) f32
    b_hn_b = jnp.broadcast_to(b_hn_ref[...], (TB, Hp))       # (TB, Hp)  f32

    def step(h, x_t):
        # Input-side pre-activations recomputed on the fly (no VMEM staging):
        # two VPU ops on a (TB, 3Hp) slab, hidden under this step's MXU work.
        gi = x_t * w_i_b + b_i_b                                      # (TB, 3Hp)
        # Single fused MXU matmul for all three gates: bf16 in, f32 accumulate.
        gh = jnp.dot(h.astype(w_h.dtype), w_h,
                     preferred_element_type=jnp.float32)              # (TB, 3Hp)
        r = jax.nn.sigmoid(gi[:, :Hp] + gh[:, :Hp])
        z = jax.nn.sigmoid(gi[:, Hp:2 * Hp] + gh[:, Hp:2 * Hp])
        n = jnp.tanh(gi[:, 2 * Hp:] + r * (gh[:, 2 * Hp:] + b_hn_b))
        return (1.0 - z) * n + z * h

    h = jnp.zeros((TB, Hp), jnp.float32)
    if T <= 32 and TB <= 64:
        # Short serial chain and small live slabs: full static unroll
        # (static lane slices of x, full LLO scheduler visibility).
        for t in range(T):
            h = step(h, x[:, t:t + 1])
    else:
        # Larger TB / longer T: bound live ranges, modest unroll.
        def body(t, h):
            x_t = lax.dynamic_slice_in_dim(x, t, 1, axis=1)           # (TB, 1)
            return step(h, x_t)
        h = lax.fori_loop(0, T, body, h, unroll=2)

    out_ref[...] = h


def traj_encoder_forward(traj_input, params):
    """traj_input: (B, T) float32.  Returns (B, hidden) float32."""
    B, T = traj_input.shape
    H = params["w_hr"].shape[0]

    Hp = _round_up(H, 128)                 # lane-dense hidden dim

    # Batch block: minimize padding and the number of serial grid blocks.
    # The recurrence is serial in T, so every extra block re-pays the whole
    # T-step latency chain; TB is the MXU streaming (M) dimension.
    TB_CAP = 256
    n_blocks = max(1, -(-B // TB_CAP))
    TB = _round_up(-(-B // n_blocks), 8)
    Bp = n_blocks * TB

    def pad_cols(w):                       # pad last dim H -> Hp with zeros
        return jnp.pad(w, ((0, 0), (0, Hp - H)))

    # Fused + padded parameters, gate order (r, z, n).  Zero padding keeps the
    # padded lanes inert (padded rows/cols of W_h are zero and h0 = 0).
    w_i_all = jnp.concatenate(
        [pad_cols(params["w_ir"]), pad_cols(params["w_iz"]), pad_cols(params["w_in"])],
        axis=1).astype(jnp.float32)                                    # (1, 3Hp)
    w_h_all = jnp.concatenate(
        [pad_cols(params["w_hr"]), pad_cols(params["w_hz"]), pad_cols(params["w_hn"])],
        axis=1)
    w_h_all = jnp.pad(w_h_all, ((0, Hp - H), (0, 0))).astype(jnp.bfloat16)  # (Hp, 3Hp)
    b_i_all = jnp.concatenate(
        [pad_cols(params["b_r"]), pad_cols(params["b_z"]), pad_cols(params["b_in"])],
        axis=1).astype(jnp.float32)                                    # (1, 3Hp)
    b_hn = pad_cols(params["b_hn"]).astype(jnp.float32)                # (1, Hp)

    # Lane-dense input layout: (Bp, T), no trailing singleton dim.
    x_p = jnp.pad(traj_input.astype(jnp.float32), ((0, Bp - B), (0, 0)))  # (Bp, T)

    # Per-block VMEM footprint (worst case: everything double-buffered) with
    # generous headroom; clamp to stay under v7x's 64 MiB physical per-TC.
    x_bytes = TB * T * 4
    out_bytes = TB * Hp * 4
    w_bytes = Hp * 3 * Hp * 2 + 2 * 3 * Hp * 4 + Hp * 4
    footprint = 2 * (x_bytes + out_bytes + w_bytes)
    vmem_limit = int(min(64 * 2 ** 20, max(32 * 2 ** 20, 4 * footprint)))

    bytes_accessed = (x_p.size * 4 + w_h_all.size * 2 + w_i_all.size * 4
                      + b_i_all.size * 4 + b_hn.size * 4 + Bp * Hp * 4)
    cost = pl.CostEstimate(
        flops=2 * Bp * Hp * 3 * Hp * T,
        transcendentals=3 * Bp * Hp * T,
        bytes_accessed=bytes_accessed)

    out_shape = jax.ShapeDtypeStruct((Bp, Hp), jnp.float32)
    x_spec = pl.BlockSpec((TB, T), lambda i: (i, 0))
    out_spec = pl.BlockSpec((TB, Hp), lambda i: (i, 0))

    def const_specs(single_buffer):
        kw = dict(pipeline_mode=pl.Buffered(1)) if single_buffer else {}
        return [
            pl.BlockSpec((1, 3 * Hp), lambda i: (0, 0), **kw),        # W_i
            pl.BlockSpec((Hp, 3 * Hp), lambda i: (0, 0), **kw),       # W_h
            pl.BlockSpec((1, 3 * Hp), lambda i: (0, 0), **kw),        # b_i
            pl.BlockSpec((1, Hp), lambda i: (0, 0), **kw),            # b_hn
        ]

    def run(single_buffer):
        return pl.pallas_call(
            gru_last_kernel,
            out_shape=out_shape,
            grid_spec=pltpu.PrefetchScalarGridSpec(
                num_scalar_prefetch=0,
                grid=(n_blocks,),
                in_specs=[x_spec] + const_specs(single_buffer),
                out_specs=out_spec,
            ),
            compiler_params=pltpu.CompilerParams(
                dimension_semantics=("parallel",),
                vmem_limit_bytes=vmem_limit),
            cost_estimate=cost,
        )(x_p, w_i_all, w_h_all, b_i_all, b_hn)

    try:
        # Preferred: loop-invariant weights single-buffered (halves their VMEM).
        out_p = run(single_buffer=True)
    except Exception:
        # Fallback for JAX builds without pipeline_mode / Buffered(1) support.
        out_p = run(single_buffer=False)

    return out_p[:B, :H]


def init_params(key, hidden):
    """Deterministic GRU params, PyTorch-style U(-1/sqrt(H), 1/sqrt(H)) init.

    PyTorch stores weight_ih_l0 (3H, 1), weight_hh_l0 (3H, H), bias_ih (3H,),
    bias_hh (3H,), gate order (r, z, n).  We split per-gate and pre-transpose
    to (in_dim, H) for right-multiplication in the kernel.
    """
    H = hidden
    k = 1.0 / jnp.sqrt(jnp.float32(H))
    keys = jax.random.split(key, 4)
    w_ih = jax.random.uniform(keys[0], (3 * H, 1), jnp.float32, -k, k)
    w_hh = jax.random.uniform(keys[1], (3 * H, H), jnp.float32, -k, k)
    b_ih = jax.random.uniform(keys[2], (3 * H,), jnp.float32, -k, k)
    b_hh = jax.random.uniform(keys[3], (3 * H,), jnp.float32, -k, k)

    w_ir, w_iz, w_in = (w_ih[0:H].T, w_ih[H:2 * H].T, w_ih[2 * H:3 * H].T)  # (1,H)
    w_hr, w_hz, w_hn = (w_hh[0:H].T, w_hh[H:2 * H].T, w_hh[2 * H:3 * H].T)  # (H,H)
    b_ir, b_iz, b_in = b_ih[0:H], b_ih[H:2 * H], b_ih[2 * H:3 * H]
    b_hr, b_hz, b_hn = b_hh[0:H], b_hh[H:2 * H], b_hh[2 * H:3 * H]

    return dict(
        w_ir=w_ir, w_iz=w_iz, w_in=w_in,
        w_hr=w_hr, w_hz=w_hz, w_hn=w_hn,
        b_r=(b_ir + b_hr)[None, :],     # r/z gate biases fold
        b_z=(b_iz + b_hz)[None, :],
        b_in=b_in[None, :],             # n gate biases must stay separate
        b_hn=b_hn[None, :],
    )


def gru_reference(traj_input, params, matmul_dtype=jnp.float32):
    """Pure-JAX reference of the same GRU.

    matmul_dtype=jnp.bfloat16 mirrors the kernel's bf16-operand / f32-accum
    recurrent matmul; jnp.float32 matches the original PyTorch numerics.
    """
    B, T = traj_input.shape
    H = params["w_hr"].shape[0]
    h = jnp.zeros((B, H), jnp.float32)
    w_hr = params["w_hr"].astype(matmul_dtype)
    w_hz = params["w_hz"].astype(matmul_dtype)
    w_hn = params["w_hn"].astype(matmul_dtype)
    for t in range(T):
        x_t = traj_input[:, t:t + 1]
        hm = h.astype(matmul_dtype)
        ghr = jnp.dot(hm, w_hr, preferred_element_type=jnp.float32)
        ghz = jnp.dot(hm, w_hz, preferred_element_type=jnp.float32)
        ghn = jnp.dot(hm, w_hn, preferred_element_type=jnp.float32)
        r = jax.nn.sigmoid(x_t * params["w_ir"] + ghr + params["b_r"])
        z = jax.nn.sigmoid(x_t * params["w_iz"] + ghz + params["b_z"])
        n = jnp.tanh(x_t * params["w_in"] + params["b_in"] + r * (ghn + params["b_hn"]))
        h = (1.0 - z) * n + z * h
    return h


if __name__ == "__main__":
    B, T, H = 2, 8, 32
    key = jax.random.PRNGKey(0)
    k_x, k_p = jax.random.split(key)

    traj_input = jax.random.normal(k_x, (B, T), jnp.float32)
    params = init_params(k_p, H)

    out = jax.block_until_ready(traj_encoder_forward(traj_input, params))
    assert out.shape == (B, H), out.shape

    # Tight check against a reference that uses the same bf16-operand matmul.
    ref_bf16 = gru_reference(traj_input, params, matmul_dtype=jnp.bfloat16)
    assert jnp.allclose(out, ref_bf16, atol=5e-3, rtol=5e-3), (
        "mismatch vs bf16-matmul reference",
        float(jnp.max(jnp.abs(out - ref_bf16))))

    # Looser semantic check against the exact f32 (PyTorch-equivalent) GRU:
    # bf16 rounding on the recurrent matmul compounds over T steps.
    ref_f32 = gru_reference(traj_input, params, matmul_dtype=jnp.float32)
    assert jnp.allclose(out, ref_f32, atol=3e-2, rtol=3e-2), (
        "drift vs f32 reference exceeds bf16 rounding budget",
        float(jnp.max(jnp.abs(out - ref_f32))))

    print("KERNEL_OK")
</pallas_src>

<mosaic_0001>
module attributes {stable_mosaic.version = 11 : i64} {
  func.func @gru_last_kernel(%arg0: i32, %arg1: memref<8x8xf32, #tpu.memory_space<vmem>>, %arg2: memref<1x384xf32, #tpu.memory_space<vmem>>, %arg3: memref<128x384xbf16, #tpu.memory_space<vmem>>, %arg4: memref<1x384xf32, #tpu.memory_space<vmem>>, %arg5: memref<1x128xf32, #tpu.memory_space<vmem>>, %arg6: memref<8x128xf32, #tpu.memory_space<vmem>>) attributes {dimension_semantics = [#tpu.dimension_semantics<parallel>], iteration_bounds = array<i64: 1>, scalar_prefetch = 0 : i64, scratch_operands = 0 : i64, tpu.core_type = #tpu.core_type<tc>, window_params = [{transform_indices = @transform_0, window_bounds = array<i64: 8, 8>}, {pipeline_mode = #tpu.pipeline_mode<synchronous>, transform_indices = @transform_1, window_bounds = array<i64: 1, 384>}, {pipeline_mode = #tpu.pipeline_mode<synchronous>, transform_indices = @transform_2, window_bounds = array<i64: 128, 384>}, {pipeline_mode = #tpu.pipeline_mode<synchronous>, transform_indices = @transform_3, window_bounds = array<i64: 1, 384>}, {pipeline_mode = #tpu.pipeline_mode<synchronous>, transform_indices = @transform_4, window_bounds = array<i64: 1, 128>}, {transform_indices = @transform_5, window_bounds = array<i64: 8, 128>}]} {
    %c0 = arith.constant 0 : index
    %c0_0 = arith.constant 0 : index
    %0 = vector.load %arg1[%c0, %c0_0] : memref<8x8xf32, #tpu.memory_space<vmem>>, vector<8x8xf32>
    %c0_1 = arith.constant 0 : index
    %c0_2 = arith.constant 0 : index
    %1 = vector.load %arg3[%c0_1, %c0_2] : memref<128x384xbf16, #tpu.memory_space<vmem>>, vector<128x384xbf16>
    %c0_3 = arith.constant 0 : index
    %c0_4 = arith.constant 0 : index
    %2 = vector.load %arg2[%c0_3, %c0_4] : memref<1x384xf32, #tpu.memory_space<vmem>>, vector<1x384xf32>
    %3 = vector.shape_cast %2 : vector<1x384xf32> to vector<1x384xf32>
    %4 = vector.broadcast %3 : vector<1x384xf32> to vector<8x384xf32>
    %c0_5 = arith.constant 0 : index
    %c0_6 = arith.constant 0 : index
    %5 = vector.load %arg4[%c0_5, %c0_6] : memref<1x384xf32, #tpu.memory_space<vmem>>, vector<1x384xf32>
    %6 = vector.shape_cast %5 : vector<1x384xf32> to vector<1x384xf32>
    %7 = vector.broadcast %6 : vector<1x384xf32> to vector<8x384xf32>
    %c0_7 = arith.constant 0 : index
    %c0_8 = arith.constant 0 : index
    %8 = vector.load %arg5[%c0_7, %c0_8] : memref<1x128xf32, #tpu.memory_space<vmem>>, vector<1x128xf32>
    %9 = vector.shape_cast %8 : vector<1x128xf32> to vector<1x128xf32>
    %10 = vector.broadcast %9 : vector<1x128xf32> to vector<8x128xf32>
    %cst = arith.constant 0.000000e+00 : f32
    %11 = vector.broadcast %cst : f32 to vector<8x128xf32>
    %12 = vector.extract_strided_slice %0 {offsets = [0, 0], sizes = [8, 1], strides = [1, 1]} : vector<8x8xf32> to vector<8x1xf32>
    %13 = vector.broadcast %12 : vector<8x1xf32> to vector<8x384xf32>
    %14 = arith.mulf %13, %4 : vector<8x384xf32>
    %15 = arith.addf %14, %7 : vector<8x384xf32>
    %16 = arith.truncf %11 : vector<8x128xf32> to vector<8x128xbf16>
    %cst_9 = arith.constant dense<0.000000e+00> : vector<8x384xf32>
    %17 = tpu.matmul %16, %1, %cst_9 {dimension_numbers = #tpu.dot_dimension_numbers<[1], [0], [0], [1], [0, 0, 1, 1], [], []>} : vector<8x128xbf16>, vector<128x384xbf16>, vector<8x384xf32> -> vector<8x384xf32>
    %18 = vector.extract_strided_slice %15 {offsets = [0, 0], sizes = [8, 128], strides = [1, 1]} : vector<8x384xf32> to vector<8x128xf32>
    %19 = vector.extract_strided_slice %17 {offsets = [0, 0], sizes = [8, 128], strides = [1, 1]} : vector<8x384xf32> to vector<8x128xf32>
    %20 = arith.addf %18, %19 : vector<8x128xf32>
    %21 = arith.negf %20 : vector<8x128xf32>
    %22 = math.exp %21 : vector<8x128xf32>
    %cst_10 = arith.constant 1.000000e+00 : f32
    %23 = vector.broadcast %cst_10 : f32 to vector<8x128xf32>
    %24 = arith.addf %23, %22 : vector<8x128xf32>
    %25 = arith.divf %23, %24 : vector<8x128xf32>
    %26 = vector.extract_strided_slice %15 {offsets = [0, 128], sizes = [8, 128], strides = [1, 1]} : vector<8x384xf32> to vector<8x128xf32>
    %27 = vector.extract_strided_slice %17 {offsets = [0, 128], sizes = [8, 128], strides = [1, 1]} : vector<8x384xf32> to vector<8x128xf32>
    %28 = arith.addf %26, %27 : vector<8x128xf32>
    %29 = arith.negf %28 : vector<8x128xf32>
    %30 = math.exp %29 : vector<8x128xf32>
    %cst_11 = arith.constant 1.000000e+00 : f32
    %31 = vector.broadcast %cst_11 : f32 to vector<8x128xf32>
    %32 = arith.addf %31, %30 : vector<8x128xf32>
    %33 = arith.divf %31, %32 : vector<8x128xf32>
    %34 = vector.extract_strided_slice %15 {offsets = [0, 256], sizes = [8, 128], strides = [1, 1]} : vector<8x384xf32> to vector<8x128xf32>
    %35 = vector.extract_strided_slice %17 {offsets = [0, 256], sizes = [8, 128], strides = [1, 1]} : vector<8x384xf32> to vector<8x128xf32>
    %36 = arith.addf %35, %10 : vector<8x128xf32>
    %37 = arith.mulf %25, %36 : vector<8x128xf32>
    %38 = arith.addf %34, %37 : vector<8x128xf32>
    %39 = math.tanh %38 : vector<8x128xf32>
    %cst_12 = arith.constant 1.000000e+00 : f32
    %40 = vector.broadcast %cst_12 : f32 to vector<8x128xf32>
    %41 = arith.subf %40, %33 : vector<8x128xf32>
    %42 = arith.mulf %41, %39 : vector<8x128xf32>
    %43 = arith.mulf %33, %11 : vector<8x128xf32>
    %44 = arith.addf %42, %43 : vector<8x128xf32>
    %45 = vector.extract_strided_slice %0 {offsets = [0, 1], sizes = [8, 1], strides = [1, 1]} : vector<8x8xf32> to vector<8x1xf32>
    %46 = vector.broadcast %45 : vector<8x1xf32> to vector<8x384xf32>
    %47 = arith.mulf %46, %4 : vector<8x384xf32>
    %48 = arith.addf %47, %7 : vector<8x384xf32>
    %49 = arith.truncf %44 : vector<8x128xf32> to vector<8x128xbf16>
    %cst_13 = arith.constant dense<0.000000e+00> : vector<8x384xf32>
    %50 = tpu.matmul %49, %1, %cst_13 {dimension_numbers = #tpu.dot_dimension_numbers<[1], [0], [0], [1], [0, 0, 1, 1], [], []>} : vector<8x128xbf16>, vector<128x384xbf16>, vector<8x384xf32> -> vector<8x384xf32>
    %51 = vector.extract_strided_slice %48 {offsets = [0, 0], sizes = [8, 128], strides = [1, 1]} : vector<8x384xf32> to vector<8x128xf32>
    %52 = vector.extract_strided_slice %50 {offsets = [0, 0], sizes = [8, 128], strides = [1, 1]} : vector<8x384xf32> to vector<8x128xf32>
    %53 = arith.addf %51, %52 : vector<8x128xf32>
    %54 = arith.negf %53 : vector<8x128xf32>
    %55 = math.exp %54 : vector<8x128xf32>
    %cst_14 = arith.constant 1.000000e+00 : f32
    %56 = vector.broadcast %cst_14 : f32 to vector<8x128xf32>
    %57 = arith.addf %56, %55 : vector<8x128xf32>
    %58 = arith.divf %56, %57 : vector<8x128xf32>
    %59 = vector.extract_strided_slice %48 {offsets = [0, 128], sizes = [8, 128], strides = [1, 1]} : vector<8x384xf32> to vector<8x128xf32>
    %60 = vector.extract_strided_slice %50 {offsets = [0, 128], sizes = [8, 128], strides = [1, 1]} : vector<8x384xf32> to vector<8x128xf32>
    %61 = arith.addf %59, %60 : vector<8x128xf32>
    %62 = arith.negf %61 : vector<8x128xf32>
    %63 = math.exp %62 : vector<8x128xf32>
    %cst_15 = arith.constant 1.000000e+00 : f32
    %64 = vector.broadcast %cst_15 : f32 to vector<8x128xf32>
    %65 = arith.addf %64, %63 : vector<8x128xf32>
    %66 = arith.divf %64, %65 : vector<8x128xf32>
    %67 = vector.extract_strided_slice %48 {offsets = [0, 256], sizes = [8, 128], strides = [1, 1]} : vector<8x384xf32> to vector<8x128xf32>
    %68 = vector.extract_strided_slice %50 {offsets = [0, 256], sizes = [8, 128], strides = [1, 1]} : vector<8x384xf32> to vector<8x128xf32>
    %69 = arith.addf %68, %10 : vector<8x128xf32>
    %70 = arith.mulf %58, %69 : vector<8x128xf32>
    %71 = arith.addf %67, %70 : vector<8x128xf32>
    %72 = math.tanh %71 : vector<8x128xf32>
    %cst_16 = arith.constant 1.000000e+00 : f32
    %73 = vector.broadcast %cst_16 : f32 to vector<8x128xf32>
    %74 = arith.subf %73, %66 : vector<8x128xf32>
    %75 = arith.mulf %74, %72 : vector<8x128xf32>
    %76 = arith.mulf %66, %44 : vector<8x128xf32>
    %77 = arith.addf %75, %76 : vector<8x128xf32>
    %78 = vector.extract_strided_slice %0 {offsets = [0, 2], sizes = [8, 1], strides = [1, 1]} : vector<8x8xf32> to vector<8x1xf32>
    %79 = vector.broadcast %78 : vector<8x1xf32> to vector<8x384xf32>
    %80 = arith.mulf %79, %4 : vector<8x384xf32>
    %81 = arith.addf %80, %7 : vector<8x384xf32>
    %82 = arith.truncf %77 : vector<8x128xf32> to vector<8x128xbf16>
    %cst_17 = arith.constant dense<0.000000e+00> : vector<8x384xf32>
    %83 = tpu.matmul %82, %1, %cst_17 {dimension_numbers = #tpu.dot_dimension_numbers<[1], [0], [0], [1], [0, 0, 1, 1], [], []>} : vector<8x128xbf16>, vector<128x384xbf16>, vector<8x384xf32> -> vector<8x384xf32>
    %84 = vector.extract_strided_slice %81 {offsets = [0, 0], sizes = [8, 128], strides = [1, 1]} : vector<8x384xf32> to vector<8x128xf32>
    %85 = vector.extract_strided_slice %83 {offsets = [0, 0], sizes = [8, 128], strides = [1, 1]} : vector<8x384xf32> to vector<8x128xf32>
    %86 = arith.addf %84, %85 : vector<8x128xf32>
    %87 = arith.negf %86 : vector<8x128xf32>
    %88 = math.exp %87 : vector<8x128xf32>
    %cst_18 = arith.constant 1.000000e+00 : f32
    %89 = vector.broadcast %cst_18 : f32 to vector<8x128xf32>
    %90 = arith.addf %89, %88 : vector<8x128xf32>
    %91 = arith.divf %89, %90 : vector<8x128xf32>
    %92 = vector.extract_strided_slice %81 {offsets = [0, 128], sizes = [8, 128], strides = [1, 1]} : vector<8x384xf32> to vector<8x128xf32>
    %93 = vector.extract_strided_slice %83 {offsets = [0, 128], sizes = [8, 128], strides = [1, 1]} : vector<8x384xf32> to vector<8x128xf32>
    %94 = arith.addf %92, %93 : vector<8x128xf32>
    %95 = arith.negf %94 : vector<8x128xf32>
    %96 = math.exp %95 : vector<8x128xf32>
    %cst_19 = arith.constant 1.000000e+00 : f32
    %97 = vector.broadcast %cst_19 : f32 to vector<8x128xf32>
    %98 = arith.addf %97, %96 : vector<8x128xf32>
    %99 = arith.divf %97, %98 : vector<8x128xf32>
    %100 = vector.extract_strided_slice %81 {offsets = [0, 256], sizes = [8, 128], strides = [1, 1]} : vector<8x384xf32> to vector<8x128xf32>
    %101 = vector.extract_strided_slice %83 {offsets = [0, 256], sizes = [8, 128], strides = [1, 1]} : vector<8x384xf32> to vector<8x128xf32>
    %102 = arith.addf %101, %10 : vector<8x128xf32>
    %103 = arith.mulf %91, %102 : vector<8x128xf32>
    %104 = arith.addf %100, %103 : vector<8x128xf32>
    %105 = math.tanh %104 : vector<8x128xf32>
    %cst_20 = arith.constant 1.000000e+00 : f32
    %106 = vector.broadcast %cst_20 : f32 to vector<8x128xf32>
    %107 = arith.subf %106, %99 : vector<8x128xf32>
    %108 = arith.mulf %107, %105 : vector<8x128xf32>
    %109 = arith.mulf %99, %77 : vector<8x128xf32>
    %110 = arith.addf %108, %109 : vector<8x128xf32>
    %111 = vector.extract_strided_slice %0 {offsets = [0, 3], sizes = [8, 1], strides = [1, 1]} : vector<8x8xf32> to vector<8x1xf32>
    %112 = vector.broadcast %111 : vector<8x1xf32> to vector<8x384xf32>
    %113 = arith.mulf %112, %4 : vector<8x384xf32>
    %114 = arith.addf %113, %7 : vector<8x384xf32>
    %115 = arith.truncf %110 : vector<8x128xf32> to vector<8x128xbf16>
    %cst_21 = arith.constant dense<0.000000e+00> : vector<8x384xf32>
    %116 = tpu.matmul %115, %1, %cst_21 {dimension_numbers = #tpu.dot_dimension_numbers<[1], [0], [0], [1], [0, 0, 1, 1], [], []>} : vector<8x128xbf16>, vector<128x384xbf16>, vector<8x384xf32> -> vector<8x384xf32>
    %117 = vector.extract_strided_slice %114 {offsets = [0, 0], sizes = [8, 128], strides = [1, 1]} : vector<8x384xf32> to vector<8x128xf32>
    %118 = vector.extract_strided_slice %116 {offsets = [0, 0], sizes = [8, 128], strides = [1, 1]} : vector<8x384xf32> to vector<8x128xf32>
    %119 = arith.addf %117, %118 : vector<8x128xf32>
    %120 = arith.negf %119 : vector<8x128xf32>
    %121 = math.exp %120 : vector<8x128xf32>
    %cst_22 = arith.constant 1.000000e+00 : f32
    %122 = vector.broadcast %cst_22 : f32 to vector<8x128xf32>
    %123 = arith.addf %122, %121 : vector<8x128xf32>
    %124 = arith.divf %122, %123 : vector<8x128xf32>
    %125 = vector.extract_strided_slice %114 {offsets = [0, 128], sizes = [8, 128], strides = [1, 1]} : vector<8x384xf32> to vector<8x128xf32>
    %126 = vector.extract_strided_slice %116 {offsets = [0, 128], sizes = [8, 128], strides = [1, 1]} : vector<8x384xf32> to vector<8x128xf32>
    %127 = arith.addf %125, %126 : vector<8x128xf32>
    %128 = arith.negf %127 : vector<8x128xf32>
    %129 = math.exp %128 : vector<8x128xf32>
    %cst_23 = arith.constant 1.000000e+00 : f32
    %130 = vector.broadcast %cst_23 : f32 to vector<8x128xf32>
    %131 = arith.addf %130, %129 : vector<8x128xf32>
    %132 = arith.divf %130, %131 : vector<8x128xf32>
    %133 = vector.extract_strided_slice %114 {offsets = [0, 256], sizes = [8, 128], strides = [1, 1]} : vector<8x384xf32> to vector<8x128xf32>
    %134 = vector.extract_strided_slice %116 {offsets = [0, 256], sizes = [8, 128], strides = [1, 1]} : vector<8x384xf32> to vector<8x128xf32>
    %135 = arith.addf %134, %10 : vector<8x128xf32>
    %136 = arith.mulf %124, %135 : vector<8x128xf32>
    %137 = arith.addf %133, %136 : vector<8x128xf32>
    %138 = math.tanh %137 : vector<8x128xf32>
    %cst_24 = arith.constant 1.000000e+00 : f32
    %139 = vector.broadcast %cst_24 : f32 to vector<8x128xf32>
    %140 = arith.subf %139, %132 : vector<8x128xf32>
    %141 = arith.mulf %140, %138 : vector<8x128xf32>
    %142 = arith.mulf %132, %110 : vector<8x128xf32>
    %143 = arith.addf %141, %142 : vector<8x128xf32>
    %144 = vector.extract_strided_slice %0 {offsets = [0, 4], sizes = [8, 1], strides = [1, 1]} : vector<8x8xf32> to vector<8x1xf32>
    %145 = vector.broadcast %144 : vector<8x1xf32> to vector<8x384xf32>
    %146 = arith.mulf %145, %4 : vector<8x384xf32>
    %147 = arith.addf %146, %7 : vector<8x384xf32>
    %148 = arith.truncf %143 : vector<8x128xf32> to vector<8x128xbf16>
    %cst_25 = arith.constant dense<0.000000e+00> : vector<8x384xf32>
    %149 = tpu.matmul %148, %1, %cst_25 {dimension_numbers = #tpu.dot_dimension_numbers<[1], [0], [0], [1], [0, 0, 1, 1], [], []>} : vector<8x128xbf16>, vector<128x384xbf16>, vector<8x384xf32> -> vector<8x384xf32>
    %150 = vector.extract_strided_slice %147 {offsets = [0, 0], sizes = [8, 128], strides = [1, 1]} : vector<8x384xf32> to vector<8x128xf32>
    %151 = vector.extract_strided_slice %149 {offsets = [0, 0], sizes = [8, 128], strides = [1, 1]} : vector<8x384xf32> to vector<8x128xf32>
    %152 = arith.addf %150, %151 : vector<8x128xf32>
    %153 = arith.negf %152 : vector<8x128xf32>
    %154 = math.exp %153 : vector<8x128xf32>
    %cst_26 = arith.constant 1.000000e+00 : f32
    %155 = vector.broadcast %cst_26 : f32 to vector<8x128xf32>
    %156 = arith.addf %155, %154 : vector<8x128xf32>
    %157 = arith.divf %155, %156 : vector<8x128xf32>
    %158 = vector.extract_strided_slice %147 {offsets = [0, 128], sizes = [8, 128], strides = [1, 1]} : vector<8x384xf32> to vector<8x128xf32>
    %159 = vector.extract_strided_slice %149 {offsets = [0, 128], sizes = [8, 128], strides = [1, 1]} : vector<8x384xf32> to vector<8x128xf32>
    %160 = arith.addf %158, %159 : vector<8x128xf32>
    %161 = arith.negf %160 : vector<8x128xf32>
    %162 = math.exp %161 : vector<8x128xf32>
    %cst_27 = arith.constant 1.000000e+00 : f32
    %163 = vector.broadcast %cst_27 : f32 to vector<8x128xf32>
    %164 = arith.addf %163, %162 : vector<8x128xf32>
    %165 = arith.divf %163, %164 : vector<8x128xf32>
    %166 = vector.extract_strided_slice %147 {offsets = [0, 256], sizes = [8, 128], strides = [1, 1]} : vector<8x384xf32> to vector<8x128xf32>
    %167 = vector.extract_strided_slice %149 {offsets = [0, 256], sizes = [8, 128], strides = [1, 1]} : vector<8x384xf32> to vector<8x128xf32>
    %168 = arith.addf %167, %10 : vector<8x128xf32>
    %169 = arith.mulf %157, %168 : vector<8x128xf32>
    %170 = arith.addf %166, %169 : vector<8x128xf32>
    %171 = math.tanh %170 : vector<8x128xf32>
    %cst_28 = arith.constant 1.000000e+00 : f32
    %172 = vector.broadcast %cst_28 : f32 to vector<8x128xf32>
    %173 = arith.subf %172, %165 : vector<8x128xf32>
    %174 = arith.mulf %173, %171 : vector<8x128xf32>
    %175 = arith.mulf %165, %143 : vector<8x128xf32>
    %176 = arith.addf %174, %175 : vector<8x128xf32>
    %177 = vector.extract_strided_slice %0 {offsets = [0, 5], sizes = [8, 1], strides = [1, 1]} : vector<8x8xf32> to vector<8x1xf32>
    %178 = vector.broadcast %177 : vector<8x1xf32> to vector<8x384xf32>
    %179 = arith.mulf %178, %4 : vector<8x384xf32>
    %180 = arith.addf %179, %7 : vector<8x384xf32>
    %181 = arith.truncf %176 : vector<8x128xf32> to vector<8x128xbf16>
    %cst_29 = arith.constant dense<0.000000e+00> : vector<8x384xf32>
    %182 = tpu.matmul %181, %1, %cst_29 {dimension_numbers = #tpu.dot_dimension_numbers<[1], [0], [0], [1], [0, 0, 1, 1], [], []>} : vector<8x128xbf16>, vector<128x384xbf16>, vector<8x384xf32> -> vector<8x384xf32>
    %183 = vector.extract_strided_slice %180 {offsets = [0, 0], sizes = [8, 128], strides = [1, 1]} : vector<8x384xf32> to vector<8x128xf32>
    %184 = vector.extract_strided_slice %182 {offsets = [0, 0], sizes = [8, 128], strides = [1, 1]} : vector<8x384xf32> to vector<8x128xf32>
    %185 = arith.addf %183, %184 : vector<8x128xf32>
    %186 = arith.negf %185 : vector<8x128xf32>
    %187 = math.exp %186 : vector<8x128xf32>
    %cst_30 = arith.constant 1.000000e+00 : f32
    %188 = vector.broadcast %cst_30 : f32 to vector<8x128xf32>
    %189 = arith.addf %188, %187 : vector<8x128xf32>
    %190 = arith.divf %188, %189 : vector<8x128xf32>
    %191 = vector.extract_strided_slice %180 {offsets = [0, 128], sizes = [8, 128], strides = [1, 1]} : vector<8x384xf32> to vector<8x128xf32>
    %192 = vector.extract_strided_slice %182 {offsets = [0, 128], sizes = [8, 128], strides = [1, 1]} : vector<8x384xf32> to vector<8x128xf32>
    %193 = arith.addf %191, %192 : vector<8x128xf32>
    %194 = arith.negf %193 : vector<8x128xf32>
    %195 = math.exp %194 : vector<8x128xf32>
    %cst_31 = arith.constant 1.000000e+00 : f32
    %196 = vector.broadcast %cst_31 : f32 to vector<8x128xf32>
    %197 = arith.addf %196, %195 : vector<8x128xf32>
    %198 = arith.divf %196, %197 : vector<8x128xf32>
    %199 = vector.extract_strided_slice %180 {offsets = [0, 256], sizes = [8, 128], strides = [1, 1]} : vector<8x384xf32> to vector<8x128xf32>
    %200 = vector.extract_strided_slice %182 {offsets = [0, 256], sizes = [8, 128], strides = [1, 1]} : vector<8x384xf32> to vector<8x128xf32>
    %201 = arith.addf %200, %10 : vector<8x128xf32>
    %202 = arith.mulf %190, %201 : vector<8x128xf32>
    %203 = arith.addf %199, %202 : vector<8x128xf32>
    %204 = math.tanh %203 : vector<8x128xf32>
    %cst_32 = arith.constant 1.000000e+00 : f32
    %205 = vector.broadcast %cst_32 : f32 to vector<8x128xf32>
    %206 = arith.subf %205, %198 : vector<8x128xf32>
    %207 = arith.mulf %206, %204 : vector<8x128xf32>
    %208 = arith.mulf %198, %176 : vector<8x128xf32>
    %209 = arith.addf %207, %208 : vector<8x128xf32>
    %210 = vector.extract_strided_slice %0 {offsets = [0, 6], sizes = [8, 1], strides = [1, 1]} : vector<8x8xf32> to vector<8x1xf32>
    %211 = vector.broadcast %210 : vector<8x1xf32> to vector<8x384xf32>
    %212 = arith.mulf %211, %4 : vector<8x384xf32>
    %213 = arith.addf %212, %7 : vector<8x384xf32>
    %214 = arith.truncf %209 : vector<8x128xf32> to vector<8x128xbf16>
    %cst_33 = arith.constant dense<0.000000e+00> : vector<8x384xf32>
    %215 = tpu.matmul %214, %1, %cst_33 {dimension_numbers = #tpu.dot_dimension_numbers<[1], [0], [0], [1], [0, 0, 1, 1], [], []>} : vector<8x128xbf16>, vector<128x384xbf16>, vector<8x384xf32> -> vector<8x384xf32>
    %216 = vector.extract_strided_slice %213 {offsets = [0, 0], sizes = [8, 128], strides = [1, 1]} : vector<8x384xf32> to vector<8x128xf32>
    %217 = vector.extract_strided_slice %215 {offsets = [0, 0], sizes = [8, 128], strides = [1, 1]} : vector<8x384xf32> to vector<8x128xf32>
    %218 = arith.addf %216, %217 : vector<8x128xf32>
    %219 = arith.negf %218 : vector<8x128xf32>
    %220 = math.exp %219 : vector<8x128xf32>
    %cst_34 = arith.constant 1.000000e+00 : f32
    %221 = vector.broadcast %cst_34 : f32 to vector<8x128xf32>
    %222 = arith.addf %221, %220 : vector<8x128xf32>
    %223 = arith.divf %221, %222 : vector<8x128xf32>
    %224 = vector.extract_strided_slice %213 {offsets = [0, 128], sizes = [8, 128], strides = [1, 1]} : vector<8x384xf32> to vector<8x128xf32>
    %225 = vector.extract_strided_slice %215 {offsets = [0, 128], sizes = [8, 128], strides = [1, 1]} : vector<8x384xf32> to vector<8x128xf32>
    %226 = arith.addf %224, %225 : vector<8x128xf32>
    %227 = arith.negf %226 : vector<8x128xf32>
    %228 = math.exp %227 : vector<8x128xf32>
    %cst_35 = arith.constant 1.000000e+00 : f32
    %229 = vector.broadcast %cst_35 : f32 to vector<8x128xf32>
    %230 = arith.addf %229, %228 : vector<8x128xf32>
    %231 = arith.divf %229, %230 : vector<8x128xf32>
    %232 = vector.extract_strided_slice %213 {offsets = [0, 256], sizes = [8, 128], strides = [1, 1]} : vector<8x384xf32> to vector<8x128xf32>
    %233 = vector.extract_strided_slice %215 {offsets = [0, 256], sizes = [8, 128], strides = [1, 1]} : vector<8x384xf32> to vector<8x128xf32>
    %234 = arith.addf %233, %10 : vector<8x128xf32>
    %235 = arith.mulf %223, %234 : vector<8x128xf32>
    %236 = arith.addf %232, %235 : vector<8x128xf32>
    %237 = math.tanh %236 : vector<8x128xf32>
    %cst_36 = arith.constant 1.000000e+00 : f32
    %238 = vector.broadcast %cst_36 : f32 to vector<8x128xf32>
    %239 = arith.subf %238, %231 : vector<8x128xf32>
    %240 = arith.mulf %239, %237 : vector<8x128xf32>
    %241 = arith.mulf %231, %209 : vector<8x128xf32>
    %242 = arith.addf %240, %241 : vector<8x128xf32>
    %243 = vector.extract_strided_slice %0 {offsets = [0, 7], sizes = [8, 1], strides = [1, 1]} : vector<8x8xf32> to vector<8x1xf32>
    %244 = vector.broadcast %243 : vector<8x1xf32> to vector<8x384xf32>
    %245 = arith.mulf %244, %4 : vector<8x384xf32>
    %246 = arith.addf %245, %7 : vector<8x384xf32>
    %247 = arith.truncf %242 : vector<8x128xf32> to vector<8x128xbf16>
    %cst_37 = arith.constant dense<0.000000e+00> : vector<8x384xf32>
    %248 = tpu.matmul %247, %1, %cst_37 {dimension_numbers = #tpu.dot_dimension_numbers<[1], [0], [0], [1], [0, 0, 1, 1], [], []>} : vector<8x128xbf16>, vector<128x384xbf16>, vector<8x384xf32> -> vector<8x384xf32>
    %249 = vector.extract_strided_slice %246 {offsets = [0, 0], sizes = [8, 128], strides = [1, 1]} : vector<8x384xf32> to vector<8x128xf32>
    %250 = vector.extract_strided_slice %248 {offsets = [0, 0], sizes = [8, 128], strides = [1, 1]} : vector<8x384xf32> to vector<8x128xf32>
    %251 = arith.addf %249, %250 : vector<8x128xf32>
    %252 = arith.negf %251 : vector<8x128xf32>
    %253 = math.exp %252 : vector<8x128xf32>
    %cst_38 = arith.constant 1.000000e+00 : f32
    %254 = vector.broadcast %cst_38 : f32 to vector<8x128xf32>
    %255 = arith.addf %254, %253 : vector<8x128xf32>
    %256 = arith.divf %254, %255 : vector<8x128xf32>
    %257 = vector.extract_strided_slice %246 {offsets = [0, 128], sizes = [8, 128], strides = [1, 1]} : vector<8x384xf32> to vector<8x128xf32>
    %258 = vector.extract_strided_slice %248 {offsets = [0, 128], sizes = [8, 128], strides = [1, 1]} : vector<8x384xf32> to vector<8x128xf32>
    %259 = arith.addf %257, %258 : vector<8x128xf32>
    %260 = arith.negf %259 : vector<8x128xf32>
    %261 = math.exp %260 : vector<8x128xf32>
    %cst_39 = arith.constant 1.000000e+00 : f32
    %262 = vector.broadcast %cst_39 : f32 to vector<8x128xf32>
    %263 = arith.addf %262, %261 : vector<8x128xf32>
    %264 = arith.divf %262, %263 : vector<8x128xf32>
    %265 = vector.extract_strided_slice %246 {offsets = [0, 256], sizes = [8, 128], strides = [1, 1]} : vector<8x384xf32> to vector<8x128xf32>
    %266 = vector.extract_strided_slice %248 {offsets = [0, 256], sizes = [8, 128], strides = [1, 1]} : vector<8x384xf32> to vector<8x128xf32>
    %267 = arith.addf %266, %10 : vector<8x128xf32>
    %268 = arith.mulf %256, %267 : vector<8x128xf32>
    %269 = arith.addf %265, %268 : vector<8x128xf32>
    %270 = math.tanh %269 : vector<8x128xf32>
    %cst_40 = arith.constant 1.000000e+00 : f32
    %271 = vector.broadcast %cst_40 : f32 to vector<8x128xf32>
    %272 = arith.subf %271, %264 : vector<8x128xf32>
    %273 = arith.mulf %272, %270 : vector<8x128xf32>
    %274 = arith.mulf %264, %242 : vector<8x128xf32>
    %275 = arith.addf %273, %274 : vector<8x128xf32>
    %c0_41 = arith.constant 0 : index
    %c0_42 = arith.constant 0 : index
    %276 = vector.load %arg6[%c0_41, %c0_42] : memref<8x128xf32, #tpu.memory_space<vmem>>, vector<8x128xf32>
    tpu.vector_store %arg6[%c0_41, %c0_42], %275 {strides = array<i32>} : memref<8x128xf32, #tpu.memory_space<vmem>>, vector<8x128xf32>,
    return
  }
  func.func @transform_0(%arg0: i32) -> (i32, i32) {
    %c0_i32 = arith.constant 0 : i32
    %c0_i32_0 = arith.constant 0 : i32
    return %arg0, %c0_i32 : i32, i32
  }
  func.func @transform_1(%arg0: i32) -> (i32, i32) {
    %c0_i32 = arith.constant 0 : i32
    %c0_i32_0 = arith.constant 0 : i32
    %c0_i32_1 = arith.constant 0 : i32
    return %c0_i32, %c0_i32_0 : i32, i32
  }
  func.func @transform_2(%arg0: i32) -> (i32, i32) {
    %c0_i32 = arith.constant 0 : i32
    %c0_i32_0 = arith.constant 0 : i32
    %c0_i32_1 = arith.constant 0 : i32
    return %c0_i32, %c0_i32_0 : i32, i32
  }
  func.func @transform_3(%arg0: i32) -> (i32, i32) {
    %c0_i32 = arith.constant 0 : i32
    %c0_i32_0 = arith.constant 0 : i32
    %c0_i32_1 = arith.constant 0 : i32
    return %c0_i32, %c0_i32_0 : i32, i32
  }
  func.func @transform_4(%arg0: i32) -> (i32, i32) {
    %c0_i32 = arith.constant 0 : i32
    %c0_i32_0 = arith.constant 0 : i32
    %c0_i32_1 = arith.constant 0 : i32
    return %c0_i32, %c0_i32_0 : i32, i32
  }
  func.func @transform_5(%arg0: i32) -> (i32, i32) {
    %c0_i32 = arith.constant 0 : i32
    %c0_i32_0 = arith.constant 0 : i32
    return %arg0, %c0_i32 : i32, i32
  }
}

module attributes {stable_mosaic.version = 11 : i64} {
  func.func @gru_last_kernel(%arg0: i32, %arg1: memref<8x8xf32, #tpu.memory_space<vmem>>, %arg2: memref<1x384xf32, #tpu.memory_space<vmem>>, %arg3: memref<128x384xbf16, #tpu.memory_space<vmem>>, %arg4: memref<1x384xf32, #tpu.memory_space<vmem>>, %arg5: memref<1x128xf32, #tpu.memory_space<vmem>>, %arg6: memref<8x128xf32, #tpu.memory_space<vmem>>) attributes {dimension_semantics = [#tpu.dimension_semantics<parallel>], iteration_bounds = array<i64: 1>, scalar_prefetch = 0 : i64, scratch_operands = 0 : i64, tpu.core_type = #tpu.core_type<tc>, window_params = [{transform_indices = @transform_0, window_bounds = array<i64: 8, 8>}, {pipeline_mode = #tpu.pipeline_mode<synchronous>, transform_indices = @transform_1, window_bounds = array<i64: 1, 384>}, {pipeline_mode = #tpu.pipeline_mode<synchronous>, transform_indices = @transform_2, window_bounds = array<i64: 128, 384>}, {pipeline_mode = #tpu.pipeline_mode<synchronous>, transform_indices = @transform_3, window_bounds = array<i64: 1, 384>}, {pipeline_mode = #tpu.pipeline_mode<synchronous>, transform_indices = @transform_4, window_bounds = array<i64: 1, 128>}, {transform_indices = @transform_5, window_bounds = array<i64: 8, 128>}]} {
    %c0 = arith.constant 0 : index
    %c0_0 = arith.constant 0 : index
    %0 = vector.load %arg1[%c0, %c0_0] : memref<8x8xf32, #tpu.memory_space<vmem>>, vector<8x8xf32>
    %c0_1 = arith.constant 0 : index
    %c0_2 = arith.constant 0 : index
    %1 = vector.load %arg3[%c0_1, %c0_2] : memref<128x384xbf16, #tpu.memory_space<vmem>>, vector<128x384xbf16>
    %c0_3 = arith.constant 0 : index
    %c0_4 = arith.constant 0 : index
    %2 = vector.load %arg2[%c0_3, %c0_4] : memref<1x384xf32, #tpu.memory_space<vmem>>, vector<1x384xf32>
    %3 = vector.shape_cast %2 : vector<1x384xf32> to vector<1x384xf32>
    %4 = vector.broadcast %3 : vector<1x384xf32> to vector<8x384xf32>
    %c0_5 = arith.constant 0 : index
    %c0_6 = arith.constant 0 : index
    %5 = vector.load %arg4[%c0_5, %c0_6] : memref<1x384xf32, #tpu.memory_space<vmem>>, vector<1x384xf32>
    %6 = vector.shape_cast %5 : vector<1x384xf32> to vector<1x384xf32>
    %7 = vector.broadcast %6 : vector<1x384xf32> to vector<8x384xf32>
    %c0_7 = arith.constant 0 : index
    %c0_8 = arith.constant 0 : index
    %8 = vector.load %arg5[%c0_7, %c0_8] : memref<1x128xf32, #tpu.memory_space<vmem>>, vector<1x128xf32>
    %9 = vector.shape_cast %8 : vector<1x128xf32> to vector<1x128xf32>
    %10 = vector.broadcast %9 : vector<1x128xf32> to vector<8x128xf32>
    %cst = arith.constant 0.000000e+00 : f32
    %11 = vector.broadcast %cst : f32 to vector<8x128xf32>
    %12 = vector.extract_strided_slice %0 {offsets = [0, 0], sizes = [8, 1], strides = [1, 1]} : vector<8x8xf32> to vector<8x1xf32>
    %13 = vector.broadcast %12 : vector<8x1xf32> to vector<8x384xf32>
    %14 = arith.mulf %13, %4 : vector<8x384xf32>
    %15 = arith.addf %14, %7 : vector<8x384xf32>
    %16 = arith.truncf %11 : vector<8x128xf32> to vector<8x128xbf16>
    %cst_9 = arith.constant dense<0.000000e+00> : vector<8x384xf32>
    %17 = tpu.matmul %16, %1, %cst_9 {dimension_numbers = #tpu.dot_dimension_numbers<[1], [0], [0], [1], [0, 0, 1, 1], [], []>} : vector<8x128xbf16>, vector<128x384xbf16>, vector<8x384xf32> -> vector<8x384xf32>
    %18 = vector.extract_strided_slice %15 {offsets = [0, 0], sizes = [8, 128], strides = [1, 1]} : vector<8x384xf32> to vector<8x128xf32>
    %19 = vector.extract_strided_slice %17 {offsets = [0, 0], sizes = [8, 128], strides = [1, 1]} : vector<8x384xf32> to vector<8x128xf32>
    %20 = arith.addf %18, %19 : vector<8x128xf32>
    %21 = arith.negf %20 : vector<8x128xf32>
    %22 = math.exp %21 : vector<8x128xf32>
    %cst_10 = arith.constant 1.000000e+00 : f32
    %23 = vector.broadcast %cst_10 : f32 to vector<8x128xf32>
    %24 = arith.addf %23, %22 : vector<8x128xf32>
    %25 = arith.divf %23, %24 : vector<8x128xf32>
    %26 = vector.extract_strided_slice %15 {offsets = [0, 128], sizes = [8, 128], strides = [1, 1]} : vector<8x384xf32> to vector<8x128xf32>
    %27 = vector.extract_strided_slice %17 {offsets = [0, 128], sizes = [8, 128], strides = [1, 1]} : vector<8x384xf32> to vector<8x128xf32>
    %28 = arith.addf %26, %27 : vector<8x128xf32>
    %29 = arith.negf %28 : vector<8x128xf32>
    %30 = math.exp %29 : vector<8x128xf32>
    %cst_11 = arith.constant 1.000000e+00 : f32
    %31 = vector.broadcast %cst_11 : f32 to vector<8x128xf32>
    %32 = arith.addf %31, %30 : vector<8x128xf32>
    %33 = arith.divf %31, %32 : vector<8x128xf32>
    %34 = vector.extract_strided_slice %15 {offsets = [0, 256], sizes = [8, 128], strides = [1, 1]} : vector<8x384xf32> to vector<8x128xf32>
    %35 = vector.extract_strided_slice %17 {offsets = [0, 256], sizes = [8, 128], strides = [1, 1]} : vector<8x384xf32> to vector<8x128xf32>
    %36 = arith.addf %35, %10 : vector<8x128xf32>
    %37 = arith.mulf %25, %36 : vector<8x128xf32>
    %38 = arith.addf %34, %37 : vector<8x128xf32>
    %39 = math.tanh %38 : vector<8x128xf32>
    %cst_12 = arith.constant 1.000000e+00 : f32
    %40 = vector.broadcast %cst_12 : f32 to vector<8x128xf32>
    %41 = arith.subf %40, %33 : vector<8x128xf32>
    %42 = arith.mulf %41, %39 : vector<8x128xf32>
    %43 = arith.mulf %33, %11 : vector<8x128xf32>
    %44 = arith.addf %42, %43 : vector<8x128xf32>
    %45 = vector.extract_strided_slice %0 {offsets = [0, 1], sizes = [8, 1], strides = [1, 1]} : vector<8x8xf32> to vector<8x1xf32>
    %46 = vector.broadcast %45 : vector<8x1xf32> to vector<8x384xf32>
    %47 = arith.mulf %46, %4 : vector<8x384xf32>
    %48 = arith.addf %47, %7 : vector<8x384xf32>
    %49 = arith.truncf %44 : vector<8x128xf32> to vector<8x128xbf16>
    %cst_13 = arith.constant dense<0.000000e+00> : vector<8x384xf32>
    %50 = tpu.matmul %49, %1, %cst_13 {dimension_numbers = #tpu.dot_dimension_numbers<[1], [0], [0], [1], [0, 0, 1, 1], [], []>} : vector<8x128xbf16>, vector<128x384xbf16>, vector<8x384xf32> -> vector<8x384xf32>
    %51 = vector.extract_strided_slice %48 {offsets = [0, 0], sizes = [8, 128], strides = [1, 1]} : vector<8x384xf32> to vector<8x128xf32>
    %52 = vector.extract_strided_slice %50 {offsets = [0, 0], sizes = [8, 128], strides = [1, 1]} : vector<8x384xf32> to vector<8x128xf32>
    %53 = arith.addf %51, %52 : vector<8x128xf32>
    %54 = arith.negf %53 : vector<8x128xf32>
    %55 = math.exp %54 : vector<8x128xf32>
    %cst_14 = arith.constant 1.000000e+00 : f32
    %56 = vector.broadcast %cst_14 : f32 to vector<8x128xf32>
    %57 = arith.addf %56, %55 : vector<8x128xf32>
    %58 = arith.divf %56, %57 : vector<8x128xf32>
    %59 = vector.extract_strided_slice %48 {offsets = [0, 128], sizes = [8, 128], strides = [1, 1]} : vector<8x384xf32> to vector<8x128xf32>
    %60 = vector.extract_strided_slice %50 {offsets = [0, 128], sizes = [8, 128], strides = [1, 1]} : vector<8x384xf32> to vector<8x128xf32>
    %61 = arith.addf %59, %60 : vector<8x128xf32>
    %62 = arith.negf %61 : vector<8x128xf32>
    %63 = math.exp %62 : vector<8x128xf32>
    %cst_15 = arith.constant 1.000000e+00 : f32
    %64 = vector.broadcast %cst_15 : f32 to vector<8x128xf32>
    %65 = arith.addf %64, %63 : vector<8x128xf32>
    %66 = arith.divf %64, %65 : vector<8x128xf32>
    %67 = vector.extract_strided_slice %48 {offsets = [0, 256], sizes = [8, 128], strides = [1, 1]} : vector<8x384xf32> to vector<8x128xf32>
    %68 = vector.extract_strided_slice %50 {offsets = [0, 256], sizes = [8, 128], strides = [1, 1]} : vector<8x384xf32> to vector<8x128xf32>
    %69 = arith.addf %68, %10 : vector<8x128xf32>
    %70 = arith.mulf %58, %69 : vector<8x128xf32>
    %71 = arith.addf %67, %70 : vector<8x128xf32>
    %72 = math.tanh %71 : vector<8x128xf32>
    %cst_16 = arith.constant 1.000000e+00 : f32
    %73 = vector.broadcast %cst_16 : f32 to vector<8x128xf32>
    %74 = arith.subf %73, %66 : vector<8x128xf32>
    %75 = arith.mulf %74, %72 : vector<8x128xf32>
    %76 = arith.mulf %66, %44 : vector<8x128xf32>
    %77 = arith.addf %75, %76 : vector<8x128xf32>
    %78 = vector.extract_strided_slice %0 {offsets = [0, 2], sizes = [8, 1], strides = [1, 1]} : vector<8x8xf32> to vector<8x1xf32>
    %79 = vector.broadcast %78 : vector<8x1xf32> to vector<8x384xf32>
    %80 = arith.mulf %79, %4 : vector<8x384xf32>
    %81 = arith.addf %80, %7 : vector<8x384xf32>
    %82 = arith.truncf %77 : vector<8x128xf32> to vector<8x128xbf16>
    %cst_17 = arith.constant dense<0.000000e+00> : vector<8x384xf32>
    %83 = tpu.matmul %82, %1, %cst_17 {dimension_numbers = #tpu.dot_dimension_numbers<[1], [0], [0], [1], [0, 0, 1, 1], [], []>} : vector<8x128xbf16>, vector<128x384xbf16>, vector<8x384xf32> -> vector<8x384xf32>
    %84 = vector.extract_strided_slice %81 {offsets = [0, 0], sizes = [8, 128], strides = [1, 1]} : vector<8x384xf32> to vector<8x128xf32>
    %85 = vector.extract_strided_slice %83 {offsets = [0, 0], sizes = [8, 128], strides = [1, 1]} : vector<8x384xf32> to vector<8x128xf32>
    %86 = arith.addf %84, %85 : vector<8x128xf32>
    %87 = arith.negf %86 : vector<8x128xf32>
    %88 = math.exp %87 : vector<8x128xf32>
    %cst_18 = arith.constant 1.000000e+00 : f32
    %89 = vector.broadcast %cst_18 : f32 to vector<8x128xf32>
    %90 = arith.addf %89, %88 : vector<8x128xf32>
    %91 = arith.divf %89, %90 : vector<8x128xf32>
    %92 = vector.extract_strided_slice %81 {offsets = [0, 128], sizes = [8, 128], strides = [1, 1]} : vector<8x384xf32> to vector<8x128xf32>
    %93 = vector.extract_strided_slice %83 {offsets = [0, 128], sizes = [8, 128], strides = [1, 1]} : vector<8x384xf32> to vector<8x128xf32>
    %94 = arith.addf %92, %93 : vector<8x128xf32>
    %95 = arith.negf %94 : vector<8x128xf32>
    %96 = math.exp %95 : vector<8x128xf32>
    %cst_19 = arith.constant 1.000000e+00 : f32
    %97 = vector.broadcast %cst_19 : f32 to vector<8x128xf32>
    %98 = arith.addf %97, %96 : vector<8x128xf32>
    %99 = arith.divf %97, %98 : vector<8x128xf32>
    %100 = vector.extract_strided_slice %81 {offsets = [0, 256], sizes = [8, 128], strides = [1, 1]} : vector<8x384xf32> to vector<8x128xf32>
    %101 = vector.extract_strided_slice %83 {offsets = [0, 256], sizes = [8, 128], strides = [1, 1]} : vector<8x384xf32> to vector<8x128xf32>
    %102 = arith.addf %101, %10 : vector<8x128xf32>
    %103 = arith.mulf %91, %102 : vector<8x128xf32>
    %104 = arith.addf %100, %103 : vector<8x128xf32>
    %105 = math.tanh %104 : vector<8x128xf32>
    %cst_20 = arith.constant 1.000000e+00 : f32
    %106 = vector.broadcast %cst_20 : f32 to vector<8x128xf32>
    %107 = arith.subf %106, %99 : vector<8x128xf32>
    %108 = arith.mulf %107, %105 : vector<8x128xf32>
    %109 = arith.mulf %99, %77 : vector<8x128xf32>
    %110 = arith.addf %108, %109 : vector<8x128xf32>
    %111 = vector.extract_strided_slice %0 {offsets = [0, 3], sizes = [8, 1], strides = [1, 1]} : vector<8x8xf32> to vector<8x1xf32>
    %112 = vector.broadcast %111 : vector<8x1xf32> to vector<8x384xf32>
    %113 = arith.mulf %112, %4 : vector<8x384xf32>
    %114 = arith.addf %113, %7 : vector<8x384xf32>
    %115 = arith.truncf %110 : vector<8x128xf32> to vector<8x128xbf16>
    %cst_21 = arith.constant dense<0.000000e+00> : vector<8x384xf32>
    %116 = tpu.matmul %115, %1, %cst_21 {dimension_numbers = #tpu.dot_dimension_numbers<[1], [0], [0], [1], [0, 0, 1, 1], [], []>} : vector<8x128xbf16>, vector<128x384xbf16>, vector<8x384xf32> -> vector<8x384xf32>
    %117 = vector.extract_strided_slice %114 {offsets = [0, 0], sizes = [8, 128], strides = [1, 1]} : vector<8x384xf32> to vector<8x128xf32>
    %118 = vector.extract_strided_slice %116 {offsets = [0, 0], sizes = [8, 128], strides = [1, 1]} : vector<8x384xf32> to vector<8x128xf32>
    %119 = arith.addf %117, %118 : vector<8x128xf32>
    %120 = arith.negf %119 : vector<8x128xf32>
    %121 = math.exp %120 : vector<8x128xf32>
    %cst_22 = arith.constant 1.000000e+00 : f32
    %122 = vector.broadcast %cst_22 : f32 to vector<8x128xf32>
    %123 = arith.addf %122, %121 : vector<8x128xf32>
    %124 = arith.divf %122, %123 : vector<8x128xf32>
    %125 = vector.extract_strided_slice %114 {offsets = [0, 128], sizes = [8, 128], strides = [1, 1]} : vector<8x384xf32> to vector<8x128xf32>
    %126 = vector.extract_strided_slice %116 {offsets = [0, 128], sizes = [8, 128], strides = [1, 1]} : vector<8x384xf32> to vector<8x128xf32>
    %127 = arith.addf %125, %126 : vector<8x128xf32>
    %128 = arith.negf %127 : vector<8x128xf32>
    %129 = math.exp %128 : vector<8x128xf32>
    %cst_23 = arith.constant 1.000000e+00 : f32
    %130 = vector.broadcast %cst_23 : f32 to vector<8x128xf32>
    %131 = arith.addf %130, %129 : vector<8x128xf32>
    %132 = arith.divf %130, %131 : vector<8x128xf32>
    %133 = vector.extract_strided_slice %114 {offsets = [0, 256], sizes = [8, 128], strides = [1, 1]} : vector<8x384xf32> to vector<8x128xf32>
    %134 = vector.extract_strided_slice %116 {offsets = [0, 256], sizes = [8, 128], strides = [1, 1]} : vector<8x384xf32> to vector<8x128xf32>
    %135 = arith.addf %134, %10 : vector<8x128xf32>
    %136 = arith.mulf %124, %135 : vector<8x128xf32>
    %137 = arith.addf %133, %136 : vector<8x128xf32>
    %138 = math.tanh %137 : vector<8x128xf32>
    %cst_24 = arith.constant 1.000000e+00 : f32
    %139 = vector.broadcast %cst_24 : f32 to vector<8x128xf32>
    %140 = arith.subf %139, %132 : vector<8x128xf32>
    %141 = arith.mulf %140, %138 : vector<8x128xf32>
    %142 = arith.mulf %132, %110 : vector<8x128xf32>
    %143 = arith.addf %141, %142 : vector<8x128xf32>
    %144 = vector.extract_strided_slice %0 {offsets = [0, 4], sizes = [8, 1], strides = [1, 1]} : vector<8x8xf32> to vector<8x1xf32>
    %145 = vector.broadcast %144 : vector<8x1xf32> to vector<8x384xf32>
    %146 = arith.mulf %145, %4 : vector<8x384xf32>
    %147 = arith.addf %146, %7 : vector<8x384xf32>
    %148 = arith.truncf %143 : vector<8x128xf32> to vector<8x128xbf16>
    %cst_25 = arith.constant dense<0.000000e+00> : vector<8x384xf32>
    %149 = tpu.matmul %148, %1, %cst_25 {dimension_numbers = #tpu.dot_dimension_numbers<[1], [0], [0], [1], [0, 0, 1, 1], [], []>} : vector<8x128xbf16>, vector<128x384xbf16>, vector<8x384xf32> -> vector<8x384xf32>
    %150 = vector.extract_strided_slice %147 {offsets = [0, 0], sizes = [8, 128], strides = [1, 1]} : vector<8x384xf32> to vector<8x128xf32>
    %151 = vector.extract_strided_slice %149 {offsets = [0, 0], sizes = [8, 128], strides = [1, 1]} : vector<8x384xf32> to vector<8x128xf32>
    %152 = arith.addf %150, %151 : vector<8x128xf32>
    %153 = arith.negf %152 : vector<8x128xf32>
    %154 = math.exp %153 : vector<8x128xf32>
    %cst_26 = arith.constant 1.000000e+00 : f32
    %155 = vector.broadcast %cst_26 : f32 to vector<8x128xf32>
    %156 = arith.addf %155, %154 : vector<8x128xf32>
    %157 = arith.divf %155, %156 : vector<8x128xf32>
    %158 = vector.extract_strided_slice %147 {offsets = [0, 128], sizes = [8, 128], strides = [1, 1]} : vector<8x384xf32> to vector<8x128xf32>
    %159 = vector.extract_strided_slice %149 {offsets = [0, 128], sizes = [8, 128], strides = [1, 1]} : vector<8x384xf32> to vector<8x128xf32>
    %160 = arith.addf %158, %159 : vector<8x128xf32>
    %161 = arith.negf %160 : vector<8x128xf32>
    %162 = math.exp %161 : vector<8x128xf32>
    %cst_27 = arith.constant 1.000000e+00 : f32
    %163 = vector.broadcast %cst_27 : f32 to vector<8x128xf32>
    %164 = arith.addf %163, %162 : vector<8x128xf32>
    %165 = arith.divf %163, %164 : vector<8x128xf32>
    %166 = vector.extract_strided_slice %147 {offsets = [0, 256], sizes = [8, 128], strides = [1, 1]} : vector<8x384xf32> to vector<8x128xf32>
    %167 = vector.extract_strided_slice %149 {offsets = [0, 256], sizes = [8, 128], strides = [1, 1]} : vector<8x384xf32> to vector<8x128xf32>
    %168 = arith.addf %167, %10 : vector<8x128xf32>
    %169 = arith.mulf %157, %168 : vector<8x128xf32>
    %170 = arith.addf %166, %169 : vector<8x128xf32>
    %171 = math.tanh %170 : vector<8x128xf32>
    %cst_28 = arith.constant 1.000000e+00 : f32
    %172 = vector.broadcast %cst_28 : f32 to vector<8x128xf32>
    %173 = arith.subf %172, %165 : vector<8x128xf32>
    %174 = arith.mulf %173, %171 : vector<8x128xf32>
    %175 = arith.mulf %165, %143 : vector<8x128xf32>
    %176 = arith.addf %174, %175 : vector<8x128xf32>
    %177 = vector.extract_strided_slice %0 {offsets = [0, 5], sizes = [8, 1], strides = [1, 1]} : vector<8x8xf32> to vector<8x1xf32>
    %178 = vector.broadcast %177 : vector<8x1xf32> to vector<8x384xf32>
    %179 = arith.mulf %178, %4 : vector<8x384xf32>
    %180 = arith.addf %179, %7 : vector<8x384xf32>
    %181 = arith.truncf %176 : vector<8x128xf32> to vector<8x128xbf16>
    %cst_29 = arith.constant dense<0.000000e+00> : vector<8x384xf32>
    %182 = tpu.matmul %181, %1, %cst_29 {dimension_numbers = #tpu.dot_dimension_numbers<[1], [0], [0], [1], [0, 0, 1, 1], [], []>} : vector<8x128xbf16>, vector<128x384xbf16>, vector<8x384xf32> -> vector<8x384xf32>
    %183 = vector.extract_strided_slice %180 {offsets = [0, 0], sizes = [8, 128], strides = [1, 1]} : vector<8x384xf32> to vector<8x128xf32>
    %184 = vector.extract_strided_slice %182 {offsets = [0, 0], sizes = [8, 128], strides = [1, 1]} : vector<8x384xf32> to vector<8x128xf32>
    %185 = arith.addf %183, %184 : vector<8x128xf32>
    %186 = arith.negf %185 : vector<8x128xf32>
    %187 = math.exp %186 : vector<8x128xf32>
    %cst_30 = arith.constant 1.000000e+00 : f32
    %188 = vector.broadcast %cst_30 : f32 to vector<8x128xf32>
    %189 = arith.addf %188, %187 : vector<8x128xf32>
    %190 = arith.divf %188, %189 : vector<8x128xf32>
    %191 = vector.extract_strided_slice %180 {offsets = [0, 128], sizes = [8, 128], strides = [1, 1]} : vector<8x384xf32> to vector<8x128xf32>
    %192 = vector.extract_strided_slice %182 {offsets = [0, 128], sizes = [8, 128], strides = [1, 1]} : vector<8x384xf32> to vector<8x128xf32>
    %193 = arith.addf %191, %192 : vector<8x128xf32>
    %194 = arith.negf %193 : vector<8x128xf32>
    %195 = math.exp %194 : vector<8x128xf32>
    %cst_31 = arith.constant 1.000000e+00 : f32
    %196 = vector.broadcast %cst_31 : f32 to vector<8x128xf32>
    %197 = arith.addf %196, %195 : vector<8x128xf32>
    %198 = arith.divf %196, %197 : vector<8x128xf32>
    %199 = vector.extract_strided_slice %180 {offsets = [0, 256], sizes = [8, 128], strides = [1, 1]} : vector<8x384xf32> to vector<8x128xf32>
    %200 = vector.extract_strided_slice %182 {offsets = [0, 256], sizes = [8, 128], strides = [1, 1]} : vector<8x384xf32> to vector<8x128xf32>
    %201 = arith.addf %200, %10 : vector<8x128xf32>
    %202 = arith.mulf %190, %201 : vector<8x128xf32>
    %203 = arith.addf %199, %202 : vector<8x128xf32>
    %204 = math.tanh %203 : vector<8x128xf32>
    %cst_32 = arith.constant 1.000000e+00 : f32
    %205 = vector.broadcast %cst_32 : f32 to vector<8x128xf32>
    %206 = arith.subf %205, %198 : vector<8x128xf32>
    %207 = arith.mulf %206, %204 : vector<8x128xf32>
    %208 = arith.mulf %198, %176 : vector<8x128xf32>
    %209 = arith.addf %207, %208 : vector<8x128xf32>
    %210 = vector.extract_strided_slice %0 {offsets = [0, 6], sizes = [8, 1], strides = [1, 1]} : vector<8x8xf32> to vector<8x1xf32>
    %211 = vector.broadcast %210 : vector<8x1xf32> to vector<8x384xf32>
    %212 = arith.mulf %211, %4 : vector<8x384xf32>
    %213 = arith.addf %212, %7 : vector<8x384xf32>
    %214 = arith.truncf %209 : vector<8x128xf32> to vector<8x128xbf16>
    %cst_33 = arith.constant dense<0.000000e+00> : vector<8x384xf32>
    %215 = tpu.matmul %214, %1, %cst_33 {dimension_numbers = #tpu.dot_dimension_numbers<[1], [0], [0], [1], [0, 0, 1, 1], [], []>} : vector<8x128xbf16>, vector<128x384xbf16>, vector<8x384xf32> -> vector<8x384xf32>
    %216 = vector.extract_strided_slice %213 {offsets = [0, 0], sizes = [8, 128], strides = [1, 1]} : vector<8x384xf32> to vector<8x128xf32>
    %217 = vector.extract_strided_slice %215 {offsets = [0, 0], sizes = [8, 128], strides = [1, 1]} : vector<8x384xf32> to vector<8x128xf32>
    %218 = arith.addf %216, %217 : vector<8x128xf32>
    %219 = arith.negf %218 : vector<8x128xf32>
    %220 = math.exp %219 : vector<8x128xf32>
    %cst_34 = arith.constant 1.000000e+00 : f32
    %221 = vector.broadcast %cst_34 : f32 to vector<8x128xf32>
    %222 = arith.addf %221, %220 : vector<8x128xf32>
    %223 = arith.divf %221, %222 : vector<8x128xf32>
    %224 = vector.extract_strided_slice %213 {offsets = [0, 128], sizes = [8, 128], strides = [1, 1]} : vector<8x384xf32> to vector<8x128xf32>
    %225 = vector.extract_strided_slice %215 {offsets = [0, 128], sizes = [8, 128], strides = [1, 1]} : vector<8x384xf32> to vector<8x128xf32>
    %226 = arith.addf %224, %225 : vector<8x128xf32>
    %227 = arith.negf %226 : vector<8x128xf32>
    %228 = math.exp %227 : vector<8x128xf32>
    %cst_35 = arith.constant 1.000000e+00 : f32
    %229 = vector.broadcast %cst_35 : f32 to vector<8x128xf32>
    %230 = arith.addf %229, %228 : vector<8x128xf32>
    %231 = arith.divf %229, %230 : vector<8x128xf32>
    %232 = vector.extract_strided_slice %213 {offsets = [0, 256], sizes = [8, 128], strides = [1, 1]} : vector<8x384xf32> to vector<8x128xf32>
    %233 = vector.extract_strided_slice %215 {offsets = [0, 256], sizes = [8, 128], strides = [1, 1]} : vector<8x384xf32> to vector<8x128xf32>
    %234 = arith.addf %233, %10 : vector<8x128xf32>
    %235 = arith.mulf %223, %234 : vector<8x128xf32>
    %236 = arith.addf %232, %235 : vector<8x128xf32>
    %237 = math.tanh %236 : vector<8x128xf32>
    %cst_36 = arith.constant 1.000000e+00 : f32
    %238 = vector.broadcast %cst_36 : f32 to vector<8x128xf32>
    %239 = arith.subf %238, %231 : vector<8x128xf32>
    %240 = arith.mulf %239, %237 : vector<8x128xf32>
    %241 = arith.mulf %231, %209 : vector<8x128xf32>
    %242 = arith.addf %240, %241 : vector<8x128xf32>
    %243 = vector.extract_strided_slice %0 {offsets = [0, 7], sizes = [8, 1], strides = [1, 1]} : vector<8x8xf32> to vector<8x1xf32>
    %244 = vector.broadcast %243 : vector<8x1xf32> to vector<8x384xf32>
    %245 = arith.mulf %244, %4 : vector<8x384xf32>
    %246 = arith.addf %245, %7 : vector<8x384xf32>
    %247 = arith.truncf %242 : vector<8x128xf32> to vector<8x128xbf16>
    %cst_37 = arith.constant dense<0.000000e+00> : vector<8x384xf32>
    %248 = tpu.matmul %247, %1, %cst_37 {dimension_numbers = #tpu.dot_dimension_numbers<[1], [0], [0], [1], [0, 0, 1, 1], [], []>} : vector<8x128xbf16>, vector<128x384xbf16>, vector<8x384xf32> -> vector<8x384xf32>
    %249 = vector.extract_strided_slice %246 {offsets = [0, 0], sizes = [8, 128], strides = [1, 1]} : vector<8x384xf32> to vector<8x128xf32>
    %250 = vector.extract_strided_slice %248 {offsets = [0, 0], sizes = [8, 128], strides = [1, 1]} : vector<8x384xf32> to vector<8x128xf32>
    %251 = arith.addf %249, %250 : vector<8x128xf32>
    %252 = arith.negf %251 : vector<8x128xf32>
    %253 = math.exp %252 : vector<8x128xf32>
    %cst_38 = arith.constant 1.000000e+00 : f32
    %254 = vector.broadcast %cst_38 : f32 to vector<8x128xf32>
    %255 = arith.addf %254, %253 : vector<8x128xf32>
    %256 = arith.divf %254, %255 : vector<8x128xf32>
    %257 = vector.extract_strided_slice %246 {offsets = [0, 128], sizes = [8, 128], strides = [1, 1]} : vector<8x384xf32> to vector<8x128xf32>
    %258 = vector.extract_strided_slice %248 {offsets = [0, 128], sizes = [8, 128], strides = [1, 1]} : vector<8x384xf32> to vector<8x128xf32>
    %259 = arith.addf %257, %258 : vector<8x128xf32>
    %260 = arith.negf %259 : vector<8x128xf32>
    %261 = math.exp %260 : vector<8x128xf32>
    %cst_39 = arith.constant 1.000000e+00 : f32
    %262 = vector.broadcast %cst_39 : f32 to vector<8x128xf32>
    %263 = arith.addf %262, %261 : vector<8x128xf32>
    %264 = arith.divf %262, %263 : vector<8x128xf32>
    %265 = vector.extract_strided_slice %246 {offsets = [0, 256], sizes = [8, 128], strides = [1, 1]} : vector<8x384xf32> to vector<8x128xf32>
    %266 = vector.extract_strided_slice %248 {offsets = [0, 256], sizes = [8, 128], strides = [1, 1]} : vector<8x384xf32> to vector<8x128xf32>
    %267 = arith.addf %266, %10 : vector<8x128xf32>
    %268 = arith.mulf %256, %267 : vector<8x128xf32>
    %269 = arith.addf %265, %268 : vector<8x128xf32>
    %270 = math.tanh %269 : vector<8x128xf32>
    %cst_40 = arith.constant 1.000000e+00 : f32
    %271 = vector.broadcast %cst_40 : f32 to vector<8x128xf32>
    %272 = arith.subf %271, %264 : vector<8x128xf32>
    %273 = arith.mulf %272, %270 : vector<8x128xf32>
    %274 = arith.mulf %264, %242 : vector<8x128xf32>
    %275 = arith.addf %273, %274 : vector<8x128xf32>
    %c0_41 = arith.constant 0 : index
    %c0_42 = arith.constant 0 : index
    %276 = vector.load %arg6[%c0_41, %c0_42] : memref<8x128xf32, #tpu.memory_space<vmem>>, vector<8x128xf32>
    tpu.vector_store %arg6[%c0_41, %c0_42], %275 {strides = array<i32>} : memref<8x128xf32, #tpu.memory_space<vmem>>, vector<8x128xf32>,
    return
  }
  func.func @transform_0(%arg0: i32) -> (i32, i32) {
    %c0_i32 = arith.constant 0 : i32
    %c0_i32_0 = arith.constant 0 : i32
    return %arg0, %c0_i32 : i32, i32
  }
  func.func @transform_1(%arg0: i32) -> (i32, i32) {
    %c0_i32 = arith.constant 0 : i32
    %c0_i32_0 = arith.constant 0 : i32
    %c0_i32_1 = arith.constant 0 : i32
    return %c0_i32, %c0_i32_0 : i32, i32
  }
  func.func @transform_2(%arg0: i32) -> (i32, i32) {
    %c0_i32 = arith.constant 0 : i32
    %c0_i32_0 = arith.constant 0 : i32
    %c0_i32_1 = arith.constant 0 : i32
    return %c0_i32, %c0_i32_0 : i32, i32
  }
  func.func @transform_3(%arg0: i32) -> (i32, i32) {
    %c0_i32 = arith.constant 0 : i32
    %c0_i32_0 = arith.constant 0 : i32
    %c0_i32_1 = arith.constant 0 : i32
    return %c0_i32, %c0_i32_0 : i32, i32
  }
  func.func @transform_4(%arg0: i32) -> (i32, i32) {
    %c0_i32 = arith.constant 0 : i32
    %c0_i32_0 = arith.constant 0 : i32
    %c0_i32_1 = arith.constant 0 : i32
    return %c0_i32, %c0_i32_0 : i32, i32
  }
  func.func @transform_5(%arg0: i32) -> (i32, i32) {
    %c0_i32 = arith.constant 0 : i32
    %c0_i32_0 = arith.constant 0 : i32
    return %arg0, %c0_i32 : i32, i32
  }
}

</mosaic_0001>

<llo_original>
// kernel: tpu_custom_call.1
$region0: #{tpu_custom_call.1}
  #allocation0 [shape = 'u32[]', space=smem, size = 0x4, offset = 0x4, fixed_abs, tag = 'smem constant byte address 0x4 - core index']
  #allocation1 [shape = 'u32[144,128]{1,0:T(1,128)}', space=vmem, size = 0x12000, scoped, tag = 'internal scratch']
  %s0 = inlined_call_operand.hbm [shape: f32[8,8], index: 0, kind: input, shape index: {}]
  %s1 = inlined_call_operand.hbm [shape: f32[1,384], index: 1, kind: input, shape index: {}]
  %s2 = inlined_call_operand.hbm [shape: bf16[128,384], index: 2, kind: input, shape index: {}]
  %s3 = inlined_call_operand.vmem [shape: f32[1,384], index: 3, kind: input, shape index: {}]
  %s4 = inlined_call_operand.vmem [shape: f32[1,128], index: 4, kind: input, shape index: {}]
  %s5 = inlined_call_operand.hbm [shape: f32[8,128], index: 5, kind: output, shape index: {}]
  %s6 = sld [smem:[#allocation0]]
  $region42: #{tpu_custom_call.1} parent=0
    _
  %s8 = ssub.s32 1, %s6
  %s9 = scalar_select 0, %s8, %s6
  $region1: #{tpu_custom_call.1} parent=0
    #allocation2 [shape = 'u8[4096]{0}', space=vmem, size = 0x1000, scoped, tag = 'input window, operand 0, single buffered']
    #allocation3 [shape = 's32[1]{0}', space=sflag, size = 0x4, scoped, tag = 'scoped memory for tpu_custom_call.1']
    #allocation4 [shape = 's32[1]{0}', space=sflag, size = 0x4, scoped, tag = 'scoped memory for tpu_custom_call.1']
    #allocation5 [shape = 'u8[1536]{0}', space=vmem, size = 0x800, scoped, tag = 'input window, operand 1, single buffered']
    #allocation6 [shape = 's32[1]{0}', space=sflag, size = 0x4, scoped, tag = 'scoped memory for tpu_custom_call.1']
    #allocation7 [shape = 'u8[98304]{0}', space=vmem, size = 0x18000, scoped, tag = 'input window, operand 2, single buffered']
    #allocation8 [shape = 'u8[4096]{0}', space=vmem, size = 0x1000, scoped, tag = 'output window, operand 0, single buffered']
    %10 = vsyncpa [#allocation3], 0
    %11 = vsyncpa [#allocation6], 0
    %12 = vsyncpa [#allocation4], 0
    // Predicated region
    $region2: #{tpu_custom_call.1} parent=1 // pred_check
      _
    $region3: #{tpu_custom_call.1} parent=1 // pred_check_branch
      %14 = sbr.rel (0) target = $region5
    $region4: #{tpu_custom_call.1} parent=1 // pred_region
      %s16 = ssub.s32 128, 128
      %17 = vsyncadd [#allocation3], %s16
      %s19 = sshll.u32 [#allocation2], 4
      %s20 = int_to_ptr.vmem [resolvable:$true] %s19
      %22 = dma.hbm_to_vmem [thread:$0]  %s0, 128, %s20, [#allocation3]
    $region5: #{tpu_custom_call.1} parent=1 // pred_fallthru
      _
    // Predicated region
    $region6: #{tpu_custom_call.1} parent=1 // pred_check
      _
    $region7: #{tpu_custom_call.1} parent=1 // pred_check_branch
      %24 = sbr.rel (0) target = $region9
    $region8: #{tpu_custom_call.1} parent=1 // pred_region
      %s26 = ssub.s32 48, 48
      %27 = vsyncadd [#allocation6], %s26
      %s29 = sshll.u32 [#allocation5], 4
      %s30 = int_to_ptr.vmem [resolvable:$true] %s29
      %32 = dma.hbm_to_vmem [thread:$0]  %s1, 48, %s30, [#allocation6]
    $region9: #{tpu_custom_call.1} parent=1 // pred_fallthru
      _
    // Predicated region
    $region10: #{tpu_custom_call.1} parent=1 // pred_check
      _
    $region11: #{tpu_custom_call.1} parent=1 // pred_check_branch
      %34 = sbr.rel (0) target = $region13
    $region12: #{tpu_custom_call.1} parent=1 // pred_region
      %s36 = ssub.s32 3072, 3072
      %37 = vsyncadd [#allocation6], %s36
      %s38 = sshll.u32 [#allocation7], 4
      %s39 = int_to_ptr.vmem [resolvable:$true] %s38
      %44 = dma.hbm_to_vmem [thread:$0]  %s2, 3072, %s39, [#allocation6], 192, 192, 12
    $region13: #{tpu_custom_call.1} parent=1 // pred_fallthru
      _
    // Predicated region
    $region14: #{tpu_custom_call.1} parent=1 // pred_check
      _
    $region15: #{tpu_custom_call.1} parent=1 // pred_check_branch
      %46 = sbr.rel (0) target = $region17
    $region16: #{tpu_custom_call.1} parent=1 // pred_region
      _
    $region17: #{tpu_custom_call.1} parent=1 // pred_fallthru
      _
    // Predicated region
    $region18: #{tpu_custom_call.1} parent=1 // pred_check
      _
    $region19: #{tpu_custom_call.1} parent=1 // pred_check_branch
      %48 = sbr.rel (0) target = $region21
    $region20: #{tpu_custom_call.1} parent=1 // pred_region
      _
    $region21: #{tpu_custom_call.1} parent=1 // pred_fallthru
      _
    // Predicated region
    $region22: #{tpu_custom_call.1} parent=1 // pred_check
      _
    $region23: #{tpu_custom_call.1} parent=1 // pred_check_branch
      %50 = sbr.rel (0) target = $region25
    $region24: #{tpu_custom_call.1} parent=1 // pred_region
      %51 = dma.done [#allocation3], 128
    $region25: #{tpu_custom_call.1} parent=1 // pred_fallthru
      _
    // Predicated region
    $region26: #{tpu_custom_call.1} parent=1 // pred_check
      _
    $region27: #{tpu_custom_call.1} parent=1 // pred_check_branch
      %53 = sbr.rel (0) target = $region29
    $region28: #{tpu_custom_call.1} parent=1 // pred_region
      %54 = dma.done [#allocation6], 48
    $region29: #{tpu_custom_call.1} parent=1 // pred_fallthru
      _
    // Predicated region
    $region30: #{tpu_custom_call.1} parent=1 // pred_check
      _
    $region31: #{tpu_custom_call.1} parent=1 // pred_check_branch
      %56 = sbr.rel (0) target = $region33
    $region32: #{tpu_custom_call.1} parent=1 // pred_region
      %57 = dma.done [#allocation6], 3072
    $region33: #{tpu_custom_call.1} parent=1 // pred_fallthru
      _
    %v59 = vld [vmem:[#allocation2] sm:$0xff]
    %v60 = vld [vmem:[#allocation7] sm:$0xff]
    %v61 = vld [vmem:[#allocation7 + $0x8] sm:$0xf]
    %v62 = vld [vmem:[#allocation7 + $0xc] sm:$0xff]
    %v63 = vld [vmem:[#allocation7 + $0x14] sm:$0xf]
    %v64 = vld [vmem:[#allocation7 + $0x18] sm:$0xff]
    %v65 = vld [vmem:[#allocation7 + $0x20] sm:$0xf]
    %v66 = vld [vmem:[#allocation7 + $0x24] sm:$0xff]
    %v67 = vld [vmem:[#allocation7 + $0x2c] sm:$0xf]
    %v68 = vld [vmem:[#allocation7 + $0x30] sm:$0xff]
    %v69 = vld [vmem:[#allocation7 + $0x38] sm:$0xf]
    %v70 = vld [vmem:[#allocation7 + $0x3c] sm:$0xff]
    %v71 = vld [vmem:[#allocation7 + $0x44] sm:$0xf]
    %v72 = vld [vmem:[#allocation7 + $0x48] sm:$0xff]
    %v73 = vld [vmem:[#allocation7 + $0x50] sm:$0xf]
    %v74 = vld [vmem:[#allocation7 + $0x54] sm:$0xff]
    %v75 = vld [vmem:[#allocation7 + $0x5c] sm:$0xf]
    %v76 = vld [vmem:[#allocation7 + $0x60] sm:$0xff]
    %v77 = vld [vmem:[#allocation7 + $0x68] sm:$0xf]
    %v78 = vld [vmem:[#allocation7 + $0x6c] sm:$0xff]
    %v79 = vld [vmem:[#allocation7 + $0x74] sm:$0xf]
    %v80 = vld [vmem:[#allocation7 + $0x78] sm:$0xff]
    %v81 = vld [vmem:[#allocation7 + $0x80] sm:$0xf]
    %v82 = vld [vmem:[#allocation7 + $0x84] sm:$0xff]
    %v83 = vld [vmem:[#allocation7 + $0x8c] sm:$0xf]
    %v84 = vld [vmem:[#allocation7 + $0x90] sm:$0xff]
    %v85 = vld [vmem:[#allocation7 + $0x98] sm:$0xf]
    %v86 = vld [vmem:[#allocation7 + $0x9c] sm:$0xff]
    %v87 = vld [vmem:[#allocation7 + $0xa4] sm:$0xf]
    %v88 = vld [vmem:[#allocation7 + $0xa8] sm:$0xff]
    %v89 = vld [vmem:[#allocation7 + $0xb0] sm:$0xf]
    %v90 = vld [vmem:[#allocation7 + $0xb4] sm:$0xff]
    %v91 = vld [vmem:[#allocation7 + $0xbc] sm:$0xf]
    %v92 = vld [vmem:[#allocation5] sm:$0x7]
    %v94 = vlaneseq
    %v95 = vshrl.u32 %v94, 7
    %v96 = vsub.s32 0, %v95
    %v97 = vrot.slane %v92, %v96
    %v98 = vlaneseq
    %v99 = vshrl.u32 %v98, 7
    %v100 = vsub.s32 1, %v99
    %v101 = vrot.slane %v92, %v100
    %v102 = vlaneseq
    %v103 = vshrl.u32 %v102, 7
    %v104 = vsub.s32 2, %v103
    %v105 = vrot.slane %v92, %v104
    %v109 = vld [vmem:[%s3] sm:$0x7]
    %v111 = vlaneseq
    %v112 = vshrl.u32 %v111, 7
    %v113 = vsub.s32 0, %v112
    %v114 = vrot.slane %v109, %v113
    %v115 = vlaneseq
    %v116 = vshrl.u32 %v115, 7
    %v117 = vsub.s32 1, %v116
    %v118 = vrot.slane %v109, %v117
    %v119 = vlaneseq
    %v120 = vshrl.u32 %v119, 7
    %v121 = vsub.s32 2, %v120
    %v122 = vrot.slane %v109, %v121
    %v126 = vld [vmem:[%s4] sm:$0x1]
    %v128 = vlaneseq
    %v129 = vshrl.u32 %v128, 7
    %v130 = vsub.s32 0, %v129
    %v131 = vrot.slane %v126, %v130
    %134 = vset.pattern.permute.xlu0 0
    %135 = vperm.xlu0 %134, %v59
    %v136 = vpop.permute.xlu0 %135
    %v138 = vmul.f32 %v136, %v97
    %v139 = vmul.f32 %v136, %v101
    %v140 = vmul.f32 %v136, %v105
    %v141 = vadd.f32 %v138, %v114
    %v142 = vadd.f32 %v139, %v118
    %v143 = vadd.f32 %v140, %v122
    %v176 = vunpack.c.l.b16 %v60
    %v177 = vunpack.c.h.b16 %v60
    %v178 = vunpack.c.l.b16 %v61
    %v179 = vunpack.c.l.b16 %v62
    %v180 = vunpack.c.h.b16 %v62
    %v181 = vunpack.c.l.b16 %v63
    %v182 = vunpack.c.l.b16 %v64
    %v183 = vunpack.c.h.b16 %v64
    %v184 = vunpack.c.l.b16 %v65
    %v185 = vunpack.c.l.b16 %v66
    %v186 = vunpack.c.h.b16 %v66
    %v187 = vunpack.c.l.b16 %v67
    %v188 = vunpack.c.l.b16 %v68
    %v189 = vunpack.c.h.b16 %v68
    %v190 = vunpack.c.l.b16 %v69
    %v191 = vunpack.c.l.b16 %v70
    %v192 = vunpack.c.h.b16 %v70
    %v193 = vunpack.c.l.b16 %v71
    %v194 = vunpack.c.l.b16 %v72
    %v195 = vunpack.c.h.b16 %v72
    %v196 = vunpack.c.l.b16 %v73
    %v197 = vunpack.c.l.b16 %v74
    %v198 = vunpack.c.h.b16 %v74
    %v199 = vunpack.c.l.b16 %v75
    %v200 = vunpack.c.l.b16 %v76
    %v201 = vunpack.c.h.b16 %v76
    %v202 = vunpack.c.l.b16 %v77
    %v203 = vunpack.c.l.b16 %v78
    %v204 = vunpack.c.h.b16 %v78
    %v205 = vunpack.c.l.b16 %v79
    %v206 = vunpack.c.l.b16 %v80
    %v207 = vunpack.c.h.b16 %v80
    %v208 = vunpack.c.l.b16 %v81
    %v209 = vunpack.c.l.b16 %v82
    %v210 = vunpack.c.h.b16 %v82
    %v211 = vunpack.c.l.b16 %v83
    %v212 = vunpack.c.l.b16 %v84
    %v213 = vunpack.c.h.b16 %v84
    %v214 = vunpack.c.l.b16 %v85
    %v215 = vunpack.c.l.b16 %v86
    %v216 = vunpack.c.h.b16 %v86
    %v217 = vunpack.c.l.b16 %v87
    %v218 = vunpack.c.l.b16 %v88
    %v219 = vunpack.c.h.b16 %v88
    %v220 = vunpack.c.l.b16 %v89
    %v221 = vunpack.c.l.b16 %v90
    %v222 = vunpack.c.h.b16 %v90
    %v223 = vunpack.c.l.b16 %v91
    %v224 = vpack.c.b16 %v179, %v176
    %v225 = vpack.c.b16 %v180, %v177
    %v226 = vpack.c.b16 %v181, %v178
    %v227 = vpack.c.b16 %v185, %v182
    %v228 = vpack.c.b16 %v186, %v183
    %v229 = vpack.c.b16 %v187, %v184
    %v230 = vpack.c.b16 %v191, %v188
    %v231 = vpack.c.b16 %v192, %v189
    %v232 = vpack.c.b16 %v193, %v190
    %v233 = vpack.c.b16 %v197, %v194
    %v234 = vpack.c.b16 %v198, %v195
    %v235 = vpack.c.b16 %v199, %v196
    %v236 = vpack.c.b16 %v203, %v200
    %v237 = vpack.c.b16 %v204, %v201
    %v238 = vpack.c.b16 %v205, %v202
    %v239 = vpack.c.b16 %v209, %v206
    %v240 = vpack.c.b16 %v210, %v207
    %v241 = vpack.c.b16 %v211, %v208
    %v242 = vpack.c.b16 %v215, %v212
    %v243 = vpack.c.b16 %v216, %v213
    %v244 = vpack.c.b16 %v217, %v214
    %v245 = vpack.c.b16 %v221, %v218
    %v246 = vpack.c.b16 %v222, %v219
    %v247 = vpack.c.b16 %v223, %v220
    %272 = vmatprep.subr.bf16.mxu0 %v246
    %273 = vmatpush1.bf16.msra.mxu0 %v245
    %274 = vmatprep.subr.bf16.mxu0 %v243
    %275 = vmatpush1.bf16.msra.mxu0 %v242
    %276 = vmatprep.subr.bf16.mxu0 %v240
    %277 = vmatpush1.bf16.msra.mxu0 %v239
    %278 = vmatprep.subr.bf16.mxu0 %v237
    %279 = vmatpush1.bf16.msra.mxu0 %v236
    %280 = vmatprep.subr.bf16.mxu0 %v234
    %281 = vmatpush1.bf16.msra.mxu0 %v233
    %282 = vmatprep.subr.bf16.mxu0 %v231
    %283 = vmatpush1.bf16.msra.mxu0 %v230
    %284 = vmatprep.subr.bf16.mxu0 %v228
    %285 = vmatpush1.bf16.msra.mxu0 %v227
    %286 = vmatprep.subr.bf16.mxu0 %v225
    %287 = vmatpush1.bf16.msra.mxu0 %v224
    %288 = vmatprep.subr.bf16.mxu0 0
    %289 = vmatpush2.bf16.msra.mxu0 0
    %290 = vmatprep.subr.bf16.mxu0 0
    %291 = vmatpush2.bf16.msra.mxu0 0
    %292 = vmatprep.subr.bf16.mxu0 0
    %293 = vmatpush2.bf16.msra.mxu0 0
    %294 = vmatprep.subr.bf16.mxu0 0
    %295 = vmatpush2.bf16.msra.mxu0 0
    %296 = vmatprep.subr.bf16.mxu0 0
    %297 = vmatpush2.bf16.msra.mxu0 0
    %298 = vmatprep.subr.bf16.mxu0 0
    %299 = vmatpush2.bf16.msra.mxu0 0
    %300 = vmatprep.subr.bf16.mxu0 0
    %301 = vmatpush2.bf16.msra.mxu0 0
    %302 = vmatprep.subr.bf16.mxu0 0
    %303 = vmatpush2.bf16.msra.mxu0 0
    %304 = vmatprep.mubr.bf16.mxu0 0
    %305 = vmatmul.mubr.bf16.gmra.mxu0 0
    %v306 = vpop.f32.mrf.mxu0
    %v307 = vadd.f32 0.0, %v306
    %v308 = vpop.f32.mrf.mxu0
    %v309 = vadd.f32 0.0, %v308
    %v310 = vpop.f32.mrf.mxu0
    %v311 = vpop.f32.mrf.mxu0
    %312 = vdwg.mxu0
    %313 = vmatprep.subr.bf16.mxu0 0
    %314 = vmatpush1.bf16.msra.mxu0 %v247
    %315 = vmatprep.subr.bf16.mxu0 0
    %316 = vmatpush1.bf16.msra.mxu0 %v244
    %317 = vmatprep.subr.bf16.mxu0 0
    %318 = vmatpush1.bf16.msra.mxu0 %v241
    %319 = vmatprep.subr.bf16.mxu0 0
    %320 = vmatpush1.bf16.msra.mxu0 %v238
    %321 = vmatprep.subr.bf16.mxu0 0
    %322 = vmatpush1.bf16.msra.mxu0 %v235
    %323 = vmatprep.subr.bf16.mxu0 0
    %324 = vmatpush1.bf16.msra.mxu0 %v232
    %325 = vmatprep.subr.bf16.mxu0 0
    %326 = vmatpush1.bf16.msra.mxu0 %v229
    %327 = vmatprep.subr.bf16.mxu0 0
    %328 = vmatpush1.bf16.msra.mxu0 %v226
    %329 = vmatprep.subr.bf16.mxu0 0
    %330 = vmatpush2.bf16.msra.mxu0 0
    %331 = vmatprep.subr.bf16.mxu0 0
    %332 = vmatpush2.bf16.msra.mxu0 0
    %333 = vmatprep.subr.bf16.mxu0 0
    %334 = vmatpush2.bf16.msra.mxu0 0
    %335 = vmatprep.subr.bf16.mxu0 0
    %336 = vmatpush2.bf16.msra.mxu0 0
    %337 = vmatprep.subr.bf16.mxu0 0
    %338 = vmatpush2.bf16.msra.mxu0 0
    %339 = vmatprep.subr.bf16.mxu0 0
    %340 = vmatpush2.bf16.msra.mxu0 0
    %341 = vmatprep.subr.bf16.mxu0 0
    %342 = vmatpush2.bf16.msra.mxu0 0
    %343 = vmatprep.subr.bf16.mxu0 0
    %344 = vmatpush2.bf16.msra.mxu0 0
    %345 = vmatprep.mubr.bf16.mxu0 0
    %346 = vmatmul.mubr.bf16.gmra.mxu0 0
    %v347 = vpop.f32.mrf.mxu0
    %v348 = vadd.f32 0.0, %v347
    %v349 = vpop.f32.mrf.mxu0
    %v350 = vpop.f32.mrf.mxu0
    %v351 = vpop.f32.mrf.mxu0
    %352 = vdwg.mxu0
    %v353 = vadd.f32 %v141, %v307
    %v354 = vxor.u32 %v353, 2147483648
    %v355 = vmul.f32 %v354, 1.442695
    %v356 = vpow.pop %v355
    %v357 = vadd.f32 %v356, 1.0
    %v358 = vrcp.pop %v357
    %v359 = vmul.f32 1.0, %v358
    %v360 = vadd.f32 %v142, %v309
    %v361 = vxor.u32 %v360, 2147483648
    %v362 = vmul.f32 %v361, 1.442695
    %v363 = vpow.pop %v362
    %v364 = vadd.f32 %v363, 1.0
    %v365 = vrcp.pop %v364
    %v366 = vmul.f32 1.0, %v365
    %v367 = vadd.f32 %v348, %v131
    %v368 = vmul.f32 %v359, %v367
    %v369 = vadd.f32 %v143, %v368
    %v370 = vtanh.pop %v369
    %v371 = vsub.f32 1.0, %v366
    %v372 = vmul.f32 %v371, %v370
    %v373 = vmul.f32 %v366, 0.0
    %v374 = vadd.f32 %v372, %v373
    %375 = vset.pattern.permute.xlu0 1
    %376 = vperm.xlu0 %375, %v59
    %v377 = vpop.permute.xlu0 %376
    %v379 = vmul.f32 %v377, %v97
    %v380 = vmul.f32 %v377, %v101
    %v381 = vmul.f32 %v377, %v105
    %v382 = vadd.f32 %v379, %v114
    %v383 = vadd.f32 %v380, %v118
    %v384 = vadd.f32 %v381, %v122
    %v385 = vpack.c.bf16 %v374, %v374
    %386 = vmatprep.subr.bf16.mxu0 %v246
    %387 = vmatpush1.bf16.msra.mxu0 %v245
    %388 = vmatprep.subr.bf16.mxu0 %v243
    %389 = vmatpush1.bf16.msra.mxu0 %v242
    %390 = vmatprep.subr.bf16.mxu0 %v240
    %391 = vmatpush1.bf16.msra.mxu0 %v239
    %392 = vmatprep.subr.bf16.mxu0 %v237
    %393 = vmatpush1.bf16.msra.mxu0 %v236
    %394 = vmatprep.subr.bf16.mxu0 %v234
    %395 = vmatpush1.bf16.msra.mxu0 %v233
    %396 = vmatprep.subr.bf16.mxu0 %v231
    %397 = vmatpush1.bf16.msra.mxu0 %v230
    %398 = vmatprep.subr.bf16.mxu0 %v228
    %399 = vmatpush1.bf16.msra.mxu0 %v227
    %400 = vmatprep.subr.bf16.mxu0 %v225
    %401 = vmatpush1.bf16.msra.mxu0 %v224
    %402 = vmatprep.subr.bf16.mxu0 0
    %403 = vmatpush2.bf16.msra.mxu0 0
    %404 = vmatprep.subr.bf16.mxu0 0
    %405 = vmatpush2.bf16.msra.mxu0 0
    %406 = vmatprep.subr.bf16.mxu0 0
    %407 = vmatpush2.bf16.msra.mxu0 0
    %408 = vmatprep.subr.bf16.mxu0 0
    %409 = vmatpush2.bf16.msra.mxu0 0
    %410 = vmatprep.subr.bf16.mxu0 0
    %411 = vmatpush2.bf16.msra.mxu0 0
    %412 = vmatprep.subr.bf16.mxu0 0
    %413 = vmatpush2.bf16.msra.mxu0 0
    %414 = vmatprep.subr.bf16.mxu0 0
    %415 = vmatpush2.bf16.msra.mxu0 0
    %416 = vmatprep.subr.bf16.mxu0 0
    %417 = vmatpush2.bf16.msra.mxu0 0
    %418 = vmatprep.mubr.bf16.mxu0 0
    %419 = vmatmul.mubr.bf16.gmra.mxu0 %v385
    %v420 = vpop.f32.mrf.mxu0
    %v421 = vadd.f32 0.0, %v420
    %v422 = vpop.f32.mrf.mxu0
    %v423 = vadd.f32 0.0, %v422
    %v424 = vpop.f32.mrf.mxu0
    %v425 = vpop.f32.mrf.mxu0
    %426 = vdwg.mxu0
    %427 = vmatprep.subr.bf16.mxu0 0
    %428 = vmatpush1.bf16.msra.mxu0 %v247
    %429 = vmatprep.subr.bf16.mxu0 0
    %430 = vmatpush1.bf16.msra.mxu0 %v244
    %431 = vmatprep.subr.bf16.mxu0 0
    %432 = vmatpush1.bf16.msra.mxu0 %v241
    %433 = vmatprep.subr.bf16.mxu0 0
    %434 = vmatpush1.bf16.msra.mxu0 %v238
    %435 = vmatprep.subr.bf16.mxu0 0
    %436 = vmatpush1.bf16.msra.mxu0 %v235
    %437 = vmatprep.subr.bf16.mxu0 0
    %438 = vmatpush1.bf16.msra.mxu0 %v232
    %439 = vmatprep.subr.bf16.mxu0 0
    %440 = vmatpush1.bf16.msra.mxu0 %v229
    %441 = vmatprep.subr.bf16.mxu0 0
    %442 = vmatpush1.bf16.msra.mxu0 %v226
    %443 = vmatprep.subr.bf16.mxu0 0
    %444 = vmatpush2.bf16.msra.mxu0 0
    %445 = vmatprep.subr.bf16.mxu0 0
    %446 = vmatpush2.bf16.msra.mxu0 0
    %447 = vmatprep.subr.bf16.mxu0 0
    %448 = vmatpush2.bf16.msra.mxu0 0
    %449 = vmatprep.subr.bf16.mxu0 0
    %450 = vmatpush2.bf16.msra.mxu0 0
    %451 = vmatprep.subr.bf16.mxu0 0
    %452 = vmatpush2.bf16.msra.mxu0 0
    %453 = vmatprep.subr.bf16.mxu0 0
    %454 = vmatpush2.bf16.msra.mxu0 0
    %455 = vmatprep.subr.bf16.mxu0 0
    %456 = vmatpush2.bf16.msra.mxu0 0
    %457 = vmatprep.subr.bf16.mxu0 0
    %458 = vmatpush2.bf16.msra.mxu0 0
    %459 = vmatprep.mubr.bf16.mxu0 0
    %460 = vmatmul.mubr.bf16.gmra.mxu0 %v385
    %v461 = vpop.f32.mrf.mxu0
    %v462 = vadd.f32 0.0, %v461
    %v463 = vpop.f32.mrf.mxu0
    %v464 = vpop.f32.mrf.mxu0
    %v465 = vpop.f32.mrf.mxu0
    %466 = vdwg.mxu0
    %v467 = vadd.f32 %v382, %v421
    %v468 = vxor.u32 %v467, 2147483648
    %v469 = vmul.f32 %v468, 1.442695
    %v470 = vpow.pop %v469
    %v471 = vadd.f32 %v470, 1.0
    %v472 = vrcp.pop %v471
    %v473 = vmul.f32 1.0, %v472
    %v474 = vadd.f32 %v383, %v423
    %v475 = vxor.u32 %v474, 2147483648
    %v476 = vmul.f32 %v475, 1.442695
    %v477 = vpow.pop %v476
    %v478 = vadd.f32 %v477, 1.0
    %v479 = vrcp.pop %v478
    %v480 = vmul.f32 1.0, %v479
    %v481 = vadd.f32 %v462, %v131
    %v482 = vmul.f32 %v473, %v481
    %v483 = vadd.f32 %v384, %v482
    %v484 = vtanh.pop %v483
    %v485 = vsub.f32 1.0, %v480
    %v486 = vmul.f32 %v485, %v484
    %v487 = vmul.f32 %v480, %v374
    %v488 = vadd.f32 %v486, %v487
    %489 = vset.pattern.permute.xlu0 2
    %490 = vperm.xlu0 %489, %v59
    %v491 = vpop.permute.xlu0 %490
    %v493 = vmul.f32 %v491, %v97
    %v494 = vmul.f32 %v491, %v101
    %v495 = vmul.f32 %v491, %v105
    %v496 = vadd.f32 %v493, %v114
    %v497 = vadd.f32 %v494, %v118
    %v498 = vadd.f32 %v495, %v122
    %v499 = vpack.c.bf16 %v488, %v488
    %500 = vmatprep.subr.bf16.mxu0 %v246
    %501 = vmatpush1.bf16.msra.mxu0 %v245
    %502 = vmatprep.subr.bf16.mxu0 %v243
    %503 = vmatpush1.bf16.msra.mxu0 %v242
    %504 = vmatprep.subr.bf16.mxu0 %v240
    %505 = vmatpush1.bf16.msra.mxu0 %v239
    %506 = vmatprep.subr.bf16.mxu0 %v237
    %507 = vmatpush1.bf16.msra.mxu0 %v236
    %508 = vmatprep.subr.bf16.mxu0 %v234
    %509 = vmatpush1.bf16.msra.mxu0 %v233
    %510 = vmatprep.subr.bf16.mxu0 %v231
    %511 = vmatpush1.bf16.msra.mxu0 %v230
    %512 = vmatprep.subr.bf16.mxu0 %v228
    %513 = vmatpush1.bf16.msra.mxu0 %v227
    %514 = vmatprep.subr.bf16.mxu0 %v225
    %515 = vmatpush1.bf16.msra.mxu0 %v224
    %516 = vmatprep.subr.bf16.mxu0 0
    %517 = vmatpush2.bf16.msra.mxu0 0
    %518 = vmatprep.subr.bf16.mxu0 0
    %519 = vmatpush2.bf16.msra.mxu0 0
    %520 = vmatprep.subr.bf16.mxu0 0
    %521 = vmatpush2.bf16.msra.mxu0 0
    %522 = vmatprep.subr.bf16.mxu0 0
    %523 = vmatpush2.bf16.msra.mxu0 0
    %524 = vmatprep.subr.bf16.mxu0 0
    %525 = vmatpush2.bf16.msra.mxu0 0
    %526 = vmatprep.subr.bf16.mxu0 0
    %527 = vmatpush2.bf16.msra.mxu0 0
    %528 = vmatprep.subr.bf16.mxu0 0
    %529 = vmatpush2.bf16.msra.mxu0 0
    %530 = vmatprep.subr.bf16.mxu0 0
    %531 = vmatpush2.bf16.msra.mxu0 0
    %532 = vmatprep.mubr.bf16.mxu0 0
    %533 = vmatmul.mubr.bf16.gmra.mxu0 %v499
    %v534 = vpop.f32.mrf.mxu0
    %v535 = vadd.f32 0.0, %v534
    %v536 = vpop.f32.mrf.mxu0
    %v537 = vadd.f32 0.0, %v536
    %v538 = vpop.f32.mrf.mxu0
    %v539 = vpop.f32.mrf.mxu0
    %540 = vdwg.mxu0
    %541 = vmatprep.subr.bf16.mxu0 0
    %542 = vmatpush1.bf16.msra.mxu0 %v247
    %543 = vmatprep.subr.bf16.mxu0 0
    %544 = vmatpush1.bf16.msra.mxu0 %v244
    %545 = vmatprep.subr.bf16.mxu0 0
    %546 = vmatpush1.bf16.msra.mxu0 %v241
    %547 = vmatprep.subr.bf16.mxu0 0
    %548 = vmatpush1.bf16.msra.mxu0 %v238
    %549 = vmatprep.subr.bf16.mxu0 0
    %550 = vmatpush1.bf16.msra.mxu0 %v235
    %551 = vmatprep.subr.bf16.mxu0 0
    %552 = vmatpush1.bf16.msra.mxu0 %v232
    %553 = vmatprep.subr.bf16.mxu0 0
    %554 = vmatpush1.bf16.msra.mxu0 %v229
    %555 = vmatprep.subr.bf16.mxu0 0
    %556 = vmatpush1.bf16.msra.mxu0 %v226
    %557 = vmatprep.subr.bf16.mxu0 0
    %558 = vmatpush2.bf16.msra.mxu0 0
    %559 = vmatprep.subr.bf16.mxu0 0
    %560 = vmatpush2.bf16.msra.mxu0 0
    %561 = vmatprep.subr.bf16.mxu0 0
    %562 = vmatpush2.bf16.msra.mxu0 0
    %563 = vmatprep.subr.bf16.mxu0 0
    %564 = vmatpush2.bf16.msra.mxu0 0
    %565 = vmatprep.subr.bf16.mxu0 0
    %566 = vmatpush2.bf16.msra.mxu0 0
    %567 = vmatprep.subr.bf16.mxu0 0
    %568 = vmatpush2.bf16.msra.mxu0 0
    %569 = vmatprep.subr.bf16.mxu0 0
    %570 = vmatpush2.bf16.msra.mxu0 0
    %571 = vmatprep.subr.bf16.mxu0 0
    %572 = vmatpush2.bf16.msra.mxu0 0
    %573 = vmatprep.mubr.bf16.mxu0 0
    %574 = vmatmul.mubr.bf16.gmra.mxu0 %v499
    %v575 = vpop.f32.mrf.mxu0
    %v576 = vadd.f32 0.0, %v575
    %v577 = vpop.f32.mrf.mxu0
    %v578 = vpop.f32.mrf.mxu0
    %v579 = vpop.f32.mrf.mxu0
    %580 = vdwg.mxu0
    %v581 = vadd.f32 %v496, %v535
    %v582 = vxor.u32 %v581, 2147483648
    %v583 = vmul.f32 %v582, 1.442695
    %v584 = vpow.pop %v583
    %v585 = vadd.f32 %v584, 1.0
    %v586 = vrcp.pop %v585
    %v587 = vmul.f32 1.0, %v586
    %v588 = vadd.f32 %v497, %v537
    %v589 = vxor.u32 %v588, 2147483648
    %v590 = vmul.f32 %v589, 1.442695
    %v591 = vpow.pop %v590
    %v592 = vadd.f32 %v591, 1.0
    %v593 = vrcp.pop %v592
    %v594 = vmul.f32 1.0, %v593
    %v595 = vadd.f32 %v576, %v131
    %v596 = vmul.f32 %v587, %v595
    %v597 = vadd.f32 %v498, %v596
    %v598 = vtanh.pop %v597
    %v599 = vsub.f32 1.0, %v594
    %v600 = vmul.f32 %v599, %v598
    %v601 = vmul.f32 %v594, %v488
    %v602 = vadd.f32 %v600, %v601
    %603 = vset.pattern.permute.xlu0 3
    %604 = vperm.xlu0 %603, %v59
    %v605 = vpop.permute.xlu0 %604
    %v607 = vmul.f32 %v605, %v97
    %v608 = vmul.f32 %v605, %v101
    %v609 = vmul.f32 %v605, %v105
    %v610 = vadd.f32 %v607, %v114
    %v611 = vadd.f32 %v608, %v118
    %v612 = vadd.f32 %v609, %v122
    %v613 = vpack.c.bf16 %v602, %v602
    %614 = vmatprep.subr.bf16.mxu0 %v246
    %615 = vmatpush1.bf16.msra.mxu0 %v245
    %616 = vmatprep.subr.bf16.mxu0 %v243
    %617 = vmatpush1.bf16.msra.mxu0 %v242
    %618 = vmatprep.subr.bf16.mxu0 %v240
    %619 = vmatpush1.bf16.msra.mxu0 %v239
    %620 = vmatprep.subr.bf16.mxu0 %v237
    %621 = vmatpush1.bf16.msra.mxu0 %v236
    %622 = vmatprep.subr.bf16.mxu0 %v234
    %623 = vmatpush1.bf16.msra.mxu0 %v233
    %624 = vmatprep.subr.bf16.mxu0 %v231
    %625 = vmatpush1.bf16.msra.mxu0 %v230
    %626 = vmatprep.subr.bf16.mxu0 %v228
    %627 = vmatpush1.bf16.msra.mxu0 %v227
    %628 = vmatprep.subr.bf16.mxu0 %v225
    %629 = vmatpush1.bf16.msra.mxu0 %v224
    %630 = vmatprep.subr.bf16.mxu0 0
    %631 = vmatpush2.bf16.msra.mxu0 0
    %632 = vmatprep.subr.bf16.mxu0 0
    %633 = vmatpush2.bf16.msra.mxu0 0
    %634 = vmatprep.subr.bf16.mxu0 0
    %635 = vmatpush2.bf16.msra.mxu0 0
    %636 = vmatprep.subr.bf16.mxu0 0
    %637 = vmatpush2.bf16.msra.mxu0 0
    %638 = vmatprep.subr.bf16.mxu0 0
    %639 = vmatpush2.bf16.msra.mxu0 0
    %640 = vmatprep.subr.bf16.mxu0 0
    %641 = vmatpush2.bf16.msra.mxu0 0
    %642 = vmatprep.subr.bf16.mxu0 0
    %643 = vmatpush2.bf16.msra.mxu0 0
    %644 = vmatprep.subr.bf16.mxu0 0
    %645 = vmatpush2.bf16.msra.mxu0 0
    %646 = vmatprep.mubr.bf16.mxu0 0
    %647 = vmatmul.mubr.bf16.gmra.mxu0 %v613
    %v648 = vpop.f32.mrf.mxu0
    %v649 = vadd.f32 0.0, %v648
    %v650 = vpop.f32.mrf.mxu0
    %v651 = vadd.f32 0.0, %v650
    %v652 = vpop.f32.mrf.mxu0
    %v653 = vpop.f32.mrf.mxu0
    %654 = vdwg.mxu0
    %655 = vmatprep.subr.bf16.mxu0 0
    %656 = vmatpush1.bf16.msra.mxu0 %v247
    %657 = vmatprep.subr.bf16.mxu0 0
    %658 = vmatpush1.bf16.msra.mxu0 %v244
    %659 = vmatprep.subr.bf16.mxu0 0
    %660 = vmatpush1.bf16.msra.mxu0 %v241
    %661 = vmatprep.subr.bf16.mxu0 0
    %662 = vmatpush1.bf16.msra.mxu0 %v238
    %663 = vmatprep.subr.bf16.mxu0 0
    %664 = vmatpush1.bf16.msra.mxu0 %v235
    %665 = vmatprep.subr.bf16.mxu0 0
    %666 = vmatpush1.bf16.msra.mxu0 %v232
    %667 = vmatprep.subr.bf16.mxu0 0
    %668 = vmatpush1.bf16.msra.mxu0 %v229
    %669 = vmatprep.subr.bf16.mxu0 0
    %670 = vmatpush1.bf16.msra.mxu0 %v226
    %671 = vmatprep.subr.bf16.mxu0 0
    %672 = vmatpush2.bf16.msra.mxu0 0
    %673 = vmatprep.subr.bf16.mxu0 0
    %674 = vmatpush2.bf16.msra.mxu0 0
    %675 = vmatprep.subr.bf16.mxu0 0
    %676 = vmatpush2.bf16.msra.mxu0 0
    %677 = vmatprep.subr.bf16.mxu0 0
    %678 = vmatpush2.bf16.msra.mxu0 0
    %679 = vmatprep.subr.bf16.mxu0 0
    %680 = vmatpush2.bf16.msra.mxu0 0
    %681 = vmatprep.subr.bf16.mxu0 0
    %682 = vmatpush2.bf16.msra.mxu0 0
    %683 = vmatprep.subr.bf16.mxu0 0
    %684 = vmatpush2.bf16.msra.mxu0 0
    %685 = vmatprep.subr.bf16.mxu0 0
    %686 = vmatpush2.bf16.msra.mxu0 0
    %687 = vmatprep.mubr.bf16.mxu0 0
    %688 = vmatmul.mubr.bf16.gmra.mxu0 %v613
    %v689 = vpop.f32.mrf.mxu0
    %v690 = vadd.f32 0.0, %v689
    %v691 = vpop.f32.mrf.mxu0
    %v692 = vpop.f32.mrf.mxu0
    %v693 = vpop.f32.mrf.mxu0
    %694 = vdwg.mxu0
    %v695 = vadd.f32 %v610, %v649
    %v696 = vxor.u32 %v695, 2147483648
    %v697 = vmul.f32 %v696, 1.442695
    %v698 = vpow.pop %v697
    %v699 = vadd.f32 %v698, 1.0
    %v700 = vrcp.pop %v699
    %v701 = vmul.f32 1.0, %v700
    %v702 = vadd.f32 %v611, %v651
    %v703 = vxor.u32 %v702, 2147483648
    %v704 = vmul.f32 %v703, 1.442695
    %v705 = vpow.pop %v704
    %v706 = vadd.f32 %v705, 1.0
    %v707 = vrcp.pop %v706
    %v708 = vmul.f32 1.0, %v707
    %v709 = vadd.f32 %v690, %v131
    %v710 = vmul.f32 %v701, %v709
    %v711 = vadd.f32 %v612, %v710
    %v712 = vtanh.pop %v711
    %v713 = vsub.f32 1.0, %v708
    %v714 = vmul.f32 %v713, %v712
    %v715 = vmul.f32 %v708, %v602
    %v716 = vadd.f32 %v714, %v715
    %717 = vset.pattern.permute.xlu0 4
    %718 = vperm.xlu0 %717, %v59
    %v719 = vpop.permute.xlu0 %718
    %v721 = vmul.f32 %v719, %v97
    %v722 = vmul.f32 %v719, %v101
    %v723 = vmul.f32 %v719, %v105
    %v724 = vadd.f32 %v721, %v114
    %v725 = vadd.f32 %v722, %v118
    %v726 = vadd.f32 %v723, %v122
    %v727 = vpack.c.bf16 %v716, %v716
    %728 = vmatprep.subr.bf16.mxu0 %v246
    %729 = vmatpush1.bf16.msra.mxu0 %v245
    %730 = vmatprep.subr.bf16.mxu0 %v243
    %731 = vmatpush1.bf16.msra.mxu0 %v242
    %732 = vmatprep.subr.bf16.mxu0 %v240
    %733 = vmatpush1.bf16.msra.mxu0 %v239
    %734 = vmatprep.subr.bf16.mxu0 %v237
    %735 = vmatpush1.bf16.msra.mxu0 %v236
    %736 = vmatprep.subr.bf16.mxu0 %v234
    %737 = vmatpush1.bf16.msra.mxu0 %v233
    %738 = vmatprep.subr.bf16.mxu0 %v231
    %739 = vmatpush1.bf16.msra.mxu0 %v230
    %740 = vmatprep.subr.bf16.mxu0 %v228
    %741 = vmatpush1.bf16.msra.mxu0 %v227
    %742 = vmatprep.subr.bf16.mxu0 %v225
    %743 = vmatpush1.bf16.msra.mxu0 %v224
    %744 = vmatprep.subr.bf16.mxu0 0
    %745 = vmatpush2.bf16.msra.mxu0 0
    %746 = vmatprep.subr.bf16.mxu0 0
    %747 = vmatpush2.bf16.msra.mxu0 0
    %748 = vmatprep.subr.bf16.mxu0 0
    %749 = vmatpush2.bf16.msra.mxu0 0
    %750 = vmatprep.subr.bf16.mxu0 0
    %751 = vmatpush2.bf16.msra.mxu0 0
    %752 = vmatprep.subr.bf16.mxu0 0
    %753 = vmatpush2.bf16.msra.mxu0 0
    %754 = vmatprep.subr.bf16.mxu0 0
    %755 = vmatpush2.bf16.msra.mxu0 0
    %756 = vmatprep.subr.bf16.mxu0 0
    %757 = vmatpush2.bf16.msra.mxu0 0
    %758 = vmatprep.subr.bf16.mxu0 0
    %759 = vmatpush2.bf16.msra.mxu0 0
    %760 = vmatprep.mubr.bf16.mxu0 0
    %761 = vmatmul.mubr.bf16.gmra.mxu0 %v727
    %v762 = vpop.f32.mrf.mxu0
    %v763 = vadd.f32 0.0, %v762
    %v764 = vpop.f32.mrf.mxu0
    %v765 = vadd.f32 0.0, %v764
    %v766 = vpop.f32.mrf.mxu0
    %v767 = vpop.f32.mrf.mxu0
    %768 = vdwg.mxu0
    %769 = vmatprep.subr.bf16.mxu0 0
    %770 = vmatpush1.bf16.msra.mxu0 %v247
    %771 = vmatprep.subr.bf16.mxu0 0
    %772 = vmatpush1.bf16.msra.mxu0 %v244
    %773 = vmatprep.subr.bf16.mxu0 0
    %774 = vmatpush1.bf16.msra.mxu0 %v241
    %775 = vmatprep.subr.bf16.mxu0 0
    %776 = vmatpush1.bf16.msra.mxu0 %v238
    %777 = vmatprep.subr.bf16.mxu0 0
    %778 = vmatpush1.bf16.msra.mxu0 %v235
    %779 = vmatprep.subr.bf16.mxu0 0
    %780 = vmatpush1.bf16.msra.mxu0 %v232
    %781 = vmatprep.subr.bf16.mxu0 0
    %782 = vmatpush1.bf16.msra.mxu0 %v229
    %783 = vmatprep.subr.bf16.mxu0 0
    %784 = vmatpush1.bf16.msra.mxu0 %v226
    %785 = vmatprep.subr.bf16.mxu0 0
    %786 = vmatpush2.bf16.msra.mxu0 0
    %787 = vmatprep.subr.bf16.mxu0 0
    %788 = vmatpush2.bf16.msra.mxu0 0
    %789 = vmatprep.subr.bf16.mxu0 0
    %790 = vmatpush2.bf16.msra.mxu0 0
    %791 = vmatprep.subr.bf16.mxu0 0
    %792 = vmatpush2.bf16.msra.mxu0 0
    %793 = vmatprep.subr.bf16.mxu0 0
    %794 = vmatpush2.bf16.msra.mxu0 0
    %795 = vmatprep.subr.bf16.mxu0 0
    %796 = vmatpush2.bf16.msra.mxu0 0
    %797 = vmatprep.subr.bf16.mxu0 0
    %798 = vmatpush2.bf16.msra.mxu0 0
    %799 = vmatprep.subr.bf16.mxu0 0
    %800 = vmatpush2.bf16.msra.mxu0 0
    %801 = vmatprep.mubr.bf16.mxu0 0
    %802 = vmatmul.mubr.bf16.gmra.mxu0 %v727
    %v803 = vpop.f32.mrf.mxu0
    %v804 = vadd.f32 0.0, %v803
    %v805 = vpop.f32.mrf.mxu0
    %v806 = vpop.f32.mrf.mxu0
    %v807 = vpop.f32.mrf.mxu0
    %808 = vdwg.mxu0
    %v809 = vadd.f32 %v724, %v763
    %v810 = vxor.u32 %v809, 2147483648
    %v811 = vmul.f32 %v810, 1.442695
    %v812 = vpow.pop %v811
    %v813 = vadd.f32 %v812, 1.0
    %v814 = vrcp.pop %v813
    %v815 = vmul.f32 1.0, %v814
    %v816 = vadd.f32 %v725, %v765
    %v817 = vxor.u32 %v816, 2147483648
    %v818 = vmul.f32 %v817, 1.442695
    %v819 = vpow.pop %v818
    %v820 = vadd.f32 %v819, 1.0
    %v821 = vrcp.pop %v820
    %v822 = vmul.f32 1.0, %v821
    %v823 = vadd.f32 %v804, %v131
    %v824 = vmul.f32 %v815, %v823
    %v825 = vadd.f32 %v726, %v824
    %v826 = vtanh.pop %v825
    %v827 = vsub.f32 1.0, %v822
    %v828 = vmul.f32 %v827, %v826
    %v829 = vmul.f32 %v822, %v716
    %v830 = vadd.f32 %v828, %v829
    %831 = vset.pattern.permute.xlu0 5
    %832 = vperm.xlu0 %831, %v59
    %v833 = vpop.permute.xlu0 %832
    %v835 = vmul.f32 %v833, %v97
    %v836 = vmul.f32 %v833, %v101
    %v837 = vmul.f32 %v833, %v105
    %v838 = vadd.f32 %v835, %v114
    %v839 = vadd.f32 %v836, %v118
    %v840 = vadd.f32 %v837, %v122
    %v841 = vpack.c.bf16 %v830, %v830
    %842 = vmatprep.subr.bf16.mxu0 %v246
    %843 = vmatpush1.bf16.msra.mxu0 %v245
    %844 = vmatprep.subr.bf16.mxu0 %v243
    %845 = vmatpush1.bf16.msra.mxu0 %v242
    %846 = vmatprep.subr.bf16.mxu0 %v240
    %847 = vmatpush1.bf16.msra.mxu0 %v239
    %848 = vmatprep.subr.bf16.mxu0 %v237
    %849 = vmatpush1.bf16.msra.mxu0 %v236
    %850 = vmatprep.subr.bf16.mxu0 %v234
    %851 = vmatpush1.bf16.msra.mxu0 %v233
    %852 = vmatprep.subr.bf16.mxu0 %v231
    %853 = vmatpush1.bf16.msra.mxu0 %v230
    %854 = vmatprep.subr.bf16.mxu0 %v228
    %855 = vmatpush1.bf16.msra.mxu0 %v227
    %856 = vmatprep.subr.bf16.mxu0 %v225
    %857 = vmatpush1.bf16.msra.mxu0 %v224
    %858 = vmatprep.subr.bf16.mxu0 0
    %859 = vmatpush2.bf16.msra.mxu0 0
    %860 = vmatprep.subr.bf16.mxu0 0
    %861 = vmatpush2.bf16.msra.mxu0 0
    %862 = vmatprep.subr.bf16.mxu0 0
    %863 = vmatpush2.bf16.msra.mxu0 0
    %864 = vmatprep.subr.bf16.mxu0 0
    %865 = vmatpush2.bf16.msra.mxu0 0
    %866 = vmatprep.subr.bf16.mxu0 0
    %867 = vmatpush2.bf16.msra.mxu0 0
    %868 = vmatprep.subr.bf16.mxu0 0
    %869 = vmatpush2.bf16.msra.mxu0 0
    %870 = vmatprep.subr.bf16.mxu0 0
    %871 = vmatpush2.bf16.msra.mxu0 0
    %872 = vmatprep.subr.bf16.mxu0 0
    %873 = vmatpush2.bf16.msra.mxu0 0
    %874 = vmatprep.mubr.bf16.mxu0 0
    %875 = vmatmul.mubr.bf16.gmra.mxu0 %v841
    %v876 = vpop.f32.mrf.mxu0
    %v877 = vadd.f32 0.0, %v876
    %v878 = vpop.f32.mrf.mxu0
    %v879 = vadd.f32 0.0, %v878
    %v880 = vpop.f32.mrf.mxu0
    %v881 = vpop.f32.mrf.mxu0
    %882 = vdwg.mxu0
    %883 = vmatprep.subr.bf16.mxu0 0
    %884 = vmatpush1.bf16.msra.mxu0 %v247
    %885 = vmatprep.subr.bf16.mxu0 0
    %886 = vmatpush1.bf16.msra.mxu0 %v244
    %887 = vmatprep.subr.bf16.mxu0 0
    %888 = vmatpush1.bf16.msra.mxu0 %v241
    %889 = vmatprep.subr.bf16.mxu0 0
    %890 = vmatpush1.bf16.msra.mxu0 %v238
    %891 = vmatprep.subr.bf16.mxu0 0
    %892 = vmatpush1.bf16.msra.mxu0 %v235
    %893 = vmatprep.subr.bf16.mxu0 0
    %894 = vmatpush1.bf16.msra.mxu0 %v232
    %895 = vmatprep.subr.bf16.mxu0 0
    %896 = vmatpush1.bf16.msra.mxu0 %v229
    %897 = vmatprep.subr.bf16.mxu0 0
    %898 = vmatpush1.bf16.msra.mxu0 %v226
    %899 = vmatprep.subr.bf16.mxu0 0
    %900 = vmatpush2.bf16.msra.mxu0 0
    %901 = vmatprep.subr.bf16.mxu0 0
    %902 = vmatpush2.bf16.msra.mxu0 0
    %903 = vmatprep.subr.bf16.mxu0 0
    %904 = vmatpush2.bf16.msra.mxu0 0
    %905 = vmatprep.subr.bf16.mxu0 0
    %906 = vmatpush2.bf16.msra.mxu0 0
    %907 = vmatprep.subr.bf16.mxu0 0
    %908 = vmatpush2.bf16.msra.mxu0 0
    %909 = vmatprep.subr.bf16.mxu0 0
    %910 = vmatpush2.bf16.msra.mxu0 0
    %911 = vmatprep.subr.bf16.mxu0 0
    %912 = vmatpush2.bf16.msra.mxu0 0
    %913 = vmatprep.subr.bf16.mxu0 0
    %914 = vmatpush2.bf16.msra.mxu0 0
    %915 = vmatprep.mubr.bf16.mxu0 0
    %916 = vmatmul.mubr.bf16.gmra.mxu0 %v841
    %v917 = vpop.f32.mrf.mxu0
    %v918 = vadd.f32 0.0, %v917
    %v919 = vpop.f32.mrf.mxu0
    %v920 = vpop.f32.mrf.mxu0
    %v921 = vpop.f32.mrf.mxu0
    %922 = vdwg.mxu0
    %v923 = vadd.f32 %v838, %v877
    %v924 = vxor.u32 %v923, 2147483648
    %v925 = vmul.f32 %v924, 1.442695
    %v926 = vpow.pop %v925
    %v927 = vadd.f32 %v926, 1.0
    %v928 = vrcp.pop %v927
    %v929 = vmul.f32 1.0, %v928
    %v930 = vadd.f32 %v839, %v879
    %v931 = vxor.u32 %v930, 2147483648
    %v932 = vmul.f32 %v931, 1.442695
    %v933 = vpow.pop %v932
    %v934 = vadd.f32 %v933, 1.0
    %v935 = vrcp.pop %v934
    %v936 = vmul.f32 1.0, %v935
    %v937 = vadd.f32 %v918, %v131
    %v938 = vmul.f32 %v929, %v937
    %v939 = vadd.f32 %v840, %v938
    %v940 = vtanh.pop %v939
    %v941 = vsub.f32 1.0, %v936
    %v942 = vmul.f32 %v941, %v940
    %v943 = vmul.f32 %v936, %v830
    %v944 = vadd.f32 %v942, %v943
    %945 = vset.pattern.permute.xlu0 6
    %946 = vperm.xlu0 %945, %v59
    %v947 = vpop.permute.xlu0 %946
    %v949 = vmul.f32 %v947, %v97
    %v950 = vmul.f32 %v947, %v101
    %v951 = vmul.f32 %v947, %v105
    %v952 = vadd.f32 %v949, %v114
    %v953 = vadd.f32 %v950, %v118
    %v954 = vadd.f32 %v951, %v122
    %v955 = vpack.c.bf16 %v944, %v944
    %956 = vmatprep.subr.bf16.mxu0 %v246
    %957 = vmatpush1.bf16.msra.mxu0 %v245
    %958 = vmatprep.subr.bf16.mxu0 %v243
    %959 = vmatpush1.bf16.msra.mxu0 %v242
    %960 = vmatprep.subr.bf16.mxu0 %v240
    %961 = vmatpush1.bf16.msra.mxu0 %v239
    %962 = vmatprep.subr.bf16.mxu0 %v237
    %963 = vmatpush1.bf16.msra.mxu0 %v236
    %964 = vmatprep.subr.bf16.mxu0 %v234
    %965 = vmatpush1.bf16.msra.mxu0 %v233
    %966 = vmatprep.subr.bf16.mxu0 %v231
    %967 = vmatpush1.bf16.msra.mxu0 %v230
    %968 = vmatprep.subr.bf16.mxu0 %v228
    %969 = vmatpush1.bf16.msra.mxu0 %v227
    %970 = vmatprep.subr.bf16.mxu0 %v225
    %971 = vmatpush1.bf16.msra.mxu0 %v224
    %972 = vmatprep.subr.bf16.mxu0 0
    %973 = vmatpush2.bf16.msra.mxu0 0
    %974 = vmatprep.subr.bf16.mxu0 0
    %975 = vmatpush2.bf16.msra.mxu0 0
    %976 = vmatprep.subr.bf16.mxu0 0
    %977 = vmatpush2.bf16.msra.mxu0 0
    %978 = vmatprep.subr.bf16.mxu0 0
    %979 = vmatpush2.bf16.msra.mxu0 0
    %980 = vmatprep.subr.bf16.mxu0 0
    %981 = vmatpush2.bf16.msra.mxu0 0
    %982 = vmatprep.subr.bf16.mxu0 0
    %983 = vmatpush2.bf16.msra.mxu0 0
    %984 = vmatprep.subr.bf16.mxu0 0
    %985 = vmatpush2.bf16.msra.mxu0 0
    %986 = vmatprep.subr.bf16.mxu0 0
    %987 = vmatpush2.bf16.msra.mxu0 0
    %988 = vmatprep.mubr.bf16.mxu0 0
    %989 = vmatmul.mubr.bf16.gmra.mxu0 %v955
    %v990 = vpop.f32.mrf.mxu0
    %v991 = vadd.f32 0.0, %v990
    %v992 = vpop.f32.mrf.mxu0
    %v993 = vadd.f32 0.0, %v992
    %v994 = vpop.f32.mrf.mxu0
    %v995 = vpop.f32.mrf.mxu0
    %996 = vdwg.mxu0
    %997 = vmatprep.subr.bf16.mxu0 0
    %998 = vmatpush1.bf16.msra.mxu0 %v247
    %999 = vmatprep.subr.bf16.mxu0 0
    %1000 = vmatpush1.bf16.msra.mxu0 %v244
    %1001 = vmatprep.subr.bf16.mxu0 0
    %1002 = vmatpush1.bf16.msra.mxu0 %v241
    %1003 = vmatprep.subr.bf16.mxu0 0
    %1004 = vmatpush1.bf16.msra.mxu0 %v238
    %1005 = vmatprep.subr.bf16.mxu0 0
    %1006 = vmatpush1.bf16.msra.mxu0 %v235
    %1007 = vmatprep.subr.bf16.mxu0 0
    %1008 = vmatpush1.bf16.msra.mxu0 %v232
    %1009 = vmatprep.subr.bf16.mxu0 0
    %1010 = vmatpush1.bf16.msra.mxu0 %v229
    %1011 = vmatprep.subr.bf16.mxu0 0
    %1012 = vmatpush1.bf16.msra.mxu0 %v226
    %1013 = vmatprep.subr.bf16.mxu0 0
    %1014 = vmatpush2.bf16.msra.mxu0 0
    %1015 = vmatprep.subr.bf16.mxu0 0
    %1016 = vmatpush2.bf16.msra.mxu0 0
    %1017 = vmatprep.subr.bf16.mxu0 0
    %1018 = vmatpush2.bf16.msra.mxu0 0
    %1019 = vmatprep.subr.bf16.mxu0 0
    %1020 = vmatpush2.bf16.msra.mxu0 0
    %1021 = vmatprep.subr.bf16.mxu0 0
    %1022 = vmatpush2.bf16.msra.mxu0 0
    %1023 = vmatprep.subr.bf16.mxu0 0
    %1024 = vmatpush2.bf16.msra.mxu0 0
    %1025 = vmatprep.subr.bf16.mxu0 0
    %1026 = vmatpush2.bf16.msra.mxu0 0
    %1027 = vmatprep.subr.bf16.mxu0 0
    %1028 = vmatpush2.bf16.msra.mxu0 0
    %1029 = vmatprep.mubr.bf16.mxu0 0
    %1030 = vmatmul.mubr.bf16.gmra.mxu0 %v955
    %v1031 = vpop.f32.mrf.mxu0
    %v1032 = vadd.f32 0.0, %v1031
    %v1033 = vpop.f32.mrf.mxu0
    %v1034 = vpop.f32.mrf.mxu0
    %v1035 = vpop.f32.mrf.mxu0
    %1036 = vdwg.mxu0
    %v1037 = vadd.f32 %v952, %v991
    %v1038 = vxor.u32 %v1037, 2147483648
    %v1039 = vmul.f32 %v1038, 1.442695
    %v1040 = vpow.pop %v1039
    %v1041 = vadd.f32 %v1040, 1.0
    %v1042 = vrcp.pop %v1041
    %v1043 = vmul.f32 1.0, %v1042
    %v1044 = vadd.f32 %v953, %v993
    %v1045 = vxor.u32 %v1044, 2147483648
    %v1046 = vmul.f32 %v1045, 1.442695
    %v1047 = vpow.pop %v1046
    %v1048 = vadd.f32 %v1047, 1.0
    %v1049 = vrcp.pop %v1048
    %v1050 = vmul.f32 1.0, %v1049
    %v1051 = vadd.f32 %v1032, %v131
    %v1052 = vmul.f32 %v1043, %v1051
    %v1053 = vadd.f32 %v954, %v1052
    %v1054 = vtanh.pop %v1053
    %v1055 = vsub.f32 1.0, %v1050
    %v1056 = vmul.f32 %v1055, %v1054
    %v1057 = vmul.f32 %v1050, %v944
    %v1058 = vadd.f32 %v1056, %v1057
    %1059 = vset.pattern.permute.xlu0 7
    %1060 = vperm.xlu0 %1059, %v59
    %v1061 = vpop.permute.xlu0 %1060
    %v1063 = vmul.f32 %v1061, %v97
    %v1064 = vmul.f32 %v1061, %v101
    %v1065 = vmul.f32 %v1061, %v105
    %v1066 = vadd.f32 %v1063, %v114
    %v1067 = vadd.f32 %v1064, %v118
    %v1068 = vadd.f32 %v1065, %v122
    %v1069 = vpack.c.bf16 %v1058, %v1058
    %1070 = vmatprep.subr.bf16.mxu0 %v246
    %1071 = vmatpush1.bf16.msra.mxu0 %v245
    %1072 = vmatprep.subr.bf16.mxu0 %v243
    %1073 = vmatpush1.bf16.msra.mxu0 %v242
    %1074 = vmatprep.subr.bf16.mxu0 %v240
    %1075 = vmatpush1.bf16.msra.mxu0 %v239
    %1076 = vmatprep.subr.bf16.mxu0 %v237
    %1077 = vmatpush1.bf16.msra.mxu0 %v236
    %1078 = vmatprep.subr.bf16.mxu0 %v234
    %1079 = vmatpush1.bf16.msra.mxu0 %v233
    %1080 = vmatprep.subr.bf16.mxu0 %v231
    %1081 = vmatpush1.bf16.msra.mxu0 %v230
    %1082 = vmatprep.subr.bf16.mxu0 %v228
    %1083 = vmatpush1.bf16.msra.mxu0 %v227
    %1084 = vmatprep.subr.bf16.mxu0 %v225
    %1085 = vmatpush1.bf16.msra.mxu0 %v224
    %1086 = vmatprep.subr.bf16.mxu0 0
    %1087 = vmatpush2.bf16.msra.mxu0 0
    %1088 = vmatprep.subr.bf16.mxu0 0
    %1089 = vmatpush2.bf16.msra.mxu0 0
    %1090 = vmatprep.subr.bf16.mxu0 0
    %1091 = vmatpush2.bf16.msra.mxu0 0
    %1092 = vmatprep.subr.bf16.mxu0 0
    %1093 = vmatpush2.bf16.msra.mxu0 0
    %1094 = vmatprep.subr.bf16.mxu0 0
    %1095 = vmatpush2.bf16.msra.mxu0 0
    %1096 = vmatprep.subr.bf16.mxu0 0
    %1097 = vmatpush2.bf16.msra.mxu0 0
    %1098 = vmatprep.subr.bf16.mxu0 0
    %1099 = vmatpush2.bf16.msra.mxu0 0
    %1100 = vmatprep.subr.bf16.mxu0 0
    %1101 = vmatpush2.bf16.msra.mxu0 0
    %1102 = vmatprep.mubr.bf16.mxu0 0
    %1103 = vmatmul.mubr.bf16.gmra.mxu0 %v1069
    %v1104 = vpop.f32.mrf.mxu0
    %v1105 = vadd.f32 0.0, %v1104
    %v1106 = vpop.f32.mrf.mxu0
    %v1107 = vadd.f32 0.0, %v1106
    %v1108 = vpop.f32.mrf.mxu0
    %v1109 = vpop.f32.mrf.mxu0
    %1110 = vdwg.mxu0
    %1111 = vmatprep.subr.bf16.mxu0 0
    %1112 = vmatpush1.bf16.msra.mxu0 %v247
    %1113 = vmatprep.subr.bf16.mxu0 0
    %1114 = vmatpush1.bf16.msra.mxu0 %v244
    %1115 = vmatprep.subr.bf16.mxu0 0
    %1116 = vmatpush1.bf16.msra.mxu0 %v241
    %1117 = vmatprep.subr.bf16.mxu0 0
    %1118 = vmatpush1.bf16.msra.mxu0 %v238
    %1119 = vmatprep.subr.bf16.mxu0 0
    %1120 = vmatpush1.bf16.msra.mxu0 %v235
    %1121 = vmatprep.subr.bf16.mxu0 0
    %1122 = vmatpush1.bf16.msra.mxu0 %v232
    %1123 = vmatprep.subr.bf16.mxu0 0
    %1124 = vmatpush1.bf16.msra.mxu0 %v229
    %1125 = vmatprep.subr.bf16.mxu0 0
    %1126 = vmatpush1.bf16.msra.mxu0 %v226
    %1127 = vmatprep.subr.bf16.mxu0 0
    %1128 = vmatpush2.bf16.msra.mxu0 0
    %1129 = vmatprep.subr.bf16.mxu0 0
    %1130 = vmatpush2.bf16.msra.mxu0 0
    %1131 = vmatprep.subr.bf16.mxu0 0
    %1132 = vmatpush2.bf16.msra.mxu0 0
    %1133 = vmatprep.subr.bf16.mxu0 0
    %1134 = vmatpush2.bf16.msra.mxu0 0
    %1135 = vmatprep.subr.bf16.mxu0 0
    %1136 = vmatpush2.bf16.msra.mxu0 0
    %1137 = vmatprep.subr.bf16.mxu0 0
    %1138 = vmatpush2.bf16.msra.mxu0 0
    %1139 = vmatprep.subr.bf16.mxu0 0
    %1140 = vmatpush2.bf16.msra.mxu0 0
    %1141 = vmatprep.subr.bf16.mxu0 0
    %1142 = vmatpush2.bf16.msra.mxu0 0
    %1143 = vmatprep.mubr.bf16.mxu0 0
    %1144 = vmatmul.mubr.bf16.gmra.mxu0 %v1069
    %v1145 = vpop.f32.mrf.mxu0
    %v1146 = vadd.f32 0.0, %v1145
    %v1147 = vpop.f32.mrf.mxu0
    %v1148 = vpop.f32.mrf.mxu0
    %v1149 = vpop.f32.mrf.mxu0
    %1150 = vdwg.mxu0
    %v1151 = vadd.f32 %v1066, %v1105
    %v1152 = vxor.u32 %v1151, 2147483648
    %v1153 = vmul.f32 %v1152, 1.442695
    %v1154 = vpow.pop %v1153
    %v1155 = vadd.f32 %v1154, 1.0
    %v1156 = vrcp.pop %v1155
    %v1157 = vmul.f32 1.0, %v1156
    %v1158 = vadd.f32 %v1067, %v1107
    %v1159 = vxor.u32 %v1158, 2147483648
    %v1160 = vmul.f32 %v1159, 1.442695
    %v1161 = vpow.pop %v1160
    %v1162 = vadd.f32 %v1161, 1.0
    %v1163 = vrcp.pop %v1162
    %v1164 = vmul.f32 1.0, %v1163
    %v1165 = vadd.f32 %v1146, %v131
    %v1166 = vmul.f32 %v1157, %v1165
    %v1167 = vadd.f32 %v1068, %v1166
    %v1168 = vtanh.pop %v1167
    %v1169 = vsub.f32 1.0, %v1164
    %v1170 = vmul.f32 %v1169, %v1168
    %v1171 = vmul.f32 %v1164, %v1058
    %v1172 = vadd.f32 %v1170, %v1171
    %1173 = vst [vmem:[#allocation8] sm:$0xff] %v1172
    // Predicated region
    $region34: #{tpu_custom_call.1} parent=1 // pred_check
      _
    $region35: #{tpu_custom_call.1} parent=1 // pred_check_branch
      %1175 = sbr.rel (0) target = $region37
    $region36: #{tpu_custom_call.1} parent=1 // pred_region
      %s1177 = ssub.s32 128, 128
      %1178 = vsyncadd [#allocation4], %s1177
      %s1180 = sshll.u32 [#allocation8], 4
      %s1181 = int_to_ptr.vmem [resolvable:$true] %s1180
      %1183 = dma.vmem_to_hbm [thread:$0]  %s1181, 128, %s5, [#allocation4]
    $region37: #{tpu_custom_call.1} parent=1 // pred_fallthru
      _
    // Predicated region
    $region38: #{tpu_custom_call.1} parent=1 // pred_check
      _
    $region39: #{tpu_custom_call.1} parent=1 // pred_check_branch
      %1185 = sbr.rel (0) target = $region41
    $region40: #{tpu_custom_call.1} parent=1 // pred_region
      %1186 = dma.done [#allocation4], 128
    $region41: #{tpu_custom_call.1} parent=1 // pred_fallthru
      _
    %1187 = vsyncpa [#allocation3], 1
    %1188 = vsyncpa [#allocation6], 1
    %1189 = vsyncpa [#allocation4], 1

// kernel: tpu_custom_call.1
$region0: #{tpu_custom_call.1}
  #allocation0 [shape = 'u32[]', space=smem, size = 0x4, offset = 0x4, fixed_abs, tag = 'smem constant byte address 0x4 - core index']
  #allocation1 [shape = 'u32[144,128]{1,0:T(1,128)}', space=vmem, size = 0x12000, scoped, tag = 'internal scratch']
  %s0 = inlined_call_operand.hbm [shape: f32[8,8], index: 0, kind: input, shape index: {}]
  %s1 = inlined_call_operand.hbm [shape: f32[1,384], index: 1, kind: input, shape index: {}]
  %s2 = inlined_call_operand.hbm [shape: bf16[128,384], index: 2, kind: input, shape index: {}]
  %s3 = inlined_call_operand.vmem [shape: f32[1,384], index: 3, kind: input, shape index: {}]
  %s4 = inlined_call_operand.vmem [shape: f32[1,128], index: 4, kind: input, shape index: {}]
  %s5 = inlined_call_operand.hbm [shape: f32[8,128], index: 5, kind: output, shape index: {}]
  %s6 = sld [smem:[#allocation0]]
  $region42: #{tpu_custom_call.1} parent=0
    _
  %s8 = ssub.s32 1, %s6
  %s9 = scalar_select 0, %s8, %s6
  $region1: #{tpu_custom_call.1} parent=0
    #allocation2 [shape = 'u8[4096]{0}', space=vmem, size = 0x1000, scoped, tag = 'input window, operand 0, single buffered']
    #allocation3 [shape = 's32[1]{0}', space=sflag, size = 0x4, scoped, tag = 'scoped memory for tpu_custom_call.1']
    #allocation4 [shape = 's32[1]{0}', space=sflag, size = 0x4, scoped, tag = 'scoped memory for tpu_custom_call.1']
    #allocation5 [shape = 'u8[1536]{0}', space=vmem, size = 0x800, scoped, tag = 'input window, operand 1, single buffered']
    #allocation6 [shape = 's32[1]{0}', space=sflag, size = 0x4, scoped, tag = 'scoped memory for tpu_custom_call.1']
    #allocation7 [shape = 'u8[98304]{0}', space=vmem, size = 0x18000, scoped, tag = 'input window, operand 2, single buffered']
    #allocation8 [shape = 'u8[4096]{0}', space=vmem, size = 0x1000, scoped, tag = 'output window, operand 0, single buffered']
    %10 = vsyncpa [#allocation3], 0
    %11 = vsyncpa [#allocation6], 0
    %12 = vsyncpa [#allocation4], 0
    // Predicated region
    $region2: #{tpu_custom_call.1} parent=1 // pred_check
      _
    $region3: #{tpu_custom_call.1} parent=1 // pred_check_branch
      %14 = sbr.rel (0) target = $region5
    $region4: #{tpu_custom_call.1} parent=1 // pred_region
      %s16 = ssub.s32 128, 128
      %17 = vsyncadd [#allocation3], %s16
      %s19 = sshll.u32 [#allocation2], 4
      %s20 = int_to_ptr.vmem [resolvable:$true] %s19
      %22 = dma.hbm_to_vmem [thread:$0]  %s0, 128, %s20, [#allocation3]
    $region5: #{tpu_custom_call.1} parent=1 // pred_fallthru
      _
    // Predicated region
    $region6: #{tpu_custom_call.1} parent=1 // pred_check
      _
    $region7: #{tpu_custom_call.1} parent=1 // pred_check_branch
      %24 = sbr.rel (0) target = $region9
    $region8: #{tpu_custom_call.1} parent=1 // pred_region
      %s26 = ssub.s32 48, 48
      %27 = vsyncadd [#allocation6], %s26
      %s29 = sshll.u32 [#allocation5], 4
      %s30 = int_to_ptr.vmem [resolvable:$true] %s29
      %32 = dma.hbm_to_vmem [thread:$0]  %s1, 48, %s30, [#allocation6]
    $region9: #{tpu_custom_call.1} parent=1 // pred_fallthru
      _
    // Predicated region
    $region10: #{tpu_custom_call.1} parent=1 // pred_check
      _
    $region11: #{tpu_custom_call.1} parent=1 // pred_check_branch
      %34 = sbr.rel (0) target = $region13
    $region12: #{tpu_custom_call.1} parent=1 // pred_region
      %s36 = ssub.s32 3072, 3072
      %37 = vsyncadd [#allocation6], %s36
      %s38 = sshll.u32 [#allocation7], 4
      %s39 = int_to_ptr.vmem [resolvable:$true] %s38
      %44 = dma.hbm_to_vmem [thread:$0]  %s2, 3072, %s39, [#allocation6], 192, 192, 12
    $region13: #{tpu_custom_call.1} parent=1 // pred_fallthru
      _
    // Predicated region
    $region14: #{tpu_custom_call.1} parent=1 // pred_check
      _
    $region15: #{tpu_custom_call.1} parent=1 // pred_check_branch
      %46 = sbr.rel (0) target = $region17
    $region16: #{tpu_custom_call.1} parent=1 // pred_region
      _
    $region17: #{tpu_custom_call.1} parent=1 // pred_fallthru
      _
    // Predicated region
    $region18: #{tpu_custom_call.1} parent=1 // pred_check
      _
    $region19: #{tpu_custom_call.1} parent=1 // pred_check_branch
      %48 = sbr.rel (0) target = $region21
    $region20: #{tpu_custom_call.1} parent=1 // pred_region
      _
    $region21: #{tpu_custom_call.1} parent=1 // pred_fallthru
      _
    // Predicated region
    $region22: #{tpu_custom_call.1} parent=1 // pred_check
      _
    $region23: #{tpu_custom_call.1} parent=1 // pred_check_branch
      %50 = sbr.rel (0) target = $region25
    $region24: #{tpu_custom_call.1} parent=1 // pred_region
      %51 = dma.done [#allocation3], 128
    $region25: #{tpu_custom_call.1} parent=1 // pred_fallthru
      _
    // Predicated region
    $region26: #{tpu_custom_call.1} parent=1 // pred_check
      _
    $region27: #{tpu_custom_call.1} parent=1 // pred_check_branch
      %53 = sbr.rel (0) target = $region29
    $region28: #{tpu_custom_call.1} parent=1 // pred_region
      %54 = dma.done [#allocation6], 48
    $region29: #{tpu_custom_call.1} parent=1 // pred_fallthru
      _
    // Predicated region
    $region30: #{tpu_custom_call.1} parent=1 // pred_check
      _
    $region31: #{tpu_custom_call.1} parent=1 // pred_check_branch
      %56 = sbr.rel (0) target = $region33
    $region32: #{tpu_custom_call.1} parent=1 // pred_region
      %57 = dma.done [#allocation6], 3072
    $region33: #{tpu_custom_call.1} parent=1 // pred_fallthru
      _
    %v59 = vld [vmem:[#allocation2] sm:$0xff]
    %v60 = vld [vmem:[#allocation7] sm:$0xff]
    %v61 = vld [vmem:[#allocation7 + $0x8] sm:$0xf]
    %v62 = vld [vmem:[#allocation7 + $0xc] sm:$0xff]
    %v63 = vld [vmem:[#allocation7 + $0x14] sm:$0xf]
    %v64 = vld [vmem:[#allocation7 + $0x18] sm:$0xff]
    %v65 = vld [vmem:[#allocation7 + $0x20] sm:$0xf]
    %v66 = vld [vmem:[#allocation7 + $0x24] sm:$0xff]
    %v67 = vld [vmem:[#allocation7 + $0x2c] sm:$0xf]
    %v68 = vld [vmem:[#allocation7 + $0x30] sm:$0xff]
    %v69 = vld [vmem:[#allocation7 + $0x38] sm:$0xf]
    %v70 = vld [vmem:[#allocation7 + $0x3c] sm:$0xff]
    %v71 = vld [vmem:[#allocation7 + $0x44] sm:$0xf]
    %v72 = vld [vmem:[#allocation7 + $0x48] sm:$0xff]
    %v73 = vld [vmem:[#allocation7 + $0x50] sm:$0xf]
    %v74 = vld [vmem:[#allocation7 + $0x54] sm:$0xff]
    %v75 = vld [vmem:[#allocation7 + $0x5c] sm:$0xf]
    %v76 = vld [vmem:[#allocation7 + $0x60] sm:$0xff]
    %v77 = vld [vmem:[#allocation7 + $0x68] sm:$0xf]
    %v78 = vld [vmem:[#allocation7 + $0x6c] sm:$0xff]
    %v79 = vld [vmem:[#allocation7 + $0x74] sm:$0xf]
    %v80 = vld [vmem:[#allocation7 + $0x78] sm:$0xff]
    %v81 = vld [vmem:[#allocation7 + $0x80] sm:$0xf]
    %v82 = vld [vmem:[#allocation7 + $0x84] sm:$0xff]
    %v83 = vld [vmem:[#allocation7 + $0x8c] sm:$0xf]
    %v84 = vld [vmem:[#allocation7 + $0x90] sm:$0xff]
    %v85 = vld [vmem:[#allocation7 + $0x98] sm:$0xf]
    %v86 = vld [vmem:[#allocation7 + $0x9c] sm:$0xff]
    %v87 = vld [vmem:[#allocation7 + $0xa4] sm:$0xf]
    %v88 = vld [vmem:[#allocation7 + $0xa8] sm:$0xff]
    %v89 = vld [vmem:[#allocation7 + $0xb0] sm:$0xf]
    %v90 = vld [vmem:[#allocation7 + $0xb4] sm:$0xff]
    %v91 = vld [vmem:[#allocation7 + $0xbc] sm:$0xf]
    %v92 = vld [vmem:[#allocation5] sm:$0x7]
    %v94 = vlaneseq
    %v95 = vshrl.u32 %v94, 7
    %v96 = vsub.s32 0, %v95
    %v97 = vrot.slane %v92, %v96
    %v98 = vlaneseq
    %v99 = vshrl.u32 %v98, 7
    %v100 = vsub.s32 1, %v99
    %v101 = vrot.slane %v92, %v100
    %v102 = vlaneseq
    %v103 = vshrl.u32 %v102, 7
    %v104 = vsub.s32 2, %v103
    %v105 = vrot.slane %v92, %v104
    %v109 = vld [vmem:[%s3] sm:$0x7]
    %v111 = vlaneseq
    %v112 = vshrl.u32 %v111, 7
    %v113 = vsub.s32 0, %v112
    %v114 = vrot.slane %v109, %v113
    %v115 = vlaneseq
    %v116 = vshrl.u32 %v115, 7
    %v117 = vsub.s32 1, %v116
    %v118 = vrot.slane %v109, %v117
    %v119 = vlaneseq
    %v120 = vshrl.u32 %v119, 7
    %v121 = vsub.s32 2, %v120
    %v122 = vrot.slane %v109, %v121
    %v126 = vld [vmem:[%s4] sm:$0x1]
    %v128 = vlaneseq
    %v129 = vshrl.u32 %v128, 7
    %v130 = vsub.s32 0, %v129
    %v131 = vrot.slane %v126, %v130
    %134 = vset.pattern.permute.xlu0 0
    %135 = vperm.xlu0 %134, %v59
    %v136 = vpop.permute.xlu0 %135
    %v138 = vmul.f32 %v136, %v97
    %v139 = vmul.f32 %v136, %v101
    %v140 = vmul.f32 %v136, %v105
    %v141 = vadd.f32 %v138, %v114
    %v142 = vadd.f32 %v139, %v118
    %v143 = vadd.f32 %v140, %v122
    %v176 = vunpack.c.l.b16 %v60
    %v177 = vunpack.c.h.b16 %v60
    %v178 = vunpack.c.l.b16 %v61
    %v179 = vunpack.c.l.b16 %v62
    %v180 = vunpack.c.h.b16 %v62
    %v181 = vunpack.c.l.b16 %v63
    %v182 = vunpack.c.l.b16 %v64
    %v183 = vunpack.c.h.b16 %v64
    %v184 = vunpack.c.l.b16 %v65
    %v185 = vunpack.c.l.b16 %v66
    %v186 = vunpack.c.h.b16 %v66
    %v187 = vunpack.c.l.b16 %v67
    %v188 = vunpack.c.l.b16 %v68
    %v189 = vunpack.c.h.b16 %v68
    %v190 = vunpack.c.l.b16 %v69
    %v191 = vunpack.c.l.b16 %v70
    %v192 = vunpack.c.h.b16 %v70
    %v193 = vunpack.c.l.b16 %v71
    %v194 = vunpack.c.l.b16 %v72
    %v195 = vunpack.c.h.b16 %v72
    %v196 = vunpack.c.l.b16 %v73
    %v197 = vunpack.c.l.b16 %v74
    %v198 = vunpack.c.h.b16 %v74
    %v199 = vunpack.c.l.b16 %v75
    %v200 = vunpack.c.l.b16 %v76
    %v201 = vunpack.c.h.b16 %v76
    %v202 = vunpack.c.l.b16 %v77
    %v203 = vunpack.c.l.b16 %v78
    %v204 = vunpack.c.h.b16 %v78
    %v205 = vunpack.c.l.b16 %v79
    %v206 = vunpack.c.l.b16 %v80
    %v207 = vunpack.c.h.b16 %v80
    %v208 = vunpack.c.l.b16 %v81
    %v209 = vunpack.c.l.b16 %v82
    %v210 = vunpack.c.h.b16 %v82
    %v211 = vunpack.c.l.b16 %v83
    %v212 = vunpack.c.l.b16 %v84
    %v213 = vunpack.c.h.b16 %v84
    %v214 = vunpack.c.l.b16 %v85
    %v215 = vunpack.c.l.b16 %v86
    %v216 = vunpack.c.h.b16 %v86
    %v217 = vunpack.c.l.b16 %v87
    %v218 = vunpack.c.l.b16 %v88
    %v219 = vunpack.c.h.b16 %v88
    %v220 = vunpack.c.l.b16 %v89
    %v221 = vunpack.c.l.b16 %v90
    %v222 = vunpack.c.h.b16 %v90
    %v223 = vunpack.c.l.b16 %v91
    %v224 = vpack.c.b16 %v179, %v176
    %v225 = vpack.c.b16 %v180, %v177
    %v226 = vpack.c.b16 %v181, %v178
    %v227 = vpack.c.b16 %v185, %v182
    %v228 = vpack.c.b16 %v186, %v183
    %v229 = vpack.c.b16 %v187, %v184
    %v230 = vpack.c.b16 %v191, %v188
    %v231 = vpack.c.b16 %v192, %v189
    %v232 = vpack.c.b16 %v193, %v190
    %v233 = vpack.c.b16 %v197, %v194
    %v234 = vpack.c.b16 %v198, %v195
    %v235 = vpack.c.b16 %v199, %v196
    %v236 = vpack.c.b16 %v203, %v200
    %v237 = vpack.c.b16 %v204, %v201
    %v238 = vpack.c.b16 %v205, %v202
    %v239 = vpack.c.b16 %v209, %v206
    %v240 = vpack.c.b16 %v210, %v207
    %v241 = vpack.c.b16 %v211, %v208
    %v242 = vpack.c.b16 %v215, %v212
    %v243 = vpack.c.b16 %v216, %v213
    %v244 = vpack.c.b16 %v217, %v214
    %v245 = vpack.c.b16 %v221, %v218
    %v246 = vpack.c.b16 %v222, %v219
    %v247 = vpack.c.b16 %v223, %v220
    %272 = vmatprep.subr.bf16.mxu0 %v246
    %273 = vmatpush1.bf16.msra.mxu0 %v245
    %274 = vmatprep.subr.bf16.mxu0 %v243
    %275 = vmatpush1.bf16.msra.mxu0 %v242
    %276 = vmatprep.subr.bf16.mxu0 %v240
    %277 = vmatpush1.bf16.msra.mxu0 %v239
    %278 = vmatprep.subr.bf16.mxu0 %v237
    %279 = vmatpush1.bf16.msra.mxu0 %v236
    %280 = vmatprep.subr.bf16.mxu0 %v234
    %281 = vmatpush1.bf16.msra.mxu0 %v233
    %282 = vmatprep.subr.bf16.mxu0 %v231
    %283 = vmatpush1.bf16.msra.mxu0 %v230
    %284 = vmatprep.subr.bf16.mxu0 %v228
    %285 = vmatpush1.bf16.msra.mxu0 %v227
    %286 = vmatprep.subr.bf16.mxu0 %v225
    %287 = vmatpush1.bf16.msra.mxu0 %v224
    %288 = vmatprep.subr.bf16.mxu0 0
    %289 = vmatpush2.bf16.msra.mxu0 0
    %290 = vmatprep.subr.bf16.mxu0 0
    %291 = vmatpush2.bf16.msra.mxu0 0
    %292 = vmatprep.subr.bf16.mxu0 0
    %293 = vmatpush2.bf16.msra.mxu0 0
    %294 = vmatprep.subr.bf16.mxu0 0
    %295 = vmatpush2.bf16.msra.mxu0 0
    %296 = vmatprep.subr.bf16.mxu0 0
    %297 = vmatpush2.bf16.msra.mxu0 0
    %298 = vmatprep.subr.bf16.mxu0 0
    %299 = vmatpush2.bf16.msra.mxu0 0
    %300 = vmatprep.subr.bf16.mxu0 0
    %301 = vmatpush2.bf16.msra.mxu0 0
    %302 = vmatprep.subr.bf16.mxu0 0
    %303 = vmatpush2.bf16.msra.mxu0 0
    %304 = vmatprep.mubr.bf16.mxu0 0
    %305 = vmatmul.mubr.bf16.gmra.mxu0 0
    %v306 = vpop.f32.mrf.mxu0
    %v307 = vadd.f32 0.0, %v306
    %v308 = vpop.f32.mrf.mxu0
    %v309 = vadd.f32 0.0, %v308
    %v310 = vpop.f32.mrf.mxu0
    %v311 = vpop.f32.mrf.mxu0
    %312 = vdwg.mxu0
    %313 = vmatprep.subr.bf16.mxu0 0
    %314 = vmatpush1.bf16.msra.mxu0 %v247
    %315 = vmatprep.subr.bf16.mxu0 0
    %316 = vmatpush1.bf16.msra.mxu0 %v244
    %317 = vmatprep.subr.bf16.mxu0 0
    %318 = vmatpush1.bf16.msra.mxu0 %v241
    %319 = vmatprep.subr.bf16.mxu0 0
    %320 = vmatpush1.bf16.msra.mxu0 %v238
    %321 = vmatprep.subr.bf16.mxu0 0
    %322 = vmatpush1.bf16.msra.mxu0 %v235
    %323 = vmatprep.subr.bf16.mxu0 0
    %324 = vmatpush1.bf16.msra.mxu0 %v232
    %325 = vmatprep.subr.bf16.mxu0 0
    %326 = vmatpush1.bf16.msra.mxu0 %v229
    %327 = vmatprep.subr.bf16.mxu0 0
    %328 = vmatpush1.bf16.msra.mxu0 %v226
    %329 = vmatprep.subr.bf16.mxu0 0
    %330 = vmatpush2.bf16.msra.mxu0 0
    %331 = vmatprep.subr.bf16.mxu0 0
    %332 = vmatpush2.bf16.msra.mxu0 0
    %333 = vmatprep.subr.bf16.mxu0 0
    %334 = vmatpush2.bf16.msra.mxu0 0
    %335 = vmatprep.subr.bf16.mxu0 0
    %336 = vmatpush2.bf16.msra.mxu0 0
    %337 = vmatprep.subr.bf16.mxu0 0
    %338 = vmatpush2.bf16.msra.mxu0 0
    %339 = vmatprep.subr.bf16.mxu0 0
    %340 = vmatpush2.bf16.msra.mxu0 0
    %341 = vmatprep.subr.bf16.mxu0 0
    %342 = vmatpush2.bf16.msra.mxu0 0
    %343 = vmatprep.subr.bf16.mxu0 0
    %344 = vmatpush2.bf16.msra.mxu0 0
    %345 = vmatprep.mubr.bf16.mxu0 0
    %346 = vmatmul.mubr.bf16.gmra.mxu0 0
    %v347 = vpop.f32.mrf.mxu0
    %v348 = vadd.f32 0.0, %v347
    %v349 = vpop.f32.mrf.mxu0
    %v350 = vpop.f32.mrf.mxu0
    %v351 = vpop.f32.mrf.mxu0
    %352 = vdwg.mxu0
    %v353 = vadd.f32 %v141, %v307
    %v354 = vxor.u32 %v353, 2147483648
    %v355 = vmul.f32 %v354, 1.442695
    %v356 = vpow.pop %v355
    %v357 = vadd.f32 %v356, 1.0
    %v358 = vrcp.pop %v357
    %v359 = vmul.f32 1.0, %v358
    %v360 = vadd.f32 %v142, %v309
    %v361 = vxor.u32 %v360, 2147483648
    %v362 = vmul.f32 %v361, 1.442695
    %v363 = vpow.pop %v362
    %v364 = vadd.f32 %v363, 1.0
    %v365 = vrcp.pop %v364
    %v366 = vmul.f32 1.0, %v365
    %v367 = vadd.f32 %v348, %v131
    %v368 = vmul.f32 %v359, %v367
    %v369 = vadd.f32 %v143, %v368
    %v370 = vtanh.pop %v369
    %v371 = vsub.f32 1.0, %v366
    %v372 = vmul.f32 %v371, %v370
    %v373 = vmul.f32 %v366, 0.0
    %v374 = vadd.f32 %v372, %v373
    %375 = vset.pattern.permute.xlu0 1
    %376 = vperm.xlu0 %375, %v59
    %v377 = vpop.permute.xlu0 %376
    %v379 = vmul.f32 %v377, %v97
    %v380 = vmul.f32 %v377, %v101
    %v381 = vmul.f32 %v377, %v105
    %v382 = vadd.f32 %v379, %v114
    %v383 = vadd.f32 %v380, %v118
    %v384 = vadd.f32 %v381, %v122
    %v385 = vpack.c.bf16 %v374, %v374
    %386 = vmatprep.subr.bf16.mxu0 %v246
    %387 = vmatpush1.bf16.msra.mxu0 %v245
    %388 = vmatprep.subr.bf16.mxu0 %v243
    %389 = vmatpush1.bf16.msra.mxu0 %v242
    %390 = vmatprep.subr.bf16.mxu0 %v240
    %391 = vmatpush1.bf16.msra.mxu0 %v239
    %392 = vmatprep.subr.bf16.mxu0 %v237
    %393 = vmatpush1.bf16.msra.mxu0 %v236
    %394 = vmatprep.subr.bf16.mxu0 %v234
    %395 = vmatpush1.bf16.msra.mxu0 %v233
    %396 = vmatprep.subr.bf16.mxu0 %v231
    %397 = vmatpush1.bf16.msra.mxu0 %v230
    %398 = vmatprep.subr.bf16.mxu0 %v228
    %399 = vmatpush1.bf16.msra.mxu0 %v227
    %400 = vmatprep.subr.bf16.mxu0 %v225
    %401 = vmatpush1.bf16.msra.mxu0 %v224
    %402 = vmatprep.subr.bf16.mxu0 0
    %403 = vmatpush2.bf16.msra.mxu0 0
    %404 = vmatprep.subr.bf16.mxu0 0
    %405 = vmatpush2.bf16.msra.mxu0 0
    %406 = vmatprep.subr.bf16.mxu0 0
    %407 = vmatpush2.bf16.msra.mxu0 0
    %408 = vmatprep.subr.bf16.mxu0 0
    %409 = vmatpush2.bf16.msra.mxu0 0
    %410 = vmatprep.subr.bf16.mxu0 0
    %411 = vmatpush2.bf16.msra.mxu0 0
    %412 = vmatprep.subr.bf16.mxu0 0
    %413 = vmatpush2.bf16.msra.mxu0 0
    %414 = vmatprep.subr.bf16.mxu0 0
    %415 = vmatpush2.bf16.msra.mxu0 0
    %416 = vmatprep.subr.bf16.mxu0 0
    %417 = vmatpush2.bf16.msra.mxu0 0
    %418 = vmatprep.mubr.bf16.mxu0 0
    %419 = vmatmul.mubr.bf16.gmra.mxu0 %v385
    %v420 = vpop.f32.mrf.mxu0
    %v421 = vadd.f32 0.0, %v420
    %v422 = vpop.f32.mrf.mxu0
    %v423 = vadd.f32 0.0, %v422
    %v424 = vpop.f32.mrf.mxu0
    %v425 = vpop.f32.mrf.mxu0
    %426 = vdwg.mxu0
    %427 = vmatprep.subr.bf16.mxu0 0
    %428 = vmatpush1.bf16.msra.mxu0 %v247
    %429 = vmatprep.subr.bf16.mxu0 0
    %430 = vmatpush1.bf16.msra.mxu0 %v244
    %431 = vmatprep.subr.bf16.mxu0 0
    %432 = vmatpush1.bf16.msra.mxu0 %v241
    %433 = vmatprep.subr.bf16.mxu0 0
    %434 = vmatpush1.bf16.msra.mxu0 %v238
    %435 = vmatprep.subr.bf16.mxu0 0
    %436 = vmatpush1.bf16.msra.mxu0 %v235
    %437 = vmatprep.subr.bf16.mxu0 0
    %438 = vmatpush1.bf16.msra.mxu0 %v232
    %439 = vmatprep.subr.bf16.mxu0 0
    %440 = vmatpush1.bf16.msra.mxu0 %v229
    %441 = vmatprep.subr.bf16.mxu0 0
    %442 = vmatpush1.bf16.msra.mxu0 %v226
    %443 = vmatprep.subr.bf16.mxu0 0
    %444 = vmatpush2.bf16.msra.mxu0 0
    %445 = vmatprep.subr.bf16.mxu0 0
    %446 = vmatpush2.bf16.msra.mxu0 0
    %447 = vmatprep.subr.bf16.mxu0 0
    %448 = vmatpush2.bf16.msra.mxu0 0
    %449 = vmatprep.subr.bf16.mxu0 0
    %450 = vmatpush2.bf16.msra.mxu0 0
    %451 = vmatprep.subr.bf16.mxu0 0
    %452 = vmatpush2.bf16.msra.mxu0 0
    %453 = vmatprep.subr.bf16.mxu0 0
    %454 = vmatpush2.bf16.msra.mxu0 0
    %455 = vmatprep.subr.bf16.mxu0 0
    %456 = vmatpush2.bf16.msra.mxu0 0
    %457 = vmatprep.subr.bf16.mxu0 0
    %458 = vmatpush2.bf16.msra.mxu0 0
    %459 = vmatprep.mubr.bf16.mxu0 0
    %460 = vmatmul.mubr.bf16.gmra.mxu0 %v385
    %v461 = vpop.f32.mrf.mxu0
    %v462 = vadd.f32 0.0, %v461
    %v463 = vpop.f32.mrf.mxu0
    %v464 = vpop.f32.mrf.mxu0
    %v465 = vpop.f32.mrf.mxu0
    %466 = vdwg.mxu0
    %v467 = vadd.f32 %v382, %v421
    %v468 = vxor.u32 %v467, 2147483648
    %v469 = vmul.f32 %v468, 1.442695
    %v470 = vpow.pop %v469
    %v471 = vadd.f32 %v470, 1.0
    %v472 = vrcp.pop %v471
    %v473 = vmul.f32 1.0, %v472
    %v474 = vadd.f32 %v383, %v423
    %v475 = vxor.u32 %v474, 2147483648
    %v476 = vmul.f32 %v475, 1.442695
    %v477 = vpow.pop %v476
    %v478 = vadd.f32 %v477, 1.0
    %v479 = vrcp.pop %v478
    %v480 = vmul.f32 1.0, %v479
    %v481 = vadd.f32 %v462, %v131
    %v482 = vmul.f32 %v473, %v481
    %v483 = vadd.f32 %v384, %v482
    %v484 = vtanh.pop %v483
    %v485 = vsub.f32 1.0, %v480
    %v486 = vmul.f32 %v485, %v484
    %v487 = vmul.f32 %v480, %v374
    %v488 = vadd.f32 %v486, %v487
    %489 = vset.pattern.permute.xlu0 2
    %490 = vperm.xlu0 %489, %v59
    %v491 = vpop.permute.xlu0 %490
    %v493 = vmul.f32 %v491, %v97
    %v494 = vmul.f32 %v491, %v101
    %v495 = vmul.f32 %v491, %v105
    %v496 = vadd.f32 %v493, %v114
    %v497 = vadd.f32 %v494, %v118
    %v498 = vadd.f32 %v495, %v122
    %v499 = vpack.c.bf16 %v488, %v488
    %500 = vmatprep.subr.bf16.mxu0 %v246
    %501 = vmatpush1.bf16.msra.mxu0 %v245
    %502 = vmatprep.subr.bf16.mxu0 %v243
    %503 = vmatpush1.bf16.msra.mxu0 %v242
    %504 = vmatprep.subr.bf16.mxu0 %v240
    %505 = vmatpush1.bf16.msra.mxu0 %v239
    %506 = vmatprep.subr.bf16.mxu0 %v237
    %507 = vmatpush1.bf16.msra.mxu0 %v236
    %508 = vmatprep.subr.bf16.mxu0 %v234
    %509 = vmatpush1.bf16.msra.mxu0 %v233
    %510 = vmatprep.subr.bf16.mxu0 %v231
    %511 = vmatpush1.bf16.msra.mxu0 %v230
    %512 = vmatprep.subr.bf16.mxu0 %v228
    %513 = vmatpush1.bf16.msra.mxu0 %v227
    %514 = vmatprep.subr.bf16.mxu0 %v225
    %515 = vmatpush1.bf16.msra.mxu0 %v224
    %516 = vmatprep.subr.bf16.mxu0 0
    %517 = vmatpush2.bf16.msra.mxu0 0
    %518 = vmatprep.subr.bf16.mxu0 0
    %519 = vmatpush2.bf16.msra.mxu0 0
    %520 = vmatprep.subr.bf16.mxu0 0
    %521 = vmatpush2.bf16.msra.mxu0 0
    %522 = vmatprep.subr.bf16.mxu0 0
    %523 = vmatpush2.bf16.msra.mxu0 0
    %524 = vmatprep.subr.bf16.mxu0 0
    %525 = vmatpush2.bf16.msra.mxu0 0
    %526 = vmatprep.subr.bf16.mxu0 0
    %527 = vmatpush2.bf16.msra.mxu0 0
    %528 = vmatprep.subr.bf16.mxu0 0
    %529 = vmatpush2.bf16.msra.mxu0 0
    %530 = vmatprep.subr.bf16.mxu0 0
    %531 = vmatpush2.bf16.msra.mxu0 0
    %532 = vmatprep.mubr.bf16.mxu0 0
    %533 = vmatmul.mubr.bf16.gmra.mxu0 %v499
    %v534 = vpop.f32.mrf.mxu0
    %v535 = vadd.f32 0.0, %v534
    %v536 = vpop.f32.mrf.mxu0
    %v537 = vadd.f32 0.0, %v536
    %v538 = vpop.f32.mrf.mxu0
    %v539 = vpop.f32.mrf.mxu0
    %540 = vdwg.mxu0
    %541 = vmatprep.subr.bf16.mxu0 0
    %542 = vmatpush1.bf16.msra.mxu0 %v247
    %543 = vmatprep.subr.bf16.mxu0 0
    %544 = vmatpush1.bf16.msra.mxu0 %v244
    %545 = vmatprep.subr.bf16.mxu0 0
    %546 = vmatpush1.bf16.msra.mxu0 %v241
    %547 = vmatprep.subr.bf16.mxu0 0
    %548 = vmatpush1.bf16.msra.mxu0 %v238
    %549 = vmatprep.subr.bf16.mxu0 0
    %550 = vmatpush1.bf16.msra.mxu0 %v235
    %551 = vmatprep.subr.bf16.mxu0 0
    %552 = vmatpush1.bf16.msra.mxu0 %v232
    %553 = vmatprep.subr.bf16.mxu0 0
    %554 = vmatpush1.bf16.msra.mxu0 %v229
    %555 = vmatprep.subr.bf16.mxu0 0
    %556 = vmatpush1.bf16.msra.mxu0 %v226
    %557 = vmatprep.subr.bf16.mxu0 0
    %558 = vmatpush2.bf16.msra.mxu0 0
    %559 = vmatprep.subr.bf16.mxu0 0
    %560 = vmatpush2.bf16.msra.mxu0 0
    %561 = vmatprep.subr.bf16.mxu0 0
    %562 = vmatpush2.bf16.msra.mxu0 0
    %563 = vmatprep.subr.bf16.mxu0 0
    %564 = vmatpush2.bf16.msra.mxu0 0
    %565 = vmatprep.subr.bf16.mxu0 0
    %566 = vmatpush2.bf16.msra.mxu0 0
    %567 = vmatprep.subr.bf16.mxu0 0
    %568 = vmatpush2.bf16.msra.mxu0 0
    %569 = vmatprep.subr.bf16.mxu0 0
    %570 = vmatpush2.bf16.msra.mxu0 0
    %571 = vmatprep.subr.bf16.mxu0 0
    %572 = vmatpush2.bf16.msra.mxu0 0
    %573 = vmatprep.mubr.bf16.mxu0 0
    %574 = vmatmul.mubr.bf16.gmra.mxu0 %v499
    %v575 = vpop.f32.mrf.mxu0
    %v576 = vadd.f32 0.0, %v575
    %v577 = vpop.f32.mrf.mxu0
    %v578 = vpop.f32.mrf.mxu0
    %v579 = vpop.f32.mrf.mxu0
    %580 = vdwg.mxu0
    %v581 = vadd.f32 %v496, %v535
    %v582 = vxor.u32 %v581, 2147483648
    %v583 = vmul.f32 %v582, 1.442695
    %v584 = vpow.pop %v583
    %v585 = vadd.f32 %v584, 1.0
    %v586 = vrcp.pop %v585
    %v587 = vmul.f32 1.0, %v586
    %v588 = vadd.f32 %v497, %v537
    %v589 = vxor.u32 %v588, 2147483648
    %v590 = vmul.f32 %v589, 1.442695
    %v591 = vpow.pop %v590
    %v592 = vadd.f32 %v591, 1.0
    %v593 = vrcp.pop %v592
    %v594 = vmul.f32 1.0, %v593
    %v595 = vadd.f32 %v576, %v131
    %v596 = vmul.f32 %v587, %v595
    %v597 = vadd.f32 %v498, %v596
    %v598 = vtanh.pop %v597
    %v599 = vsub.f32 1.0, %v594
    %v600 = vmul.f32 %v599, %v598
    %v601 = vmul.f32 %v594, %v488
    %v602 = vadd.f32 %v600, %v601
    %603 = vset.pattern.permute.xlu0 3
    %604 = vperm.xlu0 %603, %v59
    %v605 = vpop.permute.xlu0 %604
    %v607 = vmul.f32 %v605, %v97
    %v608 = vmul.f32 %v605, %v101
    %v609 = vmul.f32 %v605, %v105
    %v610 = vadd.f32 %v607, %v114
    %v611 = vadd.f32 %v608, %v118
    %v612 = vadd.f32 %v609, %v122
    %v613 = vpack.c.bf16 %v602, %v602
    %614 = vmatprep.subr.bf16.mxu0 %v246
    %615 = vmatpush1.bf16.msra.mxu0 %v245
    %616 = vmatprep.subr.bf16.mxu0 %v243
    %617 = vmatpush1.bf16.msra.mxu0 %v242
    %618 = vmatprep.subr.bf16.mxu0 %v240
    %619 = vmatpush1.bf16.msra.mxu0 %v239
    %620 = vmatprep.subr.bf16.mxu0 %v237
    %621 = vmatpush1.bf16.msra.mxu0 %v236
    %622 = vmatprep.subr.bf16.mxu0 %v234
    %623 = vmatpush1.bf16.msra.mxu0 %v233
    %624 = vmatprep.subr.bf16.mxu0 %v231
    %625 = vmatpush1.bf16.msra.mxu0 %v230
    %626 = vmatprep.subr.bf16.mxu0 %v228
    %627 = vmatpush1.bf16.msra.mxu0 %v227
    %628 = vmatprep.subr.bf16.mxu0 %v225
    %629 = vmatpush1.bf16.msra.mxu0 %v224
    %630 = vmatprep.subr.bf16.mxu0 0
    %631 = vmatpush2.bf16.msra.mxu0 0
    %632 = vmatprep.subr.bf16.mxu0 0
    %633 = vmatpush2.bf16.msra.mxu0 0
    %634 = vmatprep.subr.bf16.mxu0 0
    %635 = vmatpush2.bf16.msra.mxu0 0
    %636 = vmatprep.subr.bf16.mxu0 0
    %637 = vmatpush2.bf16.msra.mxu0 0
    %638 = vmatprep.subr.bf16.mxu0 0
    %639 = vmatpush2.bf16.msra.mxu0 0
    %640 = vmatprep.subr.bf16.mxu0 0
    %641 = vmatpush2.bf16.msra.mxu0 0
    %642 = vmatprep.subr.bf16.mxu0 0
    %643 = vmatpush2.bf16.msra.mxu0 0
    %644 = vmatprep.subr.bf16.mxu0 0
    %645 = vmatpush2.bf16.msra.mxu0 0
    %646 = vmatprep.mubr.bf16.mxu0 0
    %647 = vmatmul.mubr.bf16.gmra.mxu0 %v613
    %v648 = vpop.f32.mrf.mxu0
    %v649 = vadd.f32 0.0, %v648
    %v650 = vpop.f32.mrf.mxu0
    %v651 = vadd.f32 0.0, %v650
    %v652 = vpop.f32.mrf.mxu0
    %v653 = vpop.f32.mrf.mxu0
    %654 = vdwg.mxu0
    %655 = vmatprep.subr.bf16.mxu0 0
    %656 = vmatpush1.bf16.msra.mxu0 %v247
    %657 = vmatprep.subr.bf16.mxu0 0
    %658 = vmatpush1.bf16.msra.mxu0 %v244
    %659 = vmatprep.subr.bf16.mxu0 0
    %660 = vmatpush1.bf16.msra.mxu0 %v241
    %661 = vmatprep.subr.bf16.mxu0 0
    %662 = vmatpush1.bf16.msra.mxu0 %v238
    %663 = vmatprep.subr.bf16.mxu0 0
    %664 = vmatpush1.bf16.msra.mxu0 %v235
    %665 = vmatprep.subr.bf16.mxu0 0
    %666 = vmatpush1.bf16.msra.mxu0 %v232
    %667 = vmatprep.subr.bf16.mxu0 0
    %668 = vmatpush1.bf16.msra.mxu0 %v229
    %669 = vmatprep.subr.bf16.mxu0 0
    %670 = vmatpush1.bf16.msra.mxu0 %v226
    %671 = vmatprep.subr.bf16.mxu0 0
    %672 = vmatpush2.bf16.msra.mxu0 0
    %673 = vmatprep.subr.bf16.mxu0 0
    %674 = vmatpush2.bf16.msra.mxu0 0
    %675 = vmatprep.subr.bf16.mxu0 0
    %676 = vmatpush2.bf16.msra.mxu0 0
    %677 = vmatprep.subr.bf16.mxu0 0
    %678 = vmatpush2.bf16.msra.mxu0 0
    %679 = vmatprep.subr.bf16.mxu0 0
    %680 = vmatpush2.bf16.msra.mxu0 0
    %681 = vmatprep.subr.bf16.mxu0 0
    %682 = vmatpush2.bf16.msra.mxu0 0
    %683 = vmatprep.subr.bf16.mxu0 0
    %684 = vmatpush2.bf16.msra.mxu0 0
    %685 = vmatprep.subr.bf16.mxu0 0
    %686 = vmatpush2.bf16.msra.mxu0 0
    %687 = vmatprep.mubr.bf16.mxu0 0
    %688 = vmatmul.mubr.bf16.gmra.mxu0 %v613
    %v689 = vpop.f32.mrf.mxu0
    %v690 = vadd.f32 0.0, %v689
    %v691 = vpop.f32.mrf.mxu0
    %v692 = vpop.f32.mrf.mxu0
    %v693 = vpop.f32.mrf.mxu0
    %694 = vdwg.mxu0
    %v695 = vadd.f32 %v610, %v649
    %v696 = vxor.u32 %v695, 2147483648
    %v697 = vmul.f32 %v696, 1.442695
    %v698 = vpow.pop %v697
    %v699 = vadd.f32 %v698, 1.0
    %v700 = vrcp.pop %v699
    %v701 = vmul.f32 1.0, %v700
    %v702 = vadd.f32 %v611, %v651
    %v703 = vxor.u32 %v702, 2147483648
    %v704 = vmul.f32 %v703, 1.442695
    %v705 = vpow.pop %v704
    %v706 = vadd.f32 %v705, 1.0
    %v707 = vrcp.pop %v706
    %v708 = vmul.f32 1.0, %v707
    %v709 = vadd.f32 %v690, %v131
    %v710 = vmul.f32 %v701, %v709
    %v711 = vadd.f32 %v612, %v710
    %v712 = vtanh.pop %v711
    %v713 = vsub.f32 1.0, %v708
    %v714 = vmul.f32 %v713, %v712
    %v715 = vmul.f32 %v708, %v602
    %v716 = vadd.f32 %v714, %v715
    %717 = vset.pattern.permute.xlu0 4
    %718 = vperm.xlu0 %717, %v59
    %v719 = vpop.permute.xlu0 %718
    %v721 = vmul.f32 %v719, %v97
    %v722 = vmul.f32 %v719, %v101
    %v723 = vmul.f32 %v719, %v105
    %v724 = vadd.f32 %v721, %v114
    %v725 = vadd.f32 %v722, %v118
    %v726 = vadd.f32 %v723, %v122
    %v727 = vpack.c.bf16 %v716, %v716
    %728 = vmatprep.subr.bf16.mxu0 %v246
    %729 = vmatpush1.bf16.msra.mxu0 %v245
    %730 = vmatprep.subr.bf16.mxu0 %v243
    %731 = vmatpush1.bf16.msra.mxu0 %v242
    %732 = vmatprep.subr.bf16.mxu0 %v240
    %733 = vmatpush1.bf16.msra.mxu0 %v239
    %734 = vmatprep.subr.bf16.mxu0 %v237
    %735 = vmatpush1.bf16.msra.mxu0 %v236
    %736 = vmatprep.subr.bf16.mxu0 %v234
    %737 = vmatpush1.bf16.msra.mxu0 %v233
    %738 = vmatprep.subr.bf16.mxu0 %v231
    %739 = vmatpush1.bf16.msra.mxu0 %v230
    %740 = vmatprep.subr.bf16.mxu0 %v228
    %741 = vmatpush1.bf16.msra.mxu0 %v227
    %742 = vmatprep.subr.bf16.mxu0 %v225
    %743 = vmatpush1.bf16.msra.mxu0 %v224
    %744 = vmatprep.subr.bf16.mxu0 0
    %745 = vmatpush2.bf16.msra.mxu0 0
    %746 = vmatprep.subr.bf16.mxu0 0
    %747 = vmatpush2.bf16.msra.mxu0 0
    %748 = vmatprep.subr.bf16.mxu0 0
    %749 = vmatpush2.bf16.msra.mxu0 0
    %750 = vmatprep.subr.bf16.mxu0 0
    %751 = vmatpush2.bf16.msra.mxu0 0
    %752 = vmatprep.subr.bf16.mxu0 0
    %753 = vmatpush2.bf16.msra.mxu0 0
    %754 = vmatprep.subr.bf16.mxu0 0
    %755 = vmatpush2.bf16.msra.mxu0 0
    %756 = vmatprep.subr.bf16.mxu0 0
    %757 = vmatpush2.bf16.msra.mxu0 0
    %758 = vmatprep.subr.bf16.mxu0 0
    %759 = vmatpush2.bf16.msra.mxu0 0
    %760 = vmatprep.mubr.bf16.mxu0 0
    %761 = vmatmul.mubr.bf16.gmra.mxu0 %v727
    %v762 = vpop.f32.mrf.mxu0
    %v763 = vadd.f32 0.0, %v762
    %v764 = vpop.f32.mrf.mxu0
    %v765 = vadd.f32 0.0, %v764
    %v766 = vpop.f32.mrf.mxu0
    %v767 = vpop.f32.mrf.mxu0
    %768 = vdwg.mxu0
    %769 = vmatprep.subr.bf16.mxu0 0
    %770 = vmatpush1.bf16.msra.mxu0 %v247
    %771 = vmatprep.subr.bf16.mxu0 0
    %772 = vmatpush1.bf16.msra.mxu0 %v244
    %773 = vmatprep.subr.bf16.mxu0 0
    %774 = vmatpush1.bf16.msra.mxu0 %v241
    %775 = vmatprep.subr.bf16.mxu0 0
    %776 = vmatpush1.bf16.msra.mxu0 %v238
    %777 = vmatprep.subr.bf16.mxu0 0
    %778 = vmatpush1.bf16.msra.mxu0 %v235
    %779 = vmatprep.subr.bf16.mxu0 0
    %780 = vmatpush1.bf16.msra.mxu0 %v232
    %781 = vmatprep.subr.bf16.mxu0 0
    %782 = vmatpush1.bf16.msra.mxu0 %v229
    %783 = vmatprep.subr.bf16.mxu0 0
    %784 = vmatpush1.bf16.msra.mxu0 %v226
    %785 = vmatprep.subr.bf16.mxu0 0
    %786 = vmatpush2.bf16.msra.mxu0 0
    %787 = vmatprep.subr.bf16.mxu0 0
    %788 = vmatpush2.bf16.msra.mxu0 0
    %789 = vmatprep.subr.bf16.mxu0 0
    %790 = vmatpush2.bf16.msra.mxu0 0
    %791 = vmatprep.subr.bf16.mxu0 0
    %792 = vmatpush2.bf16.msra.mxu0 0
    %793 = vmatprep.subr.bf16.mxu0 0
    %794 = vmatpush2.bf16.msra.mxu0 0
    %795 = vmatprep.subr.bf16.mxu0 0
    %796 = vmatpush2.bf16.msra.mxu0 0
    %797 = vmatprep.subr.bf16.mxu0 0
    %798 = vmatpush2.bf16.msra.mxu0 0
    %799 = vmatprep.subr.bf16.mxu0 0
    %800 = vmatpush2.bf16.msra.mxu0 0
    %801 = vmatprep.mubr.bf16.mxu0 0
    %802 = vmatmul.mubr.bf16.gmra.mxu0 %v727
    %v803 = vpop.f32.mrf.mxu0
    %v804 = vadd.f32 0.0, %v803
    %v805 = vpop.f32.mrf.mxu0
    %v806 = vpop.f32.mrf.mxu0
    %v807 = vpop.f32.mrf.mxu0
    %808 = vdwg.mxu0
    %v809 = vadd.f32 %v724, %v763
    %v810 = vxor.u32 %v809, 2147483648
    %v811 = vmul.f32 %v810, 1.442695
    %v812 = vpow.pop %v811
    %v813 = vadd.f32 %v812, 1.0
    %v814 = vrcp.pop %v813
    %v815 = vmul.f32 1.0, %v814
    %v816 = vadd.f32 %v725, %v765
    %v817 = vxor.u32 %v816, 2147483648
    %v818 = vmul.f32 %v817, 1.442695
    %v819 = vpow.pop %v818
    %v820 = vadd.f32 %v819, 1.0
    %v821 = vrcp.pop %v820
    %v822 = vmul.f32 1.0, %v821
    %v823 = vadd.f32 %v804, %v131
    %v824 = vmul.f32 %v815, %v823
    %v825 = vadd.f32 %v726, %v824
    %v826 = vtanh.pop %v825
    %v827 = vsub.f32 1.0, %v822
    %v828 = vmul.f32 %v827, %v826
    %v829 = vmul.f32 %v822, %v716
    %v830 = vadd.f32 %v828, %v829
    %831 = vset.pattern.permute.xlu0 5
    %832 = vperm.xlu0 %831, %v59
    %v833 = vpop.permute.xlu0 %832
    %v835 = vmul.f32 %v833, %v97
    %v836 = vmul.f32 %v833, %v101
    %v837 = vmul.f32 %v833, %v105
    %v838 = vadd.f32 %v835, %v114
    %v839 = vadd.f32 %v836, %v118
    %v840 = vadd.f32 %v837, %v122
    %v841 = vpack.c.bf16 %v830, %v830
    %842 = vmatprep.subr.bf16.mxu0 %v246
    %843 = vmatpush1.bf16.msra.mxu0 %v245
    %844 = vmatprep.subr.bf16.mxu0 %v243
    %845 = vmatpush1.bf16.msra.mxu0 %v242
    %846 = vmatprep.subr.bf16.mxu0 %v240
    %847 = vmatpush1.bf16.msra.mxu0 %v239
    %848 = vmatprep.subr.bf16.mxu0 %v237
    %849 = vmatpush1.bf16.msra.mxu0 %v236
    %850 = vmatprep.subr.bf16.mxu0 %v234
    %851 = vmatpush1.bf16.msra.mxu0 %v233
    %852 = vmatprep.subr.bf16.mxu0 %v231
    %853 = vmatpush1.bf16.msra.mxu0 %v230
    %854 = vmatprep.subr.bf16.mxu0 %v228
    %855 = vmatpush1.bf16.msra.mxu0 %v227
    %856 = vmatprep.subr.bf16.mxu0 %v225
    %857 = vmatpush1.bf16.msra.mxu0 %v224
    %858 = vmatprep.subr.bf16.mxu0 0
    %859 = vmatpush2.bf16.msra.mxu0 0
    %860 = vmatprep.subr.bf16.mxu0 0
    %861 = vmatpush2.bf16.msra.mxu0 0
    %862 = vmatprep.subr.bf16.mxu0 0
    %863 = vmatpush2.bf16.msra.mxu0 0
    %864 = vmatprep.subr.bf16.mxu0 0
    %865 = vmatpush2.bf16.msra.mxu0 0
    %866 = vmatprep.subr.bf16.mxu0 0
    %867 = vmatpush2.bf16.msra.mxu0 0
    %868 = vmatprep.subr.bf16.mxu0 0
    %869 = vmatpush2.bf16.msra.mxu0 0
    %870 = vmatprep.subr.bf16.mxu0 0
    %871 = vmatpush2.bf16.msra.mxu0 0
    %872 = vmatprep.subr.bf16.mxu0 0
    %873 = vmatpush2.bf16.msra.mxu0 0
    %874 = vmatprep.mubr.bf16.mxu0 0
    %875 = vmatmul.mubr.bf16.gmra.mxu0 %v841
    %v876 = vpop.f32.mrf.mxu0
    %v877 = vadd.f32 0.0, %v876
    %v878 = vpop.f32.mrf.mxu0
    %v879 = vadd.f32 0.0, %v878
    %v880 = vpop.f32.mrf.mxu0
    %v881 = vpop.f32.mrf.mxu0
    %882 = vdwg.mxu0
    %883 = vmatprep.subr.bf16.mxu0 0
    %884 = vmatpush1.bf16.msra.mxu0 %v247
    %885 = vmatprep.subr.bf16.mxu0 0
    %886 = vmatpush1.bf16.msra.mxu0 %v244
    %887 = vmatprep.subr.bf16.mxu0 0
    %888 = vmatpush1.bf16.msra.mxu0 %v241
    %889 = vmatprep.subr.bf16.mxu0 0
    %890 = vmatpush1.bf16.msra.mxu0 %v238
    %891 = vmatprep.subr.bf16.mxu0 0
    %892 = vmatpush1.bf16.msra.mxu0 %v235
    %893 = vmatprep.subr.bf16.mxu0 0
    %894 = vmatpush1.bf16.msra.mxu0 %v232
    %895 = vmatprep.subr.bf16.mxu0 0
    %896 = vmatpush1.bf16.msra.mxu0 %v229
    %897 = vmatprep.subr.bf16.mxu0 0
    %898 = vmatpush1.bf16.msra.mxu0 %v226
    %899 = vmatprep.subr.bf16.mxu0 0
    %900 = vmatpush2.bf16.msra.mxu0 0
    %901 = vmatprep.subr.bf16.mxu0 0
    %902 = vmatpush2.bf16.msra.mxu0 0
    %903 = vmatprep.subr.bf16.mxu0 0
    %904 = vmatpush2.bf16.msra.mxu0 0
    %905 = vmatprep.subr.bf16.mxu0 0
    %906 = vmatpush2.bf16.msra.mxu0 0
    %907 = vmatprep.subr.bf16.mxu0 0
    %908 = vmatpush2.bf16.msra.mxu0 0
    %909 = vmatprep.subr.bf16.mxu0 0
    %910 = vmatpush2.bf16.msra.mxu0 0
    %911 = vmatprep.subr.bf16.mxu0 0
    %912 = vmatpush2.bf16.msra.mxu0 0
    %913 = vmatprep.subr.bf16.mxu0 0
    %914 = vmatpush2.bf16.msra.mxu0 0
    %915 = vmatprep.mubr.bf16.mxu0 0
    %916 = vmatmul.mubr.bf16.gmra.mxu0 %v841
    %v917 = vpop.f32.mrf.mxu0
    %v918 = vadd.f32 0.0, %v917
    %v919 = vpop.f32.mrf.mxu0
    %v920 = vpop.f32.mrf.mxu0
    %v921 = vpop.f32.mrf.mxu0
    %922 = vdwg.mxu0
    %v923 = vadd.f32 %v838, %v877
    %v924 = vxor.u32 %v923, 2147483648
    %v925 = vmul.f32 %v924, 1.442695
    %v926 = vpow.pop %v925
    %v927 = vadd.f32 %v926, 1.0
    %v928 = vrcp.pop %v927
    %v929 = vmul.f32 1.0, %v928
    %v930 = vadd.f32 %v839, %v879
    %v931 = vxor.u32 %v930, 2147483648
    %v932 = vmul.f32 %v931, 1.442695
    %v933 = vpow.pop %v932
    %v934 = vadd.f32 %v933, 1.0
    %v935 = vrcp.pop %v934
    %v936 = vmul.f32 1.0, %v935
    %v937 = vadd.f32 %v918, %v131
    %v938 = vmul.f32 %v929, %v937
    %v939 = vadd.f32 %v840, %v938
    %v940 = vtanh.pop %v939
    %v941 = vsub.f32 1.0, %v936
    %v942 = vmul.f32 %v941, %v940
    %v943 = vmul.f32 %v936, %v830
    %v944 = vadd.f32 %v942, %v943
    %945 = vset.pattern.permute.xlu0 6
    %946 = vperm.xlu0 %945, %v59
    %v947 = vpop.permute.xlu0 %946
    %v949 = vmul.f32 %v947, %v97
    %v950 = vmul.f32 %v947, %v101
    %v951 = vmul.f32 %v947, %v105
    %v952 = vadd.f32 %v949, %v114
    %v953 = vadd.f32 %v950, %v118
    %v954 = vadd.f32 %v951, %v122
    %v955 = vpack.c.bf16 %v944, %v944
    %956 = vmatprep.subr.bf16.mxu0 %v246
    %957 = vmatpush1.bf16.msra.mxu0 %v245
    %958 = vmatprep.subr.bf16.mxu0 %v243
    %959 = vmatpush1.bf16.msra.mxu0 %v242
    %960 = vmatprep.subr.bf16.mxu0 %v240
    %961 = vmatpush1.bf16.msra.mxu0 %v239
    %962 = vmatprep.subr.bf16.mxu0 %v237
    %963 = vmatpush1.bf16.msra.mxu0 %v236
    %964 = vmatprep.subr.bf16.mxu0 %v234
    %965 = vmatpush1.bf16.msra.mxu0 %v233
    %966 = vmatprep.subr.bf16.mxu0 %v231
    %967 = vmatpush1.bf16.msra.mxu0 %v230
    %968 = vmatprep.subr.bf16.mxu0 %v228
    %969 = vmatpush1.bf16.msra.mxu0 %v227
    %970 = vmatprep.subr.bf16.mxu0 %v225
    %971 = vmatpush1.bf16.msra.mxu0 %v224
    %972 = vmatprep.subr.bf16.mxu0 0
    %973 = vmatpush2.bf16.msra.mxu0 0
    %974 = vmatprep.subr.bf16.mxu0 0
    %975 = vmatpush2.bf16.msra.mxu0 0
    %976 = vmatprep.subr.bf16.mxu0 0
    %977 = vmatpush2.bf16.msra.mxu0 0
    %978 = vmatprep.subr.bf16.mxu0 0
    %979 = vmatpush2.bf16.msra.mxu0 0
    %980 = vmatprep.subr.bf16.mxu0 0
    %981 = vmatpush2.bf16.msra.mxu0 0
    %982 = vmatprep.subr.bf16.mxu0 0
    %983 = vmatpush2.bf16.msra.mxu0 0
    %984 = vmatprep.subr.bf16.mxu0 0
    %985 = vmatpush2.bf16.msra.mxu0 0
    %986 = vmatprep.subr.bf16.mxu0 0
    %987 = vmatpush2.bf16.msra.mxu0 0
    %988 = vmatprep.mubr.bf16.mxu0 0
    %989 = vmatmul.mubr.bf16.gmra.mxu0 %v955
    %v990 = vpop.f32.mrf.mxu0
    %v991 = vadd.f32 0.0, %v990
    %v992 = vpop.f32.mrf.mxu0
    %v993 = vadd.f32 0.0, %v992
    %v994 = vpop.f32.mrf.mxu0
    %v995 = vpop.f32.mrf.mxu0
    %996 = vdwg.mxu0
    %997 = vmatprep.subr.bf16.mxu0 0
    %998 = vmatpush1.bf16.msra.mxu0 %v247
    %999 = vmatprep.subr.bf16.mxu0 0
    %1000 = vmatpush1.bf16.msra.mxu0 %v244
    %1001 = vmatprep.subr.bf16.mxu0 0
    %1002 = vmatpush1.bf16.msra.mxu0 %v241
    %1003 = vmatprep.subr.bf16.mxu0 0
    %1004 = vmatpush1.bf16.msra.mxu0 %v238
    %1005 = vmatprep.subr.bf16.mxu0 0
    %1006 = vmatpush1.bf16.msra.mxu0 %v235
    %1007 = vmatprep.subr.bf16.mxu0 0
    %1008 = vmatpush1.bf16.msra.mxu0 %v232
    %1009 = vmatprep.subr.bf16.mxu0 0
    %1010 = vmatpush1.bf16.msra.mxu0 %v229
    %1011 = vmatprep.subr.bf16.mxu0 0
    %1012 = vmatpush1.bf16.msra.mxu0 %v226
    %1013 = vmatprep.subr.bf16.mxu0 0
    %1014 = vmatpush2.bf16.msra.mxu0 0
    %1015 = vmatprep.subr.bf16.mxu0 0
    %1016 = vmatpush2.bf16.msra.mxu0 0
    %1017 = vmatprep.subr.bf16.mxu0 0
    %1018 = vmatpush2.bf16.msra.mxu0 0
    %1019 = vmatprep.subr.bf16.mxu0 0
    %1020 = vmatpush2.bf16.msra.mxu0 0
    %1021 = vmatprep.subr.bf16.mxu0 0
    %1022 = vmatpush2.bf16.msra.mxu0 0
    %1023 = vmatprep.subr.bf16.mxu0 0
    %1024 = vmatpush2.bf16.msra.mxu0 0
    %1025 = vmatprep.subr.bf16.mxu0 0
    %1026 = vmatpush2.bf16.msra.mxu0 0
    %1027 = vmatprep.subr.bf16.mxu0 0
    %1028 = vmatpush2.bf16.msra.mxu0 0
    %1029 = vmatprep.mubr.bf16.mxu0 0
    %1030 = vmatmul.mubr.bf16.gmra.mxu0 %v955
    %v1031 = vpop.f32.mrf.mxu0
    %v1032 = vadd.f32 0.0, %v1031
    %v1033 = vpop.f32.mrf.mxu0
    %v1034 = vpop.f32.mrf.mxu0
    %v1035 = vpop.f32.mrf.mxu0
    %1036 = vdwg.mxu0
    %v1037 = vadd.f32 %v952, %v991
    %v1038 = vxor.u32 %v1037, 2147483648
    %v1039 = vmul.f32 %v1038, 1.442695
    %v1040 = vpow.pop %v1039
    %v1041 = vadd.f32 %v1040, 1.0
    %v1042 = vrcp.pop %v1041
    %v1043 = vmul.f32 1.0, %v1042
    %v1044 = vadd.f32 %v953, %v993
    %v1045 = vxor.u32 %v1044, 2147483648
    %v1046 = vmul.f32 %v1045, 1.442695
    %v1047 = vpow.pop %v1046
    %v1048 = vadd.f32 %v1047, 1.0
    %v1049 = vrcp.pop %v1048
    %v1050 = vmul.f32 1.0, %v1049
    %v1051 = vadd.f32 %v1032, %v131
    %v1052 = vmul.f32 %v1043, %v1051
    %v1053 = vadd.f32 %v954, %v1052
    %v1054 = vtanh.pop %v1053
    %v1055 = vsub.f32 1.0, %v1050
    %v1056 = vmul.f32 %v1055, %v1054
    %v1057 = vmul.f32 %v1050, %v944
    %v1058 = vadd.f32 %v1056, %v1057
    %1059 = vset.pattern.permute.xlu0 7
    %1060 = vperm.xlu0 %1059, %v59
    %v1061 = vpop.permute.xlu0 %1060
    %v1063 = vmul.f32 %v1061, %v97
    %v1064 = vmul.f32 %v1061, %v101
    %v1065 = vmul.f32 %v1061, %v105
    %v1066 = vadd.f32 %v1063, %v114
    %v1067 = vadd.f32 %v1064, %v118
    %v1068 = vadd.f32 %v1065, %v122
    %v1069 = vpack.c.bf16 %v1058, %v1058
    %1070 = vmatprep.subr.bf16.mxu0 %v246
    %1071 = vmatpush1.bf16.msra.mxu0 %v245
    %1072 = vmatprep.subr.bf16.mxu0 %v243
    %1073 = vmatpush1.bf16.msra.mxu0 %v242
    %1074 = vmatprep.subr.bf16.mxu0 %v240
    %1075 = vmatpush1.bf16.msra.mxu0 %v239
    %1076 = vmatprep.subr.bf16.mxu0 %v237
    %1077 = vmatpush1.bf16.msra.mxu0 %v236
    %1078 = vmatprep.subr.bf16.mxu0 %v234
    %1079 = vmatpush1.bf16.msra.mxu0 %v233
    %1080 = vmatprep.subr.bf16.mxu0 %v231
    %1081 = vmatpush1.bf16.msra.mxu0 %v230
    %1082 = vmatprep.subr.bf16.mxu0 %v228
    %1083 = vmatpush1.bf16.msra.mxu0 %v227
    %1084 = vmatprep.subr.bf16.mxu0 %v225
    %1085 = vmatpush1.bf16.msra.mxu0 %v224
    %1086 = vmatprep.subr.bf16.mxu0 0
    %1087 = vmatpush2.bf16.msra.mxu0 0
    %1088 = vmatprep.subr.bf16.mxu0 0
    %1089 = vmatpush2.bf16.msra.mxu0 0
    %1090 = vmatprep.subr.bf16.mxu0 0
    %1091 = vmatpush2.bf16.msra.mxu0 0
    %1092 = vmatprep.subr.bf16.mxu0 0
    %1093 = vmatpush2.bf16.msra.mxu0 0
    %1094 = vmatprep.subr.bf16.mxu0 0
    %1095 = vmatpush2.bf16.msra.mxu0 0
    %1096 = vmatprep.subr.bf16.mxu0 0
    %1097 = vmatpush2.bf16.msra.mxu0 0
    %1098 = vmatprep.subr.bf16.mxu0 0
    %1099 = vmatpush2.bf16.msra.mxu0 0
    %1100 = vmatprep.subr.bf16.mxu0 0
    %1101 = vmatpush2.bf16.msra.mxu0 0
    %1102 = vmatprep.mubr.bf16.mxu0 0
    %1103 = vmatmul.mubr.bf16.gmra.mxu0 %v1069
    %v1104 = vpop.f32.mrf.mxu0
    %v1105 = vadd.f32 0.0, %v1104
    %v1106 = vpop.f32.mrf.mxu0
    %v1107 = vadd.f32 0.0, %v1106
    %v1108 = vpop.f32.mrf.mxu0
    %v1109 = vpop.f32.mrf.mxu0
    %1110 = vdwg.mxu0
    %1111 = vmatprep.subr.bf16.mxu0 0
    %1112 = vmatpush1.bf16.msra.mxu0 %v247
    %1113 = vmatprep.subr.bf16.mxu0 0
    %1114 = vmatpush1.bf16.msra.mxu0 %v244
    %1115 = vmatprep.subr.bf16.mxu0 0
    %1116 = vmatpush1.bf16.msra.mxu0 %v241
    %1117 = vmatprep.subr.bf16.mxu0 0
    %1118 = vmatpush1.bf16.msra.mxu0 %v238
    %1119 = vmatprep.subr.bf16.mxu0 0
    %1120 = vmatpush1.bf16.msra.mxu0 %v235
    %1121 = vmatprep.subr.bf16.mxu0 0
    %1122 = vmatpush1.bf16.msra.mxu0 %v232
    %1123 = vmatprep.subr.bf16.mxu0 0
    %1124 = vmatpush1.bf16.msra.mxu0 %v229
    %1125 = vmatprep.subr.bf16.mxu0 0
    %1126 = vmatpush1.bf16.msra.mxu0 %v226
    %1127 = vmatprep.subr.bf16.mxu0 0
    %1128 = vmatpush2.bf16.msra.mxu0 0
    %1129 = vmatprep.subr.bf16.mxu0 0
    %1130 = vmatpush2.bf16.msra.mxu0 0
    %1131 = vmatprep.subr.bf16.mxu0 0
    %1132 = vmatpush2.bf16.msra.mxu0 0
    %1133 = vmatprep.subr.bf16.mxu0 0
    %1134 = vmatpush2.bf16.msra.mxu0 0
    %1135 = vmatprep.subr.bf16.mxu0 0
    %1136 = vmatpush2.bf16.msra.mxu0 0
    %1137 = vmatprep.subr.bf16.mxu0 0
    %1138 = vmatpush2.bf16.msra.mxu0 0
    %1139 = vmatprep.subr.bf16.mxu0 0
    %1140 = vmatpush2.bf16.msra.mxu0 0
    %1141 = vmatprep.subr.bf16.mxu0 0
    %1142 = vmatpush2.bf16.msra.mxu0 0
    %1143 = vmatprep.mubr.bf16.mxu0 0
    %1144 = vmatmul.mubr.bf16.gmra.mxu0 %v1069
    %v1145 = vpop.f32.mrf.mxu0
    %v1146 = vadd.f32 0.0, %v1145
    %v1147 = vpop.f32.mrf.mxu0
    %v1148 = vpop.f32.mrf.mxu0
    %v1149 = vpop.f32.mrf.mxu0
    %1150 = vdwg.mxu0
    %v1151 = vadd.f32 %v1066, %v1105
    %v1152 = vxor.u32 %v1151, 2147483648
    %v1153 = vmul.f32 %v1152, 1.442695
    %v1154 = vpow.pop %v1153
    %v1155 = vadd.f32 %v1154, 1.0
    %v1156 = vrcp.pop %v1155
    %v1157 = vmul.f32 1.0, %v1156
    %v1158 = vadd.f32 %v1067, %v1107
    %v1159 = vxor.u32 %v1158, 2147483648
    %v1160 = vmul.f32 %v1159, 1.442695
    %v1161 = vpow.pop %v1160
    %v1162 = vadd.f32 %v1161, 1.0
    %v1163 = vrcp.pop %v1162
    %v1164 = vmul.f32 1.0, %v1163
    %v1165 = vadd.f32 %v1146, %v131
    %v1166 = vmul.f32 %v1157, %v1165
    %v1167 = vadd.f32 %v1068, %v1166
    %v1168 = vtanh.pop %v1167
    %v1169 = vsub.f32 1.0, %v1164
    %v1170 = vmul.f32 %v1169, %v1168
    %v1171 = vmul.f32 %v1164, %v1058
    %v1172 = vadd.f32 %v1170, %v1171
    %1173 = vst [vmem:[#allocation8] sm:$0xff] %v1172
    // Predicated region
    $region34: #{tpu_custom_call.1} parent=1 // pred_check
      _
    $region35: #{tpu_custom_call.1} parent=1 // pred_check_branch
      %1175 = sbr.rel (0) target = $region37
    $region36: #{tpu_custom_call.1} parent=1 // pred_region
      %s1177 = ssub.s32 128, 128
      %1178 = vsyncadd [#allocation4], %s1177
      %s1180 = sshll.u32 [#allocation8], 4
      %s1181 = int_to_ptr.vmem [resolvable:$true] %s1180
      %1183 = dma.vmem_to_hbm [thread:$0]  %s1181, 128, %s5, [#allocation4]
    $region37: #{tpu_custom_call.1} parent=1 // pred_fallthru
      _
    // Predicated region
    $region38: #{tpu_custom_call.1} parent=1 // pred_check
      _
    $region39: #{tpu_custom_call.1} parent=1 // pred_check_branch
      %1185 = sbr.rel (0) target = $region41
    $region40: #{tpu_custom_call.1} parent=1 // pred_region
      %1186 = dma.done [#allocation4], 128
    $region41: #{tpu_custom_call.1} parent=1 // pred_fallthru
      _
    %1187 = vsyncpa [#allocation3], 1
    %1188 = vsyncpa [#allocation6], 1
    %1189 = vsyncpa [#allocation4], 1

</llo_original>
